<compile_context>
chip_gen: v6e
topology: v6e:2x2x1
jax: 0.10.0
libtpu: 0.0.40
codegen_flags: <defaults>
</compile_context>

<pallas_src>
import math

import jax
import jax.numpy as jnp
from jax.experimental import pallas as pl
from jax.experimental.pallas import tpu as pltpu

_LANE = 128


def _round_up(x, m):
    return (x + m - 1) // m * m


def _pad_last(a, target):
    pad = target - a.shape[-1]
    if pad == 0:
        return a
    cfg = [(0, 0)] * (a.ndim - 1) + [(0, pad)]
    return jnp.pad(a, cfg)


def _fold_bn(gamma, beta, mean, var, eps=1e-5):
    scale = gamma / jnp.sqrt(var + eps)
    bias = beta - mean * scale
    return scale, bias


# ---------------- fused Pallas kernel ----------------

def _make_fused_kernel(H, W, Pp):
    HW = H * W

    def kernel(x_ref, s1_ref, b1_ref, w1_ref, b2_ref, w2_ref, b3_ref, w3_ref,
               o_ref, abuf_ref):
        # ---- stage 1: BN1 -> ReLU -> conv1 (1x1, BN2 scale folded) -> +bias -> ReLU
        x = x_ref[...]                                            # (HW, Cp) f32
        t = jnp.maximum(x * s1_ref[...] + b1_ref[...], 0.0)
        a = jnp.dot(t.astype(jnp.bfloat16), w1_ref[...],
                    preferred_element_type=jnp.float32)
        a = jnp.maximum(a + b2_ref[...], 0.0)                     # (HW, Pp) f32
        # (x is dead here; the residual re-reads x_ref to keep it out of
        #  vreg/VMEM live ranges across the matmul chain.)

        # ---- stage 2: 3x3 conv (pad=1, stride=1).
        # Horizontal taps via XLU rolls of `a` (f32), masked so they never wrap
        # across an image-row boundary.  Masks are (HW, 1) and broadcast.
        col = jax.lax.broadcasted_iota(jnp.int32, (HW, 1), 0) % W
        a_left = jnp.where(col > 0, pltpu.roll(a, shift=1, axis=0), 0.0)
        a_right = jnp.where(col < (W - 1), pltpu.roll(a, shift=HW - 1, axis=0), 0.0)

        # Zero only the halo rows (one image row above / below), then store the
        # [left | center | right] triple once, cast to bf16, lane-dense.
        abuf_ref[pl.ds(0, W), :] = jnp.zeros((W, 3 * Pp), jnp.bfloat16)
        abuf_ref[pl.ds(W + HW, W), :] = jnp.zeros((W, 3 * Pp), jnp.bfloat16)
        abuf_ref[pl.ds(W, HW), :] = jnp.concatenate(
            [a_left, a, a_right], axis=1).astype(jnp.bfloat16)

        # One aligned wide-K (K = 3*Pp) matmul per kernel row ky: 3 dots total.
        acc = jnp.dot(abuf_ref[pl.ds(0, HW), :], w2_ref[0],
                      preferred_element_type=jnp.float32)
        acc = acc + jnp.dot(abuf_ref[pl.ds(W, HW), :], w2_ref[1],
                            preferred_element_type=jnp.float32)
        acc = acc + jnp.dot(abuf_ref[pl.ds(2 * W, HW), :], w2_ref[2],
                            preferred_element_type=jnp.float32)

        # ---- stage 3: BN3 (scale folded into w2) -> +bias -> ReLU -> conv3 -> +residual
        h = jnp.maximum(acc + b3_ref[...], 0.0)
        c3 = jnp.dot(h.astype(jnp.bfloat16), w3_ref[...],
                     preferred_element_type=jnp.float32)
        o_ref[...] = c3 + x_ref[...]                              # identity residual

    return kernel


# ---------------- wrapper ----------------

def bottleneck_forward(x_nchw, bn1, w1, bn2, w2, bn3, w3, *, stride=1, eps=1e-5):
    N, Cin, H, W = x_nchw.shape
    P = w1.shape[0]              # planes
    Cout = w3.shape[0]           # planes * 4 (expansion)
    # downsample=None path: identity residual, requires stride==1, Cin==Cout.
    assert stride == 1 and Cin == Cout, "identity residual path (downsample=None)"
    # Sublane-alignment of the halo-buffer windows requires W % 8 == 0.
    assert W % 8 == 0, "image width must be a multiple of 8"

    Cp = _round_up(Cin, _LANE)
    Pp = _round_up(P, _LANE)
    Op = _round_up(Cout, _LANE)
    assert Cp == Op

    # NCHW -> NHWC -> (N*H*W, C) rows, channel-padded to lane-dense 128 multiple.
    # (A full network would keep this NHWC/row layout end-to-end across blocks;
    #  the transposes exist only to honor the PyTorch NCHW module interface.)
    x_nhwc = jnp.transpose(x_nchw, (0, 2, 3, 1)).astype(jnp.float32)
    x2d = _pad_last(x_nhwc.reshape(N * H * W, Cin), Cp)

    s1, b1 = _fold_bn(*bn1, eps)
    s2, b2 = _fold_bn(*bn2, eps)
    s3, b3 = _fold_bn(*bn3, eps)

    # Conv weights as matmul operands; BN2/BN3 scales folded into the preceding
    # conv's output columns.  bf16 operands for the MXU.
    w1m = w1.reshape(P, Cin).T * s2[None, :]                          # (Cin, P)
    w1b = _pad_last(jnp.pad(w1m, ((0, Cp - Cin), (0, 0))), Pp).astype(jnp.bfloat16)

    # 3x3 weights as three (3*Pp, Pp) slabs (one per kernel row ky), with the
    # K axis ordered [kx=0 | kx=1 | kx=2] to match the [left|center|right] slab.
    w2m = jnp.transpose(w2, (2, 3, 1, 0)) * s3[None, None, None, :]   # (3,3,Pin,Pout)
    w2m = jnp.pad(w2m, ((0, 0), (0, 0), (0, Pp - P), (0, Pp - P)))    # (3,3,Pp,Pp)
    w2b = w2m.reshape(3, 3 * Pp, Pp).astype(jnp.bfloat16)

    w3m = w3.reshape(Cout, P).T                                       # (P, Cout)
    w3b = _pad_last(jnp.pad(w3m, ((0, Pp - P), (0, 0))), Op).astype(jnp.bfloat16)

    s1r = _pad_last(s1.reshape(1, Cin), Cp).astype(jnp.float32)
    b1r = _pad_last(b1.reshape(1, Cin), Cp).astype(jnp.float32)
    b2r = _pad_last(b2.reshape(1, P), Pp).astype(jnp.float32)
    b3r = _pad_last(b3.reshape(1, P), Pp).astype(jnp.float32)

    HW = H * W
    kernel = _make_fused_kernel(H, W, Pp)

    def full_spec(arr):
        nd = arr.ndim
        return pl.BlockSpec(arr.shape, lambda i, nd=nd: (0,) * nd)

    # One image per grid step; batch axis parallel (shards across TensorCores
    # on v7x).  VMEM per step at demo size: ~0.7 MiB, far under any scoped
    # limit.  See TODO at top for row-tiling at real ResNet stage sizes.
    out2d = pl.pallas_call(
        kernel,
        out_shape=jax.ShapeDtypeStruct((N * HW, Op), jnp.float32),
        grid=(N,),
        in_specs=[
            pl.BlockSpec((HW, Cp), lambda i: (i, 0)),   # x: one image per step
            full_spec(s1r), full_spec(b1r), full_spec(w1b), full_spec(b2r),
            full_spec(w2b), full_spec(b3r), full_spec(w3b),
        ],
        out_specs=pl.BlockSpec((HW, Op), lambda i: (i, 0)),
        scratch_shapes=[pltpu.VMEM((HW + 2 * W, 3 * Pp), jnp.bfloat16)],
        compiler_params=pltpu.CompilerParams(dimension_semantics=("parallel",)),
    )(x2d, s1r, b1r, w1b, b2r, w2b, b3r, w3b)

    out_nhwc = out2d[:, :Cout].reshape(N, H, W, Cout)
    return jnp.transpose(out_nhwc, (0, 3, 1, 2))                  # back to NCHW


# ---------------- pure-JAX reference (for sanity check) ----------------

def reference_forward(x_nchw, bn1, w1, bn2, w2, bn3, w3, *, stride=1, eps=1e-5):
    def bn(x, p):
        g, b, m, v = (t.reshape(1, -1, 1, 1) for t in p)
        return (x - m) / jnp.sqrt(v + eps) * g + b

    relu = lambda t: jnp.maximum(t, 0.0)

    def conv(t, w, s, pad):
        return jax.lax.conv_general_dilated(
            t, w, window_strides=(s, s), padding=pad,
            dimension_numbers=("NCHW", "OIHW", "NCHW"))

    out = conv(relu(bn(x_nchw, bn1)), w1, 1, "VALID")
    out = conv(relu(bn(out, bn2)), w2, stride, [(1, 1), (1, 1)])
    out = conv(relu(bn(out, bn3)), w3, 1, "VALID")
    return out + x_nchw


# ---------------- main ----------------

if __name__ == "__main__":
    key = jax.random.PRNGKey(0)
    keys = iter(jax.random.split(key, 64))

    N, H, W = 2, 16, 16
    planes = 4
    inplanes = planes * 4     # 16, so identity residual works (downsample=None)
    stride = 1

    # curves.* modules: parameters are a Bezier blend of `num_bends` points.
    num_bends = 3
    t_curve = 0.25
    coeffs_t = jnp.array([(1 - t_curve) ** 2, 2 * t_curve * (1 - t_curve), t_curve ** 2],
                         jnp.float32)

    def combine(points):
        return sum(c * p for c, p in zip(coeffs_t, points))

    x = jax.random.normal(next(keys), (N, inplanes, H, W), jnp.float32)  # NCHW

    def curve_weight(shape, scale):
        return combine([scale * jax.random.normal(next(keys), shape, jnp.float32)
                        for _ in range(num_bends)])

    def bn_params(c):
        gamma = combine([1.0 + 0.1 * jax.random.normal(next(keys), (c,), jnp.float32)
                         for _ in range(num_bends)])
        beta = combine([0.1 * jax.random.normal(next(keys), (c,), jnp.float32)
                        for _ in range(num_bends)])
        mean = 0.1 * jax.random.normal(next(keys), (c,), jnp.float32)
        var = 1.0 + 0.1 * jax.random.uniform(next(keys), (c,), jnp.float32)
        return gamma, beta, mean, var

    bn1 = bn_params(inplanes)
    bn2 = bn_params(planes)
    bn3 = bn_params(planes)
    w1 = curve_weight((planes, inplanes, 1, 1), 1.0 / math.sqrt(inplanes))
    w2 = curve_weight((planes, planes, 3, 3), 1.0 / math.sqrt(planes * 9))
    w3 = curve_weight((planes * 4, planes, 1, 1), 1.0 / math.sqrt(planes))

    out = bottleneck_forward(x, bn1, w1, bn2, w2, bn3, w3, stride=stride)
    out = jax.block_until_ready(out)

    ref = reference_forward(x, bn1, w1, bn2, w2, bn3, w3, stride=stride)
    assert out.shape == (N, planes * 4, H, W)
    # bf16 matmul operands (fp32 accumulation) -> allow bf16-level tolerance.
    assert jnp.allclose(out, ref, atol=5e-2, rtol=5e-2), \
        float(jnp.max(jnp.abs(out - ref)))

    print("KERNEL_OK")
</pallas_src>

<mosaic_0001>
module attributes {stable_mosaic.version = 11 : i64} {
  func.func @kernel(%arg0: i32, %arg1: memref<256x128xf32, #tpu.memory_space<vmem>>, %arg2: memref<1x128xf32, #tpu.memory_space<vmem>>, %arg3: memref<1x128xf32, #tpu.memory_space<vmem>>, %arg4: memref<128x128xbf16, #tpu.memory_space<vmem>>, %arg5: memref<1x128xf32, #tpu.memory_space<vmem>>, %arg6: memref<3x384x128xbf16, #tpu.memory_space<vmem>>, %arg7: memref<1x128xf32, #tpu.memory_space<vmem>>, %arg8: memref<128x128xbf16, #tpu.memory_space<vmem>>, %arg9: memref<256x128xf32, #tpu.memory_space<vmem>>, %arg10: memref<288x384xbf16, #tpu.memory_space<vmem>>) attributes {dimension_semantics = [#tpu.dimension_semantics<parallel>], iteration_bounds = array<i64: 2>, scalar_prefetch = 0 : i64, scratch_operands = 1 : i64, tpu.core_type = #tpu.core_type<tc>, window_params = [{transform_indices = @transform_0, window_bounds = array<i64: 256, 128>}, {pipeline_mode = #tpu.pipeline_mode<synchronous>, transform_indices = @transform_1, window_bounds = array<i64: 1, 128>}, {pipeline_mode = #tpu.pipeline_mode<synchronous>, transform_indices = @transform_2, window_bounds = array<i64: 1, 128>}, {pipeline_mode = #tpu.pipeline_mode<synchronous>, transform_indices = @transform_3, window_bounds = array<i64: 128, 128>}, {pipeline_mode = #tpu.pipeline_mode<synchronous>, transform_indices = @transform_4, window_bounds = array<i64: 1, 128>}, {pipeline_mode = #tpu.pipeline_mode<synchronous>, transform_indices = @transform_5, window_bounds = array<i64: 3, 384, 128>}, {pipeline_mode = #tpu.pipeline_mode<synchronous>, transform_indices = @transform_6, window_bounds = array<i64: 1, 128>}, {pipeline_mode = #tpu.pipeline_mode<synchronous>, transform_indices = @transform_7, window_bounds = array<i64: 128, 128>}, {transform_indices = @transform_8, window_bounds = array<i64: 256, 128>}]} {
    %c0 = arith.constant 0 : index
    %c0_0 = arith.constant 0 : index
    %0 = vector.load %arg1[%c0, %c0_0] : memref<256x128xf32, #tpu.memory_space<vmem>>, vector<256x128xf32>
    %c0_1 = arith.constant 0 : index
    %c0_2 = arith.constant 0 : index
    %1 = vector.load %arg2[%c0_1, %c0_2] : memref<1x128xf32, #tpu.memory_space<vmem>>, vector<1x128xf32>
    %2 = vector.broadcast %1 : vector<1x128xf32> to vector<256x128xf32>
    %3 = arith.mulf %0, %2 : vector<256x128xf32>
    %c0_3 = arith.constant 0 : index
    %c0_4 = arith.constant 0 : index
    %4 = vector.load %arg3[%c0_3, %c0_4] : memref<1x128xf32, #tpu.memory_space<vmem>>, vector<1x128xf32>
    %5 = vector.broadcast %4 : vector<1x128xf32> to vector<256x128xf32>
    %6 = arith.addf %3, %5 : vector<256x128xf32>
    %cst = arith.constant 0.000000e+00 : f32
    %7 = vector.broadcast %cst : f32 to vector<256x128xf32>
    %8 = arith.maximumf %6, %7 : vector<256x128xf32>
    %9 = arith.truncf %8 : vector<256x128xf32> to vector<256x128xbf16>
    %c0_5 = arith.constant 0 : index
    %c0_6 = arith.constant 0 : index
    %10 = vector.load %arg4[%c0_5, %c0_6] : memref<128x128xbf16, #tpu.memory_space<vmem>>, vector<128x128xbf16>
    %cst_7 = arith.constant dense<0.000000e+00> : vector<256x128xf32>
    %11 = tpu.matmul %9, %10, %cst_7 {dimension_numbers = #tpu.dot_dimension_numbers<[1], [0], [0], [1], [0, 0, 1, 1], [], []>} : vector<256x128xbf16>, vector<128x128xbf16>, vector<256x128xf32> -> vector<256x128xf32>
    %c0_8 = arith.constant 0 : index
    %c0_9 = arith.constant 0 : index
    %12 = vector.load %arg5[%c0_8, %c0_9] : memref<1x128xf32, #tpu.memory_space<vmem>>, vector<1x128xf32>
    %13 = vector.broadcast %12 : vector<1x128xf32> to vector<256x128xf32>
    %14 = arith.addf %11, %13 : vector<256x128xf32>
    %cst_10 = arith.constant 0.000000e+00 : f32
    %15 = vector.broadcast %cst_10 : f32 to vector<256x128xf32>
    %16 = arith.maximumf %14, %15 : vector<256x128xf32>
    %17 = tpu.iota {dimensions = array<i32: 0>} : vector<256x1xi32>
    %c16_i32 = arith.constant 16 : i32
    %c0_i32 = arith.constant 0 : i32
    %18 = arith.cmpi eq, %c16_i32, %c0_i32 : i32
    %c1_i32 = arith.constant 1 : i32
    %19 = arith.select %18, %c1_i32, %c16_i32 : i32
    %20 = vector.broadcast %19 : i32 to vector<256x1xi32>
    %21 = arith.remsi %17, %20 : vector<256x1xi32>
    %c0_i32_11 = arith.constant 0 : i32
    %22 = vector.broadcast %c0_i32_11 : i32 to vector<256x1xi32>
    %23 = arith.cmpi ne, %21, %22 : vector<256x1xi32>
    %c0_i32_12 = arith.constant 0 : i32
    %24 = vector.broadcast %c0_i32_12 : i32 to vector<256x1xi32>
    %25 = arith.cmpi slt, %21, %24 : vector<256x1xi32>
    %c0_i32_13 = arith.constant 0 : i32
    %26 = arith.cmpi slt, %19, %c0_i32_13 : i32
    %27 = vector.broadcast %26 : i1 to vector<256x1xi1>
    %28 = vector.broadcast %27 : vector<256x1xi1> to vector<256x1xi1>
    %29 = arith.xori %25, %28 : vector<256x1xi1>
    %30 = arith.andi %29, %23 : vector<256x1xi1>
    %31 = vector.broadcast %19 : i32 to vector<256x1xi32>
    %32 = arith.addi %21, %31 : vector<256x1xi32>
    %33 = arith.select %30, %32, %21 : vector<256x1xi1>, vector<256x1xi32>
    %c0_i32_14 = arith.constant 0 : i32
    %34 = vector.broadcast %c0_i32_14 : i32 to vector<256x1xi32>
    %35 = arith.cmpi sgt, %33, %34 : vector<256x1xi32>
    %c1_i32_15 = arith.constant 1 : i32
    %36 = tpu.dynamic_rotate %16 by %c1_i32_15 dim 0 : vector<256x128xf32>, i32 -> vector<256x128xf32>
    %cst_16 = arith.constant 0.000000e+00 : f32
    %37 = vector.shape_cast %35 : vector<256x1xi1> to vector<256x1xi1>
    %38 = vector.broadcast %37 : vector<256x1xi1> to vector<256x128xi1>
    %39 = vector.broadcast %cst_16 : f32 to vector<256x128xf32>
    %40 = arith.select %38, %36, %39 : vector<256x128xi1>, vector<256x128xf32>
    %c15_i32 = arith.constant 15 : i32
    %41 = vector.broadcast %c15_i32 : i32 to vector<256x1xi32>
    %42 = arith.cmpi slt, %33, %41 : vector<256x1xi32>
    %c255_i32 = arith.constant 255 : i32
    %43 = tpu.dynamic_rotate %16 by %c255_i32 dim 0 : vector<256x128xf32>, i32 -> vector<256x128xf32>
    %cst_17 = arith.constant 0.000000e+00 : f32
    %44 = vector.shape_cast %42 : vector<256x1xi1> to vector<256x1xi1>
    %45 = vector.broadcast %44 : vector<256x1xi1> to vector<256x128xi1>
    %46 = vector.broadcast %cst_17 : f32 to vector<256x128xf32>
    %47 = arith.select %45, %43, %46 : vector<256x128xi1>, vector<256x128xf32>
    %cst_18 = arith.constant 0.000000e+00 : bf16
    %48 = vector.broadcast %cst_18 : bf16 to vector<16x384xbf16>
    %c0_19 = arith.constant 0 : index
    %c0_20 = arith.constant 0 : index
    %49 = vector.load %arg10[%c0_19, %c0_20] : memref<288x384xbf16, #tpu.memory_space<vmem>>, vector<16x384xbf16>
    tpu.vector_store %arg10[%c0_19, %c0_20], %48 {strides = array<i32>} : memref<288x384xbf16, #tpu.memory_space<vmem>>, vector<16x384xbf16>,
    %cst_21 = arith.constant 0.000000e+00 : bf16
    %50 = vector.broadcast %cst_21 : bf16 to vector<16x384xbf16>
    %c272 = arith.constant 272 : index
    %c0_22 = arith.constant 0 : index
    %51 = vector.load %arg10[%c272, %c0_22] : memref<288x384xbf16, #tpu.memory_space<vmem>>, vector<16x384xbf16>
    tpu.vector_store %arg10[%c272, %c0_22], %50 {strides = array<i32>} : memref<288x384xbf16, #tpu.memory_space<vmem>>, vector<16x384xbf16>,
    %52 = tpu.concatenate %40, %16, %47 in 1 : vector<256x128xf32>, vector<256x128xf32>, vector<256x128xf32> -> vector<256x384xf32>
    %53 = arith.truncf %52 : vector<256x384xf32> to vector<256x384xbf16>
    %c16 = arith.constant 16 : index
    %c0_23 = arith.constant 0 : index
    %54 = vector.load %arg10[%c16, %c0_23] : memref<288x384xbf16, #tpu.memory_space<vmem>>, vector<256x384xbf16>
    tpu.vector_store %arg10[%c16, %c0_23], %53 {strides = array<i32>} : memref<288x384xbf16, #tpu.memory_space<vmem>>, vector<256x384xbf16>,
    %c0_24 = arith.constant 0 : index
    %c0_25 = arith.constant 0 : index
    %55 = vector.load %arg10[%c0_24, %c0_25] : memref<288x384xbf16, #tpu.memory_space<vmem>>, vector<256x384xbf16>
    %c0_26 = arith.constant 0 : index
    %c0_27 = arith.constant 0 : index
    %c0_28 = arith.constant 0 : index
    %56 = vector.load %arg6[%c0_26, %c0_27, %c0_28] : memref<3x384x128xbf16, #tpu.memory_space<vmem>>, vector<1x384x128xbf16>
    %57 = vector.shape_cast %56 : vector<1x384x128xbf16> to vector<384x128xbf16>
    %cst_29 = arith.constant dense<0.000000e+00> : vector<256x128xf32>
    %58 = tpu.matmul %55, %57, %cst_29 {dimension_numbers = #tpu.dot_dimension_numbers<[1], [0], [0], [1], [0, 0, 1, 1], [], []>} : vector<256x384xbf16>, vector<384x128xbf16>, vector<256x128xf32> -> vector<256x128xf32>
    %c16_30 = arith.constant 16 : index
    %c0_31 = arith.constant 0 : index
    %59 = vector.load %arg10[%c16_30, %c0_31] : memref<288x384xbf16, #tpu.memory_space<vmem>>, vector<256x384xbf16>
    %c1 = arith.constant 1 : index
    %c0_32 = arith.constant 0 : index
    %c0_33 = arith.constant 0 : index
    %60 = vector.load %arg6[%c1, %c0_32, %c0_33] : memref<3x384x128xbf16, #tpu.memory_space<vmem>>, vector<1x384x128xbf16>
    %61 = vector.shape_cast %60 : vector<1x384x128xbf16> to vector<384x128xbf16>
    %cst_34 = arith.constant dense<0.000000e+00> : vector<256x128xf32>
    %62 = tpu.matmul %59, %61, %cst_34 {dimension_numbers = #tpu.dot_dimension_numbers<[1], [0], [0], [1], [0, 0, 1, 1], [], []>} : vector<256x384xbf16>, vector<384x128xbf16>, vector<256x128xf32> -> vector<256x128xf32>
    %63 = arith.addf %58, %62 : vector<256x128xf32>
    %c32 = arith.constant 32 : index
    %c0_35 = arith.constant 0 : index
    %64 = vector.load %arg10[%c32, %c0_35] : memref<288x384xbf16, #tpu.memory_space<vmem>>, vector<256x384xbf16>
    %c2 = arith.constant 2 : index
    %c0_36 = arith.constant 0 : index
    %c0_37 = arith.constant 0 : index
    %65 = vector.load %arg6[%c2, %c0_36, %c0_37] : memref<3x384x128xbf16, #tpu.memory_space<vmem>>, vector<1x384x128xbf16>
    %66 = vector.shape_cast %65 : vector<1x384x128xbf16> to vector<384x128xbf16>
    %cst_38 = arith.constant dense<0.000000e+00> : vector<256x128xf32>
    %67 = tpu.matmul %64, %66, %cst_38 {dimension_numbers = #tpu.dot_dimension_numbers<[1], [0], [0], [1], [0, 0, 1, 1], [], []>} : vector<256x384xbf16>, vector<384x128xbf16>, vector<256x128xf32> -> vector<256x128xf32>
    %68 = arith.addf %63, %67 : vector<256x128xf32>
    %c0_39 = arith.constant 0 : index
    %c0_40 = arith.constant 0 : index
    %69 = vector.load %arg7[%c0_39, %c0_40] : memref<1x128xf32, #tpu.memory_space<vmem>>, vector<1x128xf32>
    %70 = vector.broadcast %69 : vector<1x128xf32> to vector<256x128xf32>
    %71 = arith.addf %68, %70 : vector<256x128xf32>
    %cst_41 = arith.constant 0.000000e+00 : f32
    %72 = vector.broadcast %cst_41 : f32 to vector<256x128xf32>
    %73 = arith.maximumf %71, %72 : vector<256x128xf32>
    %74 = arith.truncf %73 : vector<256x128xf32> to vector<256x128xbf16>
    %c0_42 = arith.constant 0 : index
    %c0_43 = arith.constant 0 : index
    %75 = vector.load %arg8[%c0_42, %c0_43] : memref<128x128xbf16, #tpu.memory_space<vmem>>, vector<128x128xbf16>
    %cst_44 = arith.constant dense<0.000000e+00> : vector<256x128xf32>
    %76 = tpu.matmul %74, %75, %cst_44 {dimension_numbers = #tpu.dot_dimension_numbers<[1], [0], [0], [1], [0, 0, 1, 1], [], []>} : vector<256x128xbf16>, vector<128x128xbf16>, vector<256x128xf32> -> vector<256x128xf32>
    %c0_45 = arith.constant 0 : index
    %c0_46 = arith.constant 0 : index
    %77 = vector.load %arg1[%c0_45, %c0_46] : memref<256x128xf32, #tpu.memory_space<vmem>>, vector<256x128xf32>
    %78 = arith.addf %76, %77 : vector<256x128xf32>
    %c0_47 = arith.constant 0 : index
    %c0_48 = arith.constant 0 : index
    %79 = vector.load %arg9[%c0_47, %c0_48] : memref<256x128xf32, #tpu.memory_space<vmem>>, vector<256x128xf32>
    tpu.vector_store %arg9[%c0_47, %c0_48], %78 {strides = array<i32>} : memref<256x128xf32, #tpu.memory_space<vmem>>, vector<256x128xf32>,
    return
  }
  func.func @transform_0(%arg0: i32) -> (i32, i32) {
    %c0_i32 = arith.constant 0 : i32
    %c0_i32_0 = arith.constant 0 : i32
    return %arg0, %c0_i32 : i32, i32
  }
  func.func @transform_1(%arg0: i32) -> (i32, i32) {
    %c0_i32 = arith.constant 0 : i32
    %c0_i32_0 = arith.constant 0 : i32
    %c0_i32_1 = arith.constant 0 : i32
    return %c0_i32, %c0_i32_0 : i32, i32
  }
  func.func @transform_2(%arg0: i32) -> (i32, i32) {
    %c0_i32 = arith.constant 0 : i32
    %c0_i32_0 = arith.constant 0 : i32
    %c0_i32_1 = arith.constant 0 : i32
    return %c0_i32, %c0_i32_0 : i32, i32
  }
  func.func @transform_3(%arg0: i32) -> (i32, i32) {
    %c0_i32 = arith.constant 0 : i32
    %c0_i32_0 = arith.constant 0 : i32
    %c0_i32_1 = arith.constant 0 : i32
    return %c0_i32, %c0_i32_0 : i32, i32
  }
  func.func @transform_4(%arg0: i32) -> (i32, i32) {
    %c0_i32 = arith.constant 0 : i32
    %c0_i32_0 = arith.constant 0 : i32
    %c0_i32_1 = arith.constant 0 : i32
    return %c0_i32, %c0_i32_0 : i32, i32
  }
  func.func @transform_5(%arg0: i32) -> (i32, i32, i32) {
    %c0_i32 = arith.constant 0 : i32
    %c0_i32_0 = arith.constant 0 : i32
    %c0_i32_1 = arith.constant 0 : i32
    %c0_i32_2 = arith.constant 0 : i32
    return %c0_i32, %c0_i32_0, %c0_i32_1 : i32, i32, i32
  }
  func.func @transform_6(%arg0: i32) -> (i32, i32) {
    %c0_i32 = arith.constant 0 : i32
    %c0_i32_0 = arith.constant 0 : i32
    %c0_i32_1 = arith.constant 0 : i32
    return %c0_i32, %c0_i32_0 : i32, i32
  }
  func.func @transform_7(%arg0: i32) -> (i32, i32) {
    %c0_i32 = arith.constant 0 : i32
    %c0_i32_0 = arith.constant 0 : i32
    %c0_i32_1 = arith.constant 0 : i32
    return %c0_i32, %c0_i32_0 : i32, i32
  }
  func.func @transform_8(%arg0: i32) -> (i32, i32) {
    %c0_i32 = arith.constant 0 : i32
    %c0_i32_0 = arith.constant 0 : i32
    return %arg0, %c0_i32 : i32, i32
  }
}

</mosaic_0001>

<llo_original>
// kernel: tpu_custom_call.1
$region0: #{tpu_custom_call.1}
  #allocation0 [shape = 'u32[]', space=smem, size = 0x4, offset = 0x4, fixed_abs, tag = 'smem constant byte address 0x4 - core index']
  #allocation1 [shape = 'u32[144,128]{1,0:T(1,128)}', space=vmem, size = 0x12000, scoped, tag = 'internal scratch']
  #allocation2 [shape = 'bf16[288,384]{1,0:T(8,128)(2,1)}', space=vmem, size = 0x36000, scoped, tag = 'scratch operand']
  %s0 = inlined_call_operand.hbm [shape: f32[512,128], index: 0, kind: input, shape index: {}]
  %s1 = inlined_call_operand.vmem [shape: f32[1,128], index: 1, kind: input, shape index: {}]
  %s2 = inlined_call_operand.vmem [shape: f32[1,128], index: 2, kind: input, shape index: {}]
  %s3 = inlined_call_operand.hbm [shape: bf16[128,128], index: 3, kind: input, shape index: {}]
  %s4 = inlined_call_operand.vmem [shape: f32[1,128], index: 4, kind: input, shape index: {}]
  %s5 = inlined_call_operand.hbm [shape: bf16[3,384,128], index: 5, kind: input, shape index: {}]
  %s6 = inlined_call_operand.vmem [shape: f32[1,128], index: 6, kind: input, shape index: {}]
  %s7 = inlined_call_operand.hbm [shape: bf16[128,128], index: 7, kind: input, shape index: {}]
  %s8 = inlined_call_operand.hbm [shape: f32[512,128], index: 8, kind: output, shape index: {}]
  %s9 = sld [smem:[#allocation0]]
  $region81: #{tpu_custom_call.1} parent=0
    _
  %s11 = ssub.s32 1, %s9
  %s12 = scalar_select 0, %s11, %s9
  $region1: #{tpu_custom_call.1} parent=0
    #allocation3 [shape = 'u8[262144]{0}', space=vmem, size = 0x40000, scoped, tag = 'input window, operand 0']
    #allocation4 [shape = 's32[2]{0}', space=sflag, size = 0x8, scoped, tag = 'scoped memory for tpu_custom_call.1']
    #allocation5 [shape = 's32[2]{0}', space=sflag, size = 0x8, scoped, tag = 'scoped memory for tpu_custom_call.1']
    #allocation6 [shape = 'u8[32768]{0}', space=vmem, size = 0x8000, scoped, tag = 'input window, operand 3, single buffered']
    #allocation7 [shape = 's32[1]{0}', space=sflag, size = 0x4, scoped, tag = 'scoped memory for tpu_custom_call.1']
    #allocation8 [shape = 'u8[294912]{0}', space=vmem, size = 0x48000, scoped, tag = 'input window, operand 5, single buffered']
    #allocation9 [shape = 'u8[32768]{0}', space=vmem, size = 0x8000, scoped, tag = 'input window, operand 7, single buffered']
    #allocation10 [shape = 's32[1]{0}', space=sflag, size = 0x4, scoped, tag = 'scoped memory for tpu_custom_call.1']
    #allocation11 [shape = 'u8[262144]{0}', space=vmem, size = 0x40000, scoped, tag = 'output window, operand 0']
    %13 = vsyncpa [#allocation4], 0
    %s14 = scalar_lea.sflag [#allocation4], 1
    %15 = vsyncpa %s14, 0
    %16 = vsyncpa [#allocation7], 0
    %17 = vsyncpa [#allocation10], 0
    %18 = vsyncpa [#allocation5], 0
    %s19 = scalar_lea.sflag [#allocation5], 1
    %20 = vsyncpa %s19, 0
    loop: start=0, step=1, limit=4
    $region2: #{tpu_custom_call.1} parent=1 // loop_pre_header
      _
    $region3: #{tpu_custom_call.1} parent=1 // loop_header
      %s22 = sphi 0, %s26
      %p23 = scmp.ge.s32.totalorder %s22, 4
      %s32 = sphi 0, %s34
      %s35 = sphi 0, %s32
      %s36 = sphi 0, %s35
      %s52 = sphi 0, %s36
      %s56 = sphi 0, %s56
      %s58 = sphi 0, %s56
      %s59 = sphi 0, %s58
      %s73 = sphi 0, %s59
      %s77 = sphi 0, %s77
      %s79 = sphi 0, %s77
      %s80 = sphi 0, %s79
      %s94 = sphi 0, %s80
      %s98 = sphi 0, %s98
      %s100 = sphi 0, %s98
      %s101 = sphi 0, %s100
      %s115 = sphi 0, %s101
      %s119 = sphi 0, %s119
      %s121 = sphi 0, %s119
      %s122 = sphi 0, %s121
      %s136 = sphi 0, %s122
      %s140 = sphi 0, %s140
      %s142 = sphi 0, %s140
      %s143 = sphi 0, %s142
      %s157 = sphi 0, %s143
      %s161 = sphi 0, %s161
      %s163 = sphi 0, %s161
      %s164 = sphi 0, %s163
      %s178 = sphi 0, %s164
      %s182 = sphi 0, %s182
      %s184 = sphi 0, %s182
      %s185 = sphi 0, %s184
      %s199 = sphi 0, %s185
      %s205 = sphi 0, %s207
      %s208 = sphi 0, %s205
      %s209 = sphi 0, %s208
      %s225 = sphi 0, %s209
    $region4: #{tpu_custom_call.1} parent=1 // loop_header_branch
      %25 = sbr.rel (%p23) target = $region8
    $region5: #{tpu_custom_call.1} parent=1 // loop_body
      %s27 = ssub.s32 %s22, 1
      %s28 = ssub.s32 %s22, 2
      %s29 = sadd.s32 %s22, 1
      %s30 = ssub.s32 %s22, %s29
      %p31 = scmp.eq.s32.totalorder %s30, 0
      %s33 = sadd.s32 %s32, 1
      %s34 = scalar_select %p31, %s32, %s33
      %p37 = pneg %p31
      %p38 = scmp.eq.s32.totalorder %s22, 1
      %p39 = por %p37, %p38
      %p40 = scmp.ne.s32.totalorder %s32, %s35
      %p41 = scmp.eq.s32.totalorder %s22, 0
      %p42 = por %p40, %p41
      %p43 = scmp.ne.s32.totalorder %s32, %s35
      %p44 = scmp.eq.s32.totalorder %s27, 1
      %p45 = por %p43, %p44
      %p46 = scmp.ne.s32.totalorder %s35, %s36
      %p47 = scmp.eq.s32.totalorder %s27, 0
      %p48 = por %p46, %p47
      %p49 = scmp.ne.s32.totalorder %s35, %s36
      %p50 = scmp.eq.s32.totalorder %s28, 1
      %p51 = por %p49, %p50
      %p53 = scmp.ne.s32.totalorder %s36, %s52
      %p54 = scmp.eq.s32.totalorder %s28, 0
      %p55 = por %p53, %p54
      %s57 = sadd.s32 %s56, 1
      %p60 = scmp.eq.s32.totalorder %s22, 1
      %p61 = scmp.ne.s32.totalorder %s56, %s58
      %p62 = scmp.eq.s32.totalorder %s22, 0
      %p63 = por %p61, %p62
      %p64 = scmp.ne.s32.totalorder %s56, %s58
      %p65 = scmp.eq.s32.totalorder %s27, 1
      %p66 = por %p64, %p65
      %p67 = scmp.ne.s32.totalorder %s58, %s59
      %p68 = scmp.eq.s32.totalorder %s27, 0
      %p69 = por %p67, %p68
      %p70 = scmp.ne.s32.totalorder %s58, %s59
      %p71 = scmp.eq.s32.totalorder %s28, 1
      %p72 = por %p70, %p71
      %p74 = scmp.ne.s32.totalorder %s59, %s73
      %p75 = scmp.eq.s32.totalorder %s28, 0
      %p76 = por %p74, %p75
      %s78 = sadd.s32 %s77, 1
      %p81 = scmp.eq.s32.totalorder %s22, 1
      %p82 = scmp.ne.s32.totalorder %s77, %s79
      %p83 = scmp.eq.s32.totalorder %s22, 0
      %p84 = por %p82, %p83
      %p85 = scmp.ne.s32.totalorder %s77, %s79
      %p86 = scmp.eq.s32.totalorder %s27, 1
      %p87 = por %p85, %p86
      %p88 = scmp.ne.s32.totalorder %s79, %s80
      %p89 = scmp.eq.s32.totalorder %s27, 0
      %p90 = por %p88, %p89
      %p91 = scmp.ne.s32.totalorder %s79, %s80
      %p92 = scmp.eq.s32.totalorder %s28, 1
      %p93 = por %p91, %p92
      %p95 = scmp.ne.s32.totalorder %s80, %s94
      %p96 = scmp.eq.s32.totalorder %s28, 0
      %p97 = por %p95, %p96
      %s99 = sadd.s32 %s98, 1
      %p102 = scmp.eq.s32.totalorder %s22, 1
      %p103 = scmp.ne.s32.totalorder %s98, %s100
      %p104 = scmp.eq.s32.totalorder %s22, 0
      %p105 = por %p103, %p104
      %p106 = scmp.ne.s32.totalorder %s98, %s100
      %p107 = scmp.eq.s32.totalorder %s27, 1
      %p108 = por %p106, %p107
      %p109 = scmp.ne.s32.totalorder %s100, %s101
      %p110 = scmp.eq.s32.totalorder %s27, 0
      %p111 = por %p109, %p110
      %p112 = scmp.ne.s32.totalorder %s100, %s101
      %p113 = scmp.eq.s32.totalorder %s28, 1
      %p114 = por %p112, %p113
      %p116 = scmp.ne.s32.totalorder %s101, %s115
      %p117 = scmp.eq.s32.totalorder %s28, 0
      %p118 = por %p116, %p117
      %s120 = sadd.s32 %s119, 1
      %p123 = scmp.eq.s32.totalorder %s22, 1
      %p124 = scmp.ne.s32.totalorder %s119, %s121
      %p125 = scmp.eq.s32.totalorder %s22, 0
      %p126 = por %p124, %p125
      %p127 = scmp.ne.s32.totalorder %s119, %s121
      %p128 = scmp.eq.s32.totalorder %s27, 1
      %p129 = por %p127, %p128
      %p130 = scmp.ne.s32.totalorder %s121, %s122
      %p131 = scmp.eq.s32.totalorder %s27, 0
      %p132 = por %p130, %p131
      %p133 = scmp.ne.s32.totalorder %s121, %s122
      %p134 = scmp.eq.s32.totalorder %s28, 1
      %p135 = por %p133, %p134
      %p137 = scmp.ne.s32.totalorder %s122, %s136
      %p138 = scmp.eq.s32.totalorder %s28, 0
      %p139 = por %p137, %p138
      %s141 = sadd.s32 %s140, 1
      %p144 = scmp.eq.s32.totalorder %s22, 1
      %p145 = scmp.ne.s32.totalorder %s140, %s142
      %p146 = scmp.eq.s32.totalorder %s22, 0
      %p147 = por %p145, %p146
      %p148 = scmp.ne.s32.totalorder %s140, %s142
      %p149 = scmp.eq.s32.totalorder %s27, 1
      %p150 = por %p148, %p149
      %p151 = scmp.ne.s32.totalorder %s142, %s143
      %p152 = scmp.eq.s32.totalorder %s27, 0
      %p153 = por %p151, %p152
      %p154 = scmp.ne.s32.totalorder %s142, %s143
      %p155 = scmp.eq.s32.totalorder %s28, 1
      %p156 = por %p154, %p155
      %p158 = scmp.ne.s32.totalorder %s143, %s157
      %p159 = scmp.eq.s32.totalorder %s28, 0
      %p160 = por %p158, %p159
      %s162 = sadd.s32 %s161, 1
      %p165 = scmp.eq.s32.totalorder %s22, 1
      %p166 = scmp.ne.s32.totalorder %s161, %s163
      %p167 = scmp.eq.s32.totalorder %s22, 0
      %p168 = por %p166, %p167
      %p169 = scmp.ne.s32.totalorder %s161, %s163
      %p170 = scmp.eq.s32.totalorder %s27, 1
      %p171 = por %p169, %p170
      %p172 = scmp.ne.s32.totalorder %s163, %s164
      %p173 = scmp.eq.s32.totalorder %s27, 0
      %p174 = por %p172, %p173
      %p175 = scmp.ne.s32.totalorder %s163, %s164
      %p176 = scmp.eq.s32.totalorder %s28, 1
      %p177 = por %p175, %p176
      %p179 = scmp.ne.s32.totalorder %s164, %s178
      %p180 = scmp.eq.s32.totalorder %s28, 0
      %p181 = por %p179, %p180
      %s183 = sadd.s32 %s182, 1
      %p186 = scmp.eq.s32.totalorder %s22, 1
      %p187 = scmp.ne.s32.totalorder %s182, %s184
      %p188 = scmp.eq.s32.totalorder %s22, 0
      %p189 = por %p187, %p188
      %p190 = scmp.ne.s32.totalorder %s182, %s184
      %p191 = scmp.eq.s32.totalorder %s27, 1
      %p192 = por %p190, %p191
      %p193 = scmp.ne.s32.totalorder %s184, %s185
      %p194 = scmp.eq.s32.totalorder %s27, 0
      %p195 = por %p193, %p194
      %p196 = scmp.ne.s32.totalorder %s184, %s185
      %p197 = scmp.eq.s32.totalorder %s28, 1
      %p198 = por %p196, %p197
      %p200 = scmp.ne.s32.totalorder %s185, %s199
      %p201 = scmp.eq.s32.totalorder %s28, 0
      %p202 = por %p200, %p201
      %s203 = ssub.s32 %s22, %s29
      %p204 = scmp.eq.s32.totalorder %s203, 0
      %s206 = sadd.s32 %s205, 1
      %s207 = scalar_select %p204, %s205, %s206
      %p210 = pneg %p204
      %p211 = scmp.eq.s32.totalorder %s22, 1
      %p212 = por %p210, %p211
      %p213 = scmp.ne.s32.totalorder %s205, %s208
      %p214 = scmp.eq.s32.totalorder %s22, 0
      %p215 = por %p213, %p214
      %p216 = scmp.ne.s32.totalorder %s205, %s208
      %p217 = scmp.eq.s32.totalorder %s27, 1
      %p218 = por %p216, %p217
      %p219 = scmp.ne.s32.totalorder %s208, %s209
      %p220 = scmp.eq.s32.totalorder %s27, 0
      %p221 = por %p219, %p220
      %p222 = scmp.ne.s32.totalorder %s208, %s209
      %p223 = scmp.eq.s32.totalorder %s28, 1
      %p224 = por %p222, %p223
      %p226 = scmp.ne.s32.totalorder %s209, %s225
      %p227 = scmp.eq.s32.totalorder %s28, 0
      %p228 = por %p226, %p227
      %p229 = scmp.le.s32.totalorder 1, %s22
      %p230 = scmp.lt.s32.totalorder %s22, 3
      %p231 = pnand %p229, %p230
      %p232 = pneg %p231
      // Predicated region
      $region9: #{tpu_custom_call.1} parent=5 // pred_check
        _
      $region10: #{tpu_custom_call.1} parent=5 // pred_check_branch
        %234 = sbr.rel (%p231) target = $region12
      $region11: #{tpu_custom_call.1} parent=5 // pred_region
        %s235 = ssub.s32 %s22, 1
        // Predicated region
        $region13: #{tpu_custom_call.1} parent=11 // pred_check
          %p236 = pneg %p69
        $region14: #{tpu_custom_call.1} parent=11 // pred_check_branch
          %238 = sbr.rel (%p236) target = $region16
        $region15: #{tpu_custom_call.1} parent=11 // pred_region
          _
        $region16: #{tpu_custom_call.1} parent=11 // pred_fallthru
          _
        // Predicated region
        $region17: #{tpu_custom_call.1} parent=11 // pred_check
          %p239 = pneg %p90
        $region18: #{tpu_custom_call.1} parent=11 // pred_check_branch
          %241 = sbr.rel (%p239) target = $region20
        $region19: #{tpu_custom_call.1} parent=11 // pred_region
          _
        $region20: #{tpu_custom_call.1} parent=11 // pred_fallthru
          _
        // Predicated region
        $region21: #{tpu_custom_call.1} parent=11 // pred_check
          %p242 = pneg %p111
        $region22: #{tpu_custom_call.1} parent=11 // pred_check_branch
          %244 = sbr.rel (%p242) target = $region24
        $region23: #{tpu_custom_call.1} parent=11 // pred_region
          %s246 = ssub.s32 1024, 1024
          %247 = vsyncadd [#allocation7], %s246
          %s248 = sshll.u32 [#allocation6], 4
          %s249 = int_to_ptr.vmem [resolvable:$true] %s248
          %254 = dma.hbm_to_vmem [thread:$0]  %s3, 1024, %s249, [#allocation7], 64, 64, 4
        $region24: #{tpu_custom_call.1} parent=11 // pred_fallthru
          _
        // Predicated region
        $region25: #{tpu_custom_call.1} parent=11 // pred_check
          %p255 = pneg %p132
        $region26: #{tpu_custom_call.1} parent=11 // pred_check_branch
          %257 = sbr.rel (%p255) target = $region28
        $region27: #{tpu_custom_call.1} parent=11 // pred_region
          _
        $region28: #{tpu_custom_call.1} parent=11 // pred_fallthru
          _
        // Predicated region
        $region29: #{tpu_custom_call.1} parent=11 // pred_check
          %p258 = pneg %p153
        $region30: #{tpu_custom_call.1} parent=11 // pred_check_branch
          %260 = sbr.rel (%p258) target = $region32
        $region31: #{tpu_custom_call.1} parent=11 // pred_region
          %s262 = ssub.s32 9216, 9216
          %263 = vsyncadd [#allocation7], %s262
          %s264 = sshll.u32 [#allocation8], 4
          %s265 = int_to_ptr.vmem [resolvable:$true] %s264
          %270 = dma.hbm_to_vmem [thread:$0]  %s5, 9216, %s265, [#allocation7], 64, 64, 4
        $region32: #{tpu_custom_call.1} parent=11 // pred_fallthru
          _
        // Predicated region
        $region33: #{tpu_custom_call.1} parent=11 // pred_check
          %p271 = pneg %p174
        $region34: #{tpu_custom_call.1} parent=11 // pred_check_branch
          %273 = sbr.rel (%p271) target = $region36
        $region35: #{tpu_custom_call.1} parent=11 // pred_region
          _
        $region36: #{tpu_custom_call.1} parent=11 // pred_fallthru
          _
        // Predicated region
        $region37: #{tpu_custom_call.1} parent=11 // pred_check
          %p274 = pneg %p195
        $region38: #{tpu_custom_call.1} parent=11 // pred_check_branch
          %276 = sbr.rel (%p274) target = $region40
        $region39: #{tpu_custom_call.1} parent=11 // pred_region
          %s278 = ssub.s32 1024, 1024
          %279 = vsyncadd [#allocation10], %s278
          %s280 = sshll.u32 [#allocation9], 4
          %s281 = int_to_ptr.vmem [resolvable:$true] %s280
          %286 = dma.hbm_to_vmem [thread:$0]  %s7, 1024, %s281, [#allocation10], 64, 64, 4
        $region40: #{tpu_custom_call.1} parent=11 // pred_fallthru
          _
      $region12: #{tpu_custom_call.1} parent=5 // pred_fallthru
        _
      %p287 = scmp.lt.s32.totalorder %s22, 2
      // Predicated region
      $region41: #{tpu_custom_call.1} parent=5 // pred_check
        %p288 = pneg %p287
      $region42: #{tpu_custom_call.1} parent=5 // pred_check_branch
        %290 = sbr.rel (%p288) target = $region44
      $region43: #{tpu_custom_call.1} parent=5 // pred_region
        // Predicated region
        $region45: #{tpu_custom_call.1} parent=43 // pred_check
          %p291 = pneg %p42
        $region46: #{tpu_custom_call.1} parent=43 // pred_check_branch
          %293 = sbr.rel (%p291) target = $region48
        $region47: #{tpu_custom_call.1} parent=43 // pred_region
          %s294 = sand.u32 %s32, 1
          %s295 = scalar_lea.sflag [#allocation4], %s294
          %s296 = sand.u32 %s32, 1
          %s297 = smul.addr %s296, 256
          %s298 = scalar_lea.vmem [#allocation3], %s297
          %s299 = smul.u32 32, %s22
          %s301 = ssub.s32 4096, 4096
          %302 = vsyncadd %s295, %s301
          %s303 = smul.addr %s299, 128
          %s304 = scalar_lea.hbm %s0, %s303
          %s305 = sshll.u32 %s298, 4
          %s306 = int_to_ptr.vmem [resolvable:$true] %s305
          %311 = dma.hbm_to_vmem [thread:$0]  %s304, 4096, %s306, %s295, 128, 128, 8
        $region48: #{tpu_custom_call.1} parent=43 // pred_fallthru
          _
      $region44: #{tpu_custom_call.1} parent=5 // pred_fallthru
        _
      %p312 = scmp.le.s32.totalorder 1, %s22
      %p313 = scmp.lt.s32.totalorder %s22, 3
      %p314 = pnand %p312, %p313
      %p315 = pneg %p314
      // Predicated region
      $region49: #{tpu_custom_call.1} parent=5 // pred_check
        _
      $region50: #{tpu_custom_call.1} parent=5 // pred_check_branch
        %317 = sbr.rel (%p314) target = $region52
      $region51: #{tpu_custom_call.1} parent=5 // pred_region
        %s318 = ssub.s32 %s22, 1
        %s319 = sand.u32 %s35, 1
        %s320 = scalar_lea.sflag [#allocation4], %s319
        %s321 = sand.u32 %s35, 1
        %s322 = smul.addr %s321, 256
        %s323 = scalar_lea.vmem [#allocation3], %s322
        // Predicated region
        $region53: #{tpu_custom_call.1} parent=51 // pred_check
          %p324 = pneg %p48
        $region54: #{tpu_custom_call.1} parent=51 // pred_check_branch
          %326 = sbr.rel (%p324) target = $region56
        $region55: #{tpu_custom_call.1} parent=51 // pred_region
          %327 = dma.done %s320, 4096
        $region56: #{tpu_custom_call.1} parent=51 // pred_fallthru
          _
        // Predicated region
        $region57: #{tpu_custom_call.1} parent=51 // pred_check
          %p328 = pneg %p111
        $region58: #{tpu_custom_call.1} parent=51 // pred_check_branch
          %330 = sbr.rel (%p328) target = $region60
        $region59: #{tpu_custom_call.1} parent=51 // pred_region
          %331 = dma.done [#allocation7], 1024
        $region60: #{tpu_custom_call.1} parent=51 // pred_fallthru
          _
        // Predicated region
        $region61: #{tpu_custom_call.1} parent=51 // pred_check
          %p332 = pneg %p153
        $region62: #{tpu_custom_call.1} parent=51 // pred_check_branch
          %334 = sbr.rel (%p332) target = $region64
        $region63: #{tpu_custom_call.1} parent=51 // pred_region
          %335 = dma.done [#allocation7], 9216
        $region64: #{tpu_custom_call.1} parent=51 // pred_fallthru
          _
        // Predicated region
        $region65: #{tpu_custom_call.1} parent=51 // pred_check
          %p336 = pneg %p195
        $region66: #{tpu_custom_call.1} parent=51 // pred_check_branch
          %338 = sbr.rel (%p336) target = $region68
        $region67: #{tpu_custom_call.1} parent=51 // pred_region
          %339 = dma.done [#allocation10], 1024
        $region68: #{tpu_custom_call.1} parent=51 // pred_fallthru
          _
        %s340 = sand.u32 %s35, 1
        %s341 = scalar_lea.sflag [#allocation4], %s340
        %s342 = sand.u32 %s35, 1
        %s343 = smul.addr %s342, 256
        %s344 = scalar_lea.vmem [#allocation3], %s343
        %p345 = pneg %p48
        %p346 = pneg %p45
        %p347 = pneg %p69
        %p348 = pneg %p66
        %p349 = pneg %p90
        %p350 = pneg %p87
        %p351 = pneg %p111
        %p352 = pneg %p108
        %p353 = pneg %p132
        %p354 = pneg %p129
        %p355 = pneg %p153
        %p356 = pneg %p150
        %p357 = pneg %p174
        %p358 = pneg %p171
        %p359 = pneg %p195
        %p360 = pneg %p192
        %p361 = pneg %p221
        %p362 = pneg %p218
        %s363 = sand.u32 %s208, 1
        %s364 = scalar_lea.sflag [#allocation5], %s363
        %s365 = sand.u32 %s208, 1
        %s366 = smul.addr %s365, 256
        %s367 = scalar_lea.vmem [#allocation11], %s366
        %s368 = smul.u32 32, %s27
        %s369 = smul.u32 32, %s27
        %v371 = vld [vmem:[%s323] sm:$0xff]
        %v372 = vld [vmem:[%s323 + $0x8] sm:$0xff]
        %v373 = vld [vmem:[%s323 + $0x10] sm:$0xff]
        %v374 = vld [vmem:[%s323 + $0x18] sm:$0xff]
        %v375 = vld [vmem:[%s323 + $0x20] sm:$0xff]
        %v376 = vld [vmem:[%s323 + $0x28] sm:$0xff]
        %v377 = vld [vmem:[%s323 + $0x30] sm:$0xff]
        %v378 = vld [vmem:[%s323 + $0x38] sm:$0xff]
        %v379 = vld [vmem:[%s323 + $0x40] sm:$0xff]
        %v380 = vld [vmem:[%s323 + $0x48] sm:$0xff]
        %v381 = vld [vmem:[%s323 + $0x50] sm:$0xff]
        %v382 = vld [vmem:[%s323 + $0x58] sm:$0xff]
        %v383 = vld [vmem:[%s323 + $0x60] sm:$0xff]
        %v384 = vld [vmem:[%s323 + $0x68] sm:$0xff]
        %v385 = vld [vmem:[%s323 + $0x70] sm:$0xff]
        %v386 = vld [vmem:[%s323 + $0x78] sm:$0xff]
        %v387 = vld [vmem:[%s323 + $0x80] sm:$0xff]
        %v388 = vld [vmem:[%s323 + $0x88] sm:$0xff]
        %v389 = vld [vmem:[%s323 + $0x90] sm:$0xff]
        %v390 = vld [vmem:[%s323 + $0x98] sm:$0xff]
        %v391 = vld [vmem:[%s323 + $0xa0] sm:$0xff]
        %v392 = vld [vmem:[%s323 + $0xa8] sm:$0xff]
        %v393 = vld [vmem:[%s323 + $0xb0] sm:$0xff]
        %v394 = vld [vmem:[%s323 + $0xb8] sm:$0xff]
        %v395 = vld [vmem:[%s323 + $0xc0] sm:$0xff]
        %v396 = vld [vmem:[%s323 + $0xc8] sm:$0xff]
        %v397 = vld [vmem:[%s323 + $0xd0] sm:$0xff]
        %v398 = vld [vmem:[%s323 + $0xd8] sm:$0xff]
        %v399 = vld [vmem:[%s323 + $0xe0] sm:$0xff]
        %v400 = vld [vmem:[%s323 + $0xe8] sm:$0xff]
        %v401 = vld [vmem:[%s323 + $0xf0] sm:$0xff]
        %v402 = vld [vmem:[%s323 + $0xf8] sm:$0xff]
        %v403 = vld [vmem:[%s1] sm:$0x1]
        %v405 = vlaneseq
        %v406 = vshrl.u32 %v405, 7
        %v407 = vsub.s32 0, %v406
        %v408 = vrot.slane %v403, %v407
        %v410 = vmul.f32 %v371, %v408
        %v411 = vmul.f32 %v372, %v408
        %v412 = vmul.f32 %v373, %v408
        %v413 = vmul.f32 %v374, %v408
        %v414 = vmul.f32 %v375, %v408
        %v415 = vmul.f32 %v376, %v408
        %v416 = vmul.f32 %v377, %v408
        %v417 = vmul.f32 %v378, %v408
        %v418 = vmul.f32 %v379, %v408
        %v419 = vmul.f32 %v380, %v408
        %v420 = vmul.f32 %v381, %v408
        %v421 = vmul.f32 %v382, %v408
        %v422 = vmul.f32 %v383, %v408
        %v423 = vmul.f32 %v384, %v408
        %v424 = vmul.f32 %v385, %v408
        %v425 = vmul.f32 %v386, %v408
        %v426 = vmul.f32 %v387, %v408
        %v427 = vmul.f32 %v388, %v408
        %v428 = vmul.f32 %v389, %v408
        %v429 = vmul.f32 %v390, %v408
        %v430 = vmul.f32 %v391, %v408
        %v431 = vmul.f32 %v392, %v408
        %v432 = vmul.f32 %v393, %v408
        %v433 = vmul.f32 %v394, %v408
        %v434 = vmul.f32 %v395, %v408
        %v435 = vmul.f32 %v396, %v408
        %v436 = vmul.f32 %v397, %v408
        %v437 = vmul.f32 %v398, %v408
        %v438 = vmul.f32 %v399, %v408
        %v439 = vmul.f32 %v400, %v408
        %v440 = vmul.f32 %v401, %v408
        %v441 = vmul.f32 %v402, %v408
        %v442 = vld [vmem:[%s2] sm:$0x1]
        %v444 = vlaneseq
        %v445 = vshrl.u32 %v444, 7
        %v446 = vsub.s32 0, %v445
        %v447 = vrot.slane %v442, %v446
        %v449 = vadd.f32 %v410, %v447
        %v450 = vadd.f32 %v411, %v447
        %v451 = vadd.f32 %v412, %v447
        %v452 = vadd.f32 %v413, %v447
        %v453 = vadd.f32 %v414, %v447
        %v454 = vadd.f32 %v415, %v447
        %v455 = vadd.f32 %v416, %v447
        %v456 = vadd.f32 %v417, %v447
        %v457 = vadd.f32 %v418, %v447
        %v458 = vadd.f32 %v419, %v447
        %v459 = vadd.f32 %v420, %v447
        %v460 = vadd.f32 %v421, %v447
        %v461 = vadd.f32 %v422, %v447
        %v462 = vadd.f32 %v423, %v447
        %v463 = vadd.f32 %v424, %v447
        %v464 = vadd.f32 %v425, %v447
        %v465 = vadd.f32 %v426, %v447
        %v466 = vadd.f32 %v427, %v447
        %v467 = vadd.f32 %v428, %v447
        %v468 = vadd.f32 %v429, %v447
        %v469 = vadd.f32 %v430, %v447
        %v470 = vadd.f32 %v431, %v447
        %v471 = vadd.f32 %v432, %v447
        %v472 = vadd.f32 %v433, %v447
        %v473 = vadd.f32 %v434, %v447
        %v474 = vadd.f32 %v435, %v447
        %v475 = vadd.f32 %v436, %v447
        %v476 = vadd.f32 %v437, %v447
        %v477 = vadd.f32 %v438, %v447
        %v478 = vadd.f32 %v439, %v447
        %v479 = vadd.f32 %v440, %v447
        %v480 = vadd.f32 %v441, %v447
        %v481 = vmax.f32 %v449, 0.0
        %v482 = vmax.f32 %v450, 0.0
        %v483 = vmax.f32 %v451, 0.0
        %v484 = vmax.f32 %v452, 0.0
        %v485 = vmax.f32 %v453, 0.0
        %v486 = vmax.f32 %v454, 0.0
        %v487 = vmax.f32 %v455, 0.0
        %v488 = vmax.f32 %v456, 0.0
        %v489 = vmax.f32 %v457, 0.0
        %v490 = vmax.f32 %v458, 0.0
        %v491 = vmax.f32 %v459, 0.0
        %v492 = vmax.f32 %v460, 0.0
        %v493 = vmax.f32 %v461, 0.0
        %v494 = vmax.f32 %v462, 0.0
        %v495 = vmax.f32 %v463, 0.0
        %v496 = vmax.f32 %v464, 0.0
        %v497 = vmax.f32 %v465, 0.0
        %v498 = vmax.f32 %v466, 0.0
        %v499 = vmax.f32 %v467, 0.0
        %v500 = vmax.f32 %v468, 0.0
        %v501 = vmax.f32 %v469, 0.0
        %v502 = vmax.f32 %v470, 0.0
        %v503 = vmax.f32 %v471, 0.0
        %v504 = vmax.f32 %v472, 0.0
        %v505 = vmax.f32 %v473, 0.0
        %v506 = vmax.f32 %v474, 0.0
        %v507 = vmax.f32 %v475, 0.0
        %v508 = vmax.f32 %v476, 0.0
        %v509 = vmax.f32 %v477, 0.0
        %v510 = vmax.f32 %v478, 0.0
        %v511 = vmax.f32 %v479, 0.0
        %v512 = vmax.f32 %v480, 0.0
        %v513 = vpack.c.bf16 %v482, %v481
        %v514 = vpack.c.bf16 %v484, %v483
        %v515 = vpack.c.bf16 %v486, %v485
        %v516 = vpack.c.bf16 %v488, %v487
        %v517 = vpack.c.bf16 %v490, %v489
        %v518 = vpack.c.bf16 %v492, %v491
        %v519 = vpack.c.bf16 %v494, %v493
        %v520 = vpack.c.bf16 %v496, %v495
        %v521 = vpack.c.bf16 %v498, %v497
        %v522 = vpack.c.bf16 %v500, %v499
        %v523 = vpack.c.bf16 %v502, %v501
        %v524 = vpack.c.bf16 %v504, %v503
        %v525 = vpack.c.bf16 %v506, %v505
        %v526 = vpack.c.bf16 %v508, %v507
        %v527 = vpack.c.bf16 %v510, %v509
        %v528 = vpack.c.bf16 %v512, %v511
        %v529 = vld [vmem:[#allocation6] sm:$0xf]
        %v530 = vld [vmem:[#allocation6 + $0x4] sm:$0xf]
        %v531 = vld [vmem:[#allocation6 + $0x8] sm:$0xf]
        %v532 = vld [vmem:[#allocation6 + $0xc] sm:$0xf]
        %v533 = vld [vmem:[#allocation6 + $0x10] sm:$0xf]
        %v534 = vld [vmem:[#allocation6 + $0x14] sm:$0xf]
        %v535 = vld [vmem:[#allocation6 + $0x18] sm:$0xf]
        %v536 = vld [vmem:[#allocation6 + $0x1c] sm:$0xf]
        %v537 = vld [vmem:[#allocation6 + $0x20] sm:$0xf]
        %v538 = vld [vmem:[#allocation6 + $0x24] sm:$0xf]
        %v539 = vld [vmem:[#allocation6 + $0x28] sm:$0xf]
        %v540 = vld [vmem:[#allocation6 + $0x2c] sm:$0xf]
        %v541 = vld [vmem:[#allocation6 + $0x30] sm:$0xf]
        %v542 = vld [vmem:[#allocation6 + $0x34] sm:$0xf]
        %v543 = vld [vmem:[#allocation6 + $0x38] sm:$0xf]
        %v544 = vld [vmem:[#allocation6 + $0x3c] sm:$0xf]
        %v545 = vld [vmem:[%s4] sm:$0x1]
        %v547 = vlaneseq
        %v548 = vshrl.u32 %v547, 7
        %v549 = vsub.s32 0, %v548
        %v550 = vrot.slane %v545, %v549
        %v568 = vunpack.c.l.b16 %v529
        %v569 = vunpack.c.l.b16 %v530
        %v570 = vunpack.c.l.b16 %v531
        %v571 = vunpack.c.l.b16 %v532
        %v572 = vunpack.c.l.b16 %v533
        %v573 = vunpack.c.l.b16 %v534
        %v574 = vunpack.c.l.b16 %v535
        %v575 = vunpack.c.l.b16 %v536
        %v576 = vunpack.c.l.b16 %v537
        %v577 = vunpack.c.l.b16 %v538
        %v578 = vunpack.c.l.b16 %v539
        %v579 = vunpack.c.l.b16 %v540
        %v580 = vunpack.c.l.b16 %v541
        %v581 = vunpack.c.l.b16 %v542
        %v582 = vunpack.c.l.b16 %v543
        %v583 = vunpack.c.l.b16 %v544
        %v584 = vpack.c.b16 %v569, %v568
        %v585 = vpack.c.b16 %v571, %v570
        %v586 = vpack.c.b16 %v573, %v572
        %v587 = vpack.c.b16 %v575, %v574
        %v588 = vpack.c.b16 %v577, %v576
        %v589 = vpack.c.b16 %v579, %v578
        %v590 = vpack.c.b16 %v581, %v580
        %v591 = vpack.c.b16 %v583, %v582
        %600 = vmatprep.subr.bf16.mxu0 0
        %601 = vmatpush1.bf16.msra.mxu0 %v591
        %602 = vmatprep.subr.bf16.mxu0 0
        %603 = vmatpush1.bf16.msra.mxu0 %v590
        %604 = vmatprep.subr.bf16.mxu0 0
        %605 = vmatpush1.bf16.msra.mxu0 %v589
        %606 = vmatprep.subr.bf16.mxu0 0
        %607 = vmatpush1.bf16.msra.mxu0 %v588
        %608 = vmatprep.subr.bf16.mxu0 0
        %609 = vmatpush1.bf16.msra.mxu0 %v587
        %610 = vmatprep.subr.bf16.mxu0 0
        %611 = vmatpush1.bf16.msra.mxu0 %v586
        %612 = vmatprep.subr.bf16.mxu0 0
        %613 = vmatpush1.bf16.msra.mxu0 %v585
        %614 = vmatprep.subr.bf16.mxu0 0
        %615 = vmatpush1.bf16.msra.mxu0 %v584
        %616 = vmatprep.subr.bf16.mxu0 0
        %617 = vmatpush2.bf16.msra.mxu0 0
        %618 = vmatprep.subr.bf16.mxu0 0
        %619 = vmatpush2.bf16.msra.mxu0 0
        %620 = vmatprep.subr.bf16.mxu0 0
        %621 = vmatpush2.bf16.msra.mxu0 0
        %622 = vmatprep.subr.bf16.mxu0 0
        %623 = vmatpush2.bf16.msra.mxu0 0
        %624 = vmatprep.subr.bf16.mxu0 0
        %625 = vmatpush2.bf16.msra.mxu0 0
        %626 = vmatprep.subr.bf16.mxu0 0
        %627 = vmatpush2.bf16.msra.mxu0 0
        %628 = vmatprep.subr.bf16.mxu0 0
        %629 = vmatpush2.bf16.msra.mxu0 0
        %630 = vmatprep.subr.bf16.mxu0 0
        %631 = vmatpush2.bf16.msra.mxu0 0
        %632 = vmatprep.mubr.bf16.mxu0 0
        %633 = vmatmul.mubr.bf16.gmra.mxu0 %v513
        %v634 = vpop.f32.mrf.mxu0
        %v635 = vadd.f32 %v550, %v634
        %v636 = vpop.f32.mrf.mxu0
        %v637 = vpop.f32.mrf.mxu0
        %v638 = vadd.f32 %v550, %v637
        %v639 = vpop.f32.mrf.mxu0
        %640 = vmatprep.mubr.bf16.mxu0 0
        %641 = vmatmul.mubr.bf16.gmra.mxu0 %v514
        %v642 = vpop.f32.mrf.mxu0
        %v643 = vadd.f32 %v550, %v642
        %v644 = vpop.f32.mrf.mxu0
        %v645 = vpop.f32.mrf.mxu0
        %v646 = vadd.f32 %v550, %v645
        %v647 = vpop.f32.mrf.mxu0
        %648 = vmatprep.mubr.bf16.mxu0 0
        %649 = vmatmul.mubr.bf16.gmra.mxu0 %v515
        %v650 = vpop.f32.mrf.mxu0
        %v651 = vadd.f32 %v550, %v650
        %v652 = vpop.f32.mrf.mxu0
        %v653 = vpop.f32.mrf.mxu0
        %v654 = vadd.f32 %v550, %v653
        %v655 = vpop.f32.mrf.mxu0
        %656 = vmatprep.mubr.bf16.mxu0 0
        %657 = vmatmul.mubr.bf16.gmra.mxu0 %v516
        %v658 = vpop.f32.mrf.mxu0
        %v659 = vadd.f32 %v550, %v658
        %v660 = vpop.f32.mrf.mxu0
        %v661 = vpop.f32.mrf.mxu0
        %v662 = vadd.f32 %v550, %v661
        %v663 = vpop.f32.mrf.mxu0
        %664 = vmatprep.mubr.bf16.mxu0 0
        %665 = vmatmul.mubr.bf16.gmra.mxu0 %v517
        %v666 = vpop.f32.mrf.mxu0
        %v667 = vadd.f32 %v550, %v666
        %v668 = vpop.f32.mrf.mxu0
        %v669 = vpop.f32.mrf.mxu0
        %v670 = vadd.f32 %v550, %v669
        %v671 = vpop.f32.mrf.mxu0
        %672 = vmatprep.mubr.bf16.mxu0 0
        %673 = vmatmul.mubr.bf16.gmra.mxu0 %v518
        %v674 = vpop.f32.mrf.mxu0
        %v675 = vadd.f32 %v550, %v674
        %v676 = vpop.f32.mrf.mxu0
        %v677 = vpop.f32.mrf.mxu0
        %v678 = vadd.f32 %v550, %v677
        %v679 = vpop.f32.mrf.mxu0
        %680 = vmatprep.mubr.bf16.mxu0 0
        %681 = vmatmul.mubr.bf16.gmra.mxu0 %v519
        %v682 = vpop.f32.mrf.mxu0
        %v683 = vadd.f32 %v550, %v682
        %v684 = vpop.f32.mrf.mxu0
        %v685 = vpop.f32.mrf.mxu0
        %v686 = vadd.f32 %v550, %v685
        %v687 = vpop.f32.mrf.mxu0
        %688 = vmatprep.mubr.bf16.mxu0 0
        %689 = vmatmul.mubr.bf16.gmra.mxu0 %v520
        %v690 = vpop.f32.mrf.mxu0
        %v691 = vadd.f32 %v550, %v690
        %v692 = vpop.f32.mrf.mxu0
        %v693 = vpop.f32.mrf.mxu0
        %v694 = vadd.f32 %v550, %v693
        %v695 = vpop.f32.mrf.mxu0
        %696 = vmatprep.mubr.bf16.mxu0 0
        %697 = vmatmul.mubr.bf16.gmra.mxu0 %v521
        %v698 = vpop.f32.mrf.mxu0
        %v699 = vadd.f32 %v550, %v698
        %v700 = vpop.f32.mrf.mxu0
        %v701 = vpop.f32.mrf.mxu0
        %v702 = vadd.f32 %v550, %v701
        %v703 = vpop.f32.mrf.mxu0
        %704 = vmatprep.mubr.bf16.mxu0 0
        %705 = vmatmul.mubr.bf16.gmra.mxu0 %v522
        %v706 = vpop.f32.mrf.mxu0
        %v707 = vadd.f32 %v550, %v706
        %v708 = vpop.f32.mrf.mxu0
        %v709 = vpop.f32.mrf.mxu0
        %v710 = vadd.f32 %v550, %v709
        %v711 = vpop.f32.mrf.mxu0
        %712 = vmatprep.mubr.bf16.mxu0 0
        %713 = vmatmul.mubr.bf16.gmra.mxu0 %v523
        %v714 = vpop.f32.mrf.mxu0
        %v715 = vadd.f32 %v550, %v714
        %v716 = vpop.f32.mrf.mxu0
        %v717 = vpop.f32.mrf.mxu0
        %v718 = vadd.f32 %v550, %v717
        %v719 = vpop.f32.mrf.mxu0
        %720 = vmatprep.mubr.bf16.mxu0 0
        %721 = vmatmul.mubr.bf16.gmra.mxu0 %v524
        %v722 = vpop.f32.mrf.mxu0
        %v723 = vadd.f32 %v550, %v722
        %v724 = vpop.f32.mrf.mxu0
        %v725 = vpop.f32.mrf.mxu0
        %v726 = vadd.f32 %v550, %v725
        %v727 = vpop.f32.mrf.mxu0
        %728 = vmatprep.mubr.bf16.mxu0 0
        %729 = vmatmul.mubr.bf16.gmra.mxu0 %v525
        %v730 = vpop.f32.mrf.mxu0
        %v731 = vadd.f32 %v550, %v730
        %v732 = vpop.f32.mrf.mxu0
        %v733 = vpop.f32.mrf.mxu0
        %v734 = vadd.f32 %v550, %v733
        %v735 = vpop.f32.mrf.mxu0
        %736 = vmatprep.mubr.bf16.mxu0 0
        %737 = vmatmul.mubr.bf16.gmra.mxu0 %v526
        %v738 = vpop.f32.mrf.mxu0
        %v739 = vadd.f32 %v550, %v738
        %v740 = vpop.f32.mrf.mxu0
        %v741 = vpop.f32.mrf.mxu0
        %v742 = vadd.f32 %v550, %v741
        %v743 = vpop.f32.mrf.mxu0
        %744 = vmatprep.mubr.bf16.mxu0 0
        %745 = vmatmul.mubr.bf16.gmra.mxu0 %v527
        %v746 = vpop.f32.mrf.mxu0
        %v747 = vadd.f32 %v550, %v746
        %v748 = vpop.f32.mrf.mxu0
        %v749 = vpop.f32.mrf.mxu0
        %v750 = vadd.f32 %v550, %v749
        %v751 = vpop.f32.mrf.mxu0
        %752 = vmatprep.mubr.bf16.mxu0 0
        %753 = vmatmul.mubr.bf16.gmra.mxu0 %v528
        %v754 = vpop.f32.mrf.mxu0
        %v755 = vadd.f32 %v550, %v754
        %v756 = vpop.f32.mrf.mxu0
        %v757 = vpop.f32.mrf.mxu0
        %v758 = vadd.f32 %v550, %v757
        %v759 = vpop.f32.mrf.mxu0
        %760 = vdwg.mxu0
        %v761 = vmax.f32 %v635, 0.0
        %v762 = vmax.f32 %v638, 0.0
        %v763 = vmax.f32 %v643, 0.0
        %v764 = vmax.f32 %v646, 0.0
        %v765 = vmax.f32 %v651, 0.0
        %v766 = vmax.f32 %v654, 0.0
        %v767 = vmax.f32 %v659, 0.0
        %v768 = vmax.f32 %v662, 0.0
        %v769 = vmax.f32 %v667, 0.0
        %v770 = vmax.f32 %v670, 0.0
        %v771 = vmax.f32 %v675, 0.0
        %v772 = vmax.f32 %v678, 0.0
        %v773 = vmax.f32 %v683, 0.0
        %v774 = vmax.f32 %v686, 0.0
        %v775 = vmax.f32 %v691, 0.0
        %v776 = vmax.f32 %v694, 0.0
        %v777 = vmax.f32 %v699, 0.0
        %v778 = vmax.f32 %v702, 0.0
        %v779 = vmax.f32 %v707, 0.0
        %v780 = vmax.f32 %v710, 0.0
        %v781 = vmax.f32 %v715, 0.0
        %v782 = vmax.f32 %v718, 0.0
        %v783 = vmax.f32 %v723, 0.0
        %v784 = vmax.f32 %v726, 0.0
        %v785 = vmax.f32 %v731, 0.0
        %v786 = vmax.f32 %v734, 0.0
        %v787 = vmax.f32 %v739, 0.0
        %v788 = vmax.f32 %v742, 0.0
        %v789 = vmax.f32 %v747, 0.0
        %v790 = vmax.f32 %v750, 0.0
        %v791 = vmax.f32 %v755, 0.0
        %v792 = vmax.f32 %v758, 0.0
        %v793 = vlaneseq
        %v794 = vshrl.u32 %v793, 7
        %v795 = vadd.s32 %v794, 8
        %v796 = vadd.s32 %v794, 16
        %v797 = vadd.s32 %v794, 24
        %v798 = vadd.s32 %v794, 32
        %v799 = vadd.s32 %v794, 40
        %v800 = vadd.s32 %v794, 48
        %v801 = vadd.s32 %v794, 56
        %v802 = vadd.s32 %v794, 64
        %v803 = vadd.s32 %v794, 72
        %v804 = vadd.s32 %v794, 80
        %v805 = vadd.s32 %v794, 88
        %v806 = vadd.s32 %v794, 96
        %v807 = vadd.s32 %v794, 104
        %v808 = vadd.s32 %v794, 112
        %v809 = vadd.s32 %v794, 120
        %v810 = vadd.s32 %v794, 128
        %v811 = vadd.s32 %v794, 136
        %v812 = vadd.s32 %v794, 144
        %v813 = vadd.s32 %v794, 152
        %v814 = vadd.s32 %v794, 160
        %v815 = vadd.s32 %v794, 168
        %v816 = vadd.s32 %v794, 176
        %v817 = vadd.s32 %v794, 184
        %v818 = vadd.s32 %v794, 192
        %v819 = vadd.s32 %v794, 200
        %v820 = vadd.s32 %v794, 208
        %v821 = vadd.s32 %v794, 216
        %v822 = vadd.s32 %v794, 224
        %v823 = vadd.s32 %v794, 232
        %v824 = vadd.s32 %v794, 240
        %v825 = vadd.s32 %v794, 248
        %vm826 = vcmp.lt.s32.totalorder %v794, 0
        %v827 = vsub.s32 0, %v794
        %v828 = vsel %vm826, %v827, %v794
        %v829 = vshrl.u32 %v828, 4
        %v830 = vand.u32 %v828, 15
        %v831 = vsub.s32 0, %v830
        %v832 = vsel %vm826, %v831, %v830
        %vm833 = vcmp.lt.s32.totalorder %v795, 0
        %v834 = vsub.s32 0, %v795
        %v835 = vsel %vm833, %v834, %v795
        %v836 = vshrl.u32 %v835, 4
        %v837 = vand.u32 %v835, 15
        %v838 = vsub.s32 0, %v837
        %v839 = vsel %vm833, %v838, %v837
        %vm840 = vcmp.lt.s32.totalorder %v796, 0
        %v841 = vsub.s32 0, %v796
        %v842 = vsel %vm840, %v841, %v796
        %v843 = vshrl.u32 %v842, 4
        %v844 = vand.u32 %v842, 15
        %v845 = vsub.s32 0, %v844
        %v846 = vsel %vm840, %v845, %v844
        %vm847 = vcmp.lt.s32.totalorder %v797, 0
        %v848 = vsub.s32 0, %v797
        %v849 = vsel %vm847, %v848, %v797
        %v850 = vshrl.u32 %v849, 4
        %v851 = vand.u32 %v849, 15
        %v852 = vsub.s32 0, %v851
        %v853 = vsel %vm847, %v852, %v851
        %vm854 = vcmp.lt.s32.totalorder %v798, 0
        %v855 = vsub.s32 0, %v798
        %v856 = vsel %vm854, %v855, %v798
        %v857 = vshrl.u32 %v856, 4
        %v858 = vand.u32 %v856, 15
        %v859 = vsub.s32 0, %v858
        %v860 = vsel %vm854, %v859, %v858
        %vm861 = vcmp.lt.s32.totalorder %v799, 0
        %v862 = vsub.s32 0, %v799
        %v863 = vsel %vm861, %v862, %v799
        %v864 = vshrl.u32 %v863, 4
        %v865 = vand.u32 %v863, 15
        %v866 = vsub.s32 0, %v865
        %v867 = vsel %vm861, %v866, %v865
        %vm868 = vcmp.lt.s32.totalorder %v800, 0
        %v869 = vsub.s32 0, %v800
        %v870 = vsel %vm868, %v869, %v800
        %v871 = vshrl.u32 %v870, 4
        %v872 = vand.u32 %v870, 15
        %v873 = vsub.s32 0, %v872
        %v874 = vsel %vm868, %v873, %v872
        %vm875 = vcmp.lt.s32.totalorder %v801, 0
        %v876 = vsub.s32 0, %v801
        %v877 = vsel %vm875, %v876, %v801
        %v878 = vshrl.u32 %v877, 4
        %v879 = vand.u32 %v877, 15
        %v880 = vsub.s32 0, %v879
        %v881 = vsel %vm875, %v880, %v879
        %vm882 = vcmp.lt.s32.totalorder %v802, 0
        %v883 = vsub.s32 0, %v802
        %v884 = vsel %vm882, %v883, %v802
        %v885 = vshrl.u32 %v884, 4
        %v886 = vand.u32 %v884, 15
        %v887 = vsub.s32 0, %v886
        %v888 = vsel %vm882, %v887, %v886
        %vm889 = vcmp.lt.s32.totalorder %v803, 0
        %v890 = vsub.s32 0, %v803
        %v891 = vsel %vm889, %v890, %v803
        %v892 = vshrl.u32 %v891, 4
        %v893 = vand.u32 %v891, 15
        %v894 = vsub.s32 0, %v893
        %v895 = vsel %vm889, %v894, %v893
        %vm896 = vcmp.lt.s32.totalorder %v804, 0
        %v897 = vsub.s32 0, %v804
        %v898 = vsel %vm896, %v897, %v804
        %v899 = vshrl.u32 %v898, 4
        %v900 = vand.u32 %v898, 15
        %v901 = vsub.s32 0, %v900
        %v902 = vsel %vm896, %v901, %v900
        %vm903 = vcmp.lt.s32.totalorder %v805, 0
        %v904 = vsub.s32 0, %v805
        %v905 = vsel %vm903, %v904, %v805
        %v906 = vshrl.u32 %v905, 4
        %v907 = vand.u32 %v905, 15
        %v908 = vsub.s32 0, %v907
        %v909 = vsel %vm903, %v908, %v907
        %vm910 = vcmp.lt.s32.totalorder %v806, 0
        %v911 = vsub.s32 0, %v806
        %v912 = vsel %vm910, %v911, %v806
        %v913 = vshrl.u32 %v912, 4
        %v914 = vand.u32 %v912, 15
        %v915 = vsub.s32 0, %v914
        %v916 = vsel %vm910, %v915, %v914
        %vm917 = vcmp.lt.s32.totalorder %v807, 0
        %v918 = vsub.s32 0, %v807
        %v919 = vsel %vm917, %v918, %v807
        %v920 = vshrl.u32 %v919, 4
        %v921 = vand.u32 %v919, 15
        %v922 = vsub.s32 0, %v921
        %v923 = vsel %vm917, %v922, %v921
        %vm924 = vcmp.lt.s32.totalorder %v808, 0
        %v925 = vsub.s32 0, %v808
        %v926 = vsel %vm924, %v925, %v808
        %v927 = vshrl.u32 %v926, 4
        %v928 = vand.u32 %v926, 15
        %v929 = vsub.s32 0, %v928
        %v930 = vsel %vm924, %v929, %v928
        %vm931 = vcmp.lt.s32.totalorder %v809, 0
        %v932 = vsub.s32 0, %v809
        %v933 = vsel %vm931, %v932, %v809
        %v934 = vshrl.u32 %v933, 4
        %v935 = vand.u32 %v933, 15
        %v936 = vsub.s32 0, %v935
        %v937 = vsel %vm931, %v936, %v935
        %vm938 = vcmp.lt.s32.totalorder %v810, 0
        %v939 = vsub.s32 0, %v810
        %v940 = vsel %vm938, %v939, %v810
        %v941 = vshrl.u32 %v940, 4
        %v942 = vand.u32 %v940, 15
        %v943 = vsub.s32 0, %v942
        %v944 = vsel %vm938, %v943, %v942
        %vm945 = vcmp.lt.s32.totalorder %v811, 0
        %v946 = vsub.s32 0, %v811
        %v947 = vsel %vm945, %v946, %v811
        %v948 = vshrl.u32 %v947, 4
        %v949 = vand.u32 %v947, 15
        %v950 = vsub.s32 0, %v949
        %v951 = vsel %vm945, %v950, %v949
        %vm952 = vcmp.lt.s32.totalorder %v812, 0
        %v953 = vsub.s32 0, %v812
        %v954 = vsel %vm952, %v953, %v812
        %v955 = vshrl.u32 %v954, 4
        %v956 = vand.u32 %v954, 15
        %v957 = vsub.s32 0, %v956
        %v958 = vsel %vm952, %v957, %v956
        %vm959 = vcmp.lt.s32.totalorder %v813, 0
        %v960 = vsub.s32 0, %v813
        %v961 = vsel %vm959, %v960, %v813
        %v962 = vshrl.u32 %v961, 4
        %v963 = vand.u32 %v961, 15
        %v964 = vsub.s32 0, %v963
        %v965 = vsel %vm959, %v964, %v963
        %vm966 = vcmp.lt.s32.totalorder %v814, 0
        %v967 = vsub.s32 0, %v814
        %v968 = vsel %vm966, %v967, %v814
        %v969 = vshrl.u32 %v968, 4
        %v970 = vand.u32 %v968, 15
        %v971 = vsub.s32 0, %v970
        %v972 = vsel %vm966, %v971, %v970
        %vm973 = vcmp.lt.s32.totalorder %v815, 0
        %v974 = vsub.s32 0, %v815
        %v975 = vsel %vm973, %v974, %v815
        %v976 = vshrl.u32 %v975, 4
        %v977 = vand.u32 %v975, 15
        %v978 = vsub.s32 0, %v977
        %v979 = vsel %vm973, %v978, %v977
        %vm980 = vcmp.lt.s32.totalorder %v816, 0
        %v981 = vsub.s32 0, %v816
        %v982 = vsel %vm980, %v981, %v816
        %v983 = vshrl.u32 %v982, 4
        %v984 = vand.u32 %v982, 15
        %v985 = vsub.s32 0, %v984
        %v986 = vsel %vm980, %v985, %v984
        %vm987 = vcmp.lt.s32.totalorder %v817, 0
        %v988 = vsub.s32 0, %v817
        %v989 = vsel %vm987, %v988, %v817
        %v990 = vshrl.u32 %v989, 4
        %v991 = vand.u32 %v989, 15
        %v992 = vsub.s32 0, %v991
        %v993 = vsel %vm987, %v992, %v991
        %vm994 = vcmp.lt.s32.totalorder %v818, 0
        %v995 = vsub.s32 0, %v818
        %v996 = vsel %vm994, %v995, %v818
        %v997 = vshrl.u32 %v996, 4
        %v998 = vand.u32 %v996, 15
        %v999 = vsub.s32 0, %v998
        %v1000 = vsel %vm994, %v999, %v998
        %vm1001 = vcmp.lt.s32.totalorder %v819, 0
        %v1002 = vsub.s32 0, %v819
        %v1003 = vsel %vm1001, %v1002, %v819
        %v1004 = vshrl.u32 %v1003, 4
        %v1005 = vand.u32 %v1003, 15
        %v1006 = vsub.s32 0, %v1005
        %v1007 = vsel %vm1001, %v1006, %v1005
        %vm1008 = vcmp.lt.s32.totalorder %v820, 0
        %v1009 = vsub.s32 0, %v820
        %v1010 = vsel %vm1008, %v1009, %v820
        %v1011 = vshrl.u32 %v1010, 4
        %v1012 = vand.u32 %v1010, 15
        %v1013 = vsub.s32 0, %v1012
        %v1014 = vsel %vm1008, %v1013, %v1012
        %vm1015 = vcmp.lt.s32.totalorder %v821, 0
        %v1016 = vsub.s32 0, %v821
        %v1017 = vsel %vm1015, %v1016, %v821
        %v1018 = vshrl.u32 %v1017, 4
        %v1019 = vand.u32 %v1017, 15
        %v1020 = vsub.s32 0, %v1019
        %v1021 = vsel %vm1015, %v1020, %v1019
        %vm1022 = vcmp.lt.s32.totalorder %v822, 0
        %v1023 = vsub.s32 0, %v822
        %v1024 = vsel %vm1022, %v1023, %v822
        %v1025 = vshrl.u32 %v1024, 4
        %v1026 = vand.u32 %v1024, 15
        %v1027 = vsub.s32 0, %v1026
        %v1028 = vsel %vm1022, %v1027, %v1026
        %vm1029 = vcmp.lt.s32.totalorder %v823, 0
        %v1030 = vsub.s32 0, %v823
        %v1031 = vsel %vm1029, %v1030, %v823
        %v1032 = vshrl.u32 %v1031, 4
        %v1033 = vand.u32 %v1031, 15
        %v1034 = vsub.s32 0, %v1033
        %v1035 = vsel %vm1029, %v1034, %v1033
        %vm1036 = vcmp.lt.s32.totalorder %v824, 0
        %v1037 = vsub.s32 0, %v824
        %v1038 = vsel %vm1036, %v1037, %v824
        %v1039 = vshrl.u32 %v1038, 4
        %v1040 = vand.u32 %v1038, 15
        %v1041 = vsub.s32 0, %v1040
        %v1042 = vsel %vm1036, %v1041, %v1040
        %vm1043 = vcmp.lt.s32.totalorder %v825, 0
        %v1044 = vsub.s32 0, %v825
        %v1045 = vsel %vm1043, %v1044, %v825
        %v1046 = vshrl.u32 %v1045, 4
        %v1047 = vand.u32 %v1045, 15
        %v1048 = vsub.s32 0, %v1047
        %v1049 = vsel %vm1043, %v1048, %v1047
        %vm1050 = vcmp.ne.s32.totalorder %v832, 0
        %vm1051 = vcmp.ne.s32.totalorder %v839, 0
        %vm1052 = vcmp.ne.s32.totalorder %v846, 0
        %vm1053 = vcmp.ne.s32.totalorder %v853, 0
        %vm1054 = vcmp.ne.s32.totalorder %v860, 0
        %vm1055 = vcmp.ne.s32.totalorder %v867, 0
        %vm1056 = vcmp.ne.s32.totalorder %v874, 0
        %vm1057 = vcmp.ne.s32.totalorder %v881, 0
        %vm1058 = vcmp.ne.s32.totalorder %v888, 0
        %vm1059 = vcmp.ne.s32.totalorder %v895, 0
        %vm1060 = vcmp.ne.s32.totalorder %v902, 0
        %vm1061 = vcmp.ne.s32.totalorder %v909, 0
        %vm1062 = vcmp.ne.s32.totalorder %v916, 0
        %vm1063 = vcmp.ne.s32.totalorder %v923, 0
        %vm1064 = vcmp.ne.s32.totalorder %v930, 0
        %vm1065 = vcmp.ne.s32.totalorder %v937, 0
        %vm1066 = vcmp.ne.s32.totalorder %v944, 0
        %vm1067 = vcmp.ne.s32.totalorder %v951, 0
        %vm1068 = vcmp.ne.s32.totalorder %v958, 0
        %vm1069 = vcmp.ne.s32.totalorder %v965, 0
        %vm1070 = vcmp.ne.s32.totalorder %v972, 0
        %vm1071 = vcmp.ne.s32.totalorder %v979, 0
        %vm1072 = vcmp.ne.s32.totalorder %v986, 0
        %vm1073 = vcmp.ne.s32.totalorder %v993, 0
        %vm1074 = vcmp.ne.s32.totalorder %v1000, 0
        %vm1075 = vcmp.ne.s32.totalorder %v1007, 0
        %vm1076 = vcmp.ne.s32.totalorder %v1014, 0
        %vm1077 = vcmp.ne.s32.totalorder %v1021, 0
        %vm1078 = vcmp.ne.s32.totalorder %v1028, 0
        %vm1079 = vcmp.ne.s32.totalorder %v1035, 0
        %vm1080 = vcmp.ne.s32.totalorder %v1042, 0
        %vm1081 = vcmp.ne.s32.totalorder %v1049, 0
        %vm1082 = vcmp.lt.s32.totalorder %v832, 0
        %vm1083 = vcmp.lt.s32.totalorder %v839, 0
        %vm1084 = vcmp.lt.s32.totalorder %v846, 0
        %vm1085 = vcmp.lt.s32.totalorder %v853, 0
        %vm1086 = vcmp.lt.s32.totalorder %v860, 0
        %vm1087 = vcmp.lt.s32.totalorder %v867, 0
        %vm1088 = vcmp.lt.s32.totalorder %v874, 0
        %vm1089 = vcmp.lt.s32.totalorder %v881, 0
        %vm1090 = vcmp.lt.s32.totalorder %v888, 0
        %vm1091 = vcmp.lt.s32.totalorder %v895, 0
        %vm1092 = vcmp.lt.s32.totalorder %v902, 0
        %vm1093 = vcmp.lt.s32.totalorder %v909, 0
        %vm1094 = vcmp.lt.s32.totalorder %v916, 0
        %vm1095 = vcmp.lt.s32.totalorder %v923, 0
        %vm1096 = vcmp.lt.s32.totalorder %v930, 0
        %vm1097 = vcmp.lt.s32.totalorder %v937, 0
        %vm1098 = vcmp.lt.s32.totalorder %v944, 0
        %vm1099 = vcmp.lt.s32.totalorder %v951, 0
        %vm1100 = vcmp.lt.s32.totalorder %v958, 0
        %vm1101 = vcmp.lt.s32.totalorder %v965, 0
        %vm1102 = vcmp.lt.s32.totalorder %v972, 0
        %vm1103 = vcmp.lt.s32.totalorder %v979, 0
        %vm1104 = vcmp.lt.s32.totalorder %v986, 0
        %vm1105 = vcmp.lt.s32.totalorder %v993, 0
        %vm1106 = vcmp.lt.s32.totalorder %v1000, 0
        %vm1107 = vcmp.lt.s32.totalorder %v1007, 0
        %vm1108 = vcmp.lt.s32.totalorder %v1014, 0
        %vm1109 = vcmp.lt.s32.totalorder %v1021, 0
        %vm1110 = vcmp.lt.s32.totalorder %v1028, 0
        %vm1111 = vcmp.lt.s32.totalorder %v1035, 0
        %vm1112 = vcmp.lt.s32.totalorder %v1042, 0
        %vm1113 = vcmp.lt.s32.totalorder %v1049, 0
        %vm1114 = vmand %vm1082, %vm1050
        %vm1115 = vmand %vm1083, %vm1051
        %vm1116 = vmand %vm1084, %vm1052
        %vm1117 = vmand %vm1085, %vm1053
        %vm1118 = vmand %vm1086, %vm1054
        %vm1119 = vmand %vm1087, %vm1055
        %vm1120 = vmand %vm1088, %vm1056
        %vm1121 = vmand %vm1089, %vm1057
        %vm1122 = vmand %vm1090, %vm1058
        %vm1123 = vmand %vm1091, %vm1059
        %vm1124 = vmand %vm1092, %vm1060
        %vm1125 = vmand %vm1093, %vm1061
        %vm1126 = vmand %vm1094, %vm1062
        %vm1127 = vmand %vm1095, %vm1063
        %vm1128 = vmand %vm1096, %vm1064
        %vm1129 = vmand %vm1097, %vm1065
        %vm1130 = vmand %vm1098, %vm1066
        %vm1131 = vmand %vm1099, %vm1067
        %vm1132 = vmand %vm1100, %vm1068
        %vm1133 = vmand %vm1101, %vm1069
        %vm1134 = vmand %vm1102, %vm1070
        %vm1135 = vmand %vm1103, %vm1071
        %vm1136 = vmand %vm1104, %vm1072
        %vm1137 = vmand %vm1105, %vm1073
        %vm1138 = vmand %vm1106, %vm1074
        %vm1139 = vmand %vm1107, %vm1075
        %vm1140 = vmand %vm1108, %vm1076
        %vm1141 = vmand %vm1109, %vm1077
        %vm1142 = vmand %vm1110, %vm1078
        %vm1143 = vmand %vm1111, %vm1079
        %vm1144 = vmand %vm1112, %vm1080
        %vm1145 = vmand %vm1113, %vm1081
        %v1146 = vadd.s32 %v832, 16
        %v1147 = vadd.s32 %v839, 16
        %v1148 = vadd.s32 %v846, 16
        %v1149 = vadd.s32 %v853, 16
        %v1150 = vadd.s32 %v860, 16
        %v1151 = vadd.s32 %v867, 16
        %v1152 = vadd.s32 %v874, 16
        %v1153 = vadd.s32 %v881, 16
        %v1154 = vadd.s32 %v888, 16
        %v1155 = vadd.s32 %v895, 16
        %v1156 = vadd.s32 %v902, 16
        %v1157 = vadd.s32 %v909, 16
        %v1158 = vadd.s32 %v916, 16
        %v1159 = vadd.s32 %v923, 16
        %v1160 = vadd.s32 %v930, 16
        %v1161 = vadd.s32 %v937, 16
        %v1162 = vadd.s32 %v944, 16
        %v1163 = vadd.s32 %v951, 16
        %v1164 = vadd.s32 %v958, 16
        %v1165 = vadd.s32 %v965, 16
        %v1166 = vadd.s32 %v972, 16
        %v1167 = vadd.s32 %v979, 16
        %v1168 = vadd.s32 %v986, 16
        %v1169 = vadd.s32 %v993, 16
        %v1170 = vadd.s32 %v1000, 16
        %v1171 = vadd.s32 %v1007, 16
        %v1172 = vadd.s32 %v1014, 16
        %v1173 = vadd.s32 %v1021, 16
        %v1174 = vadd.s32 %v1028, 16
        %v1175 = vadd.s32 %v1035, 16
        %v1176 = vadd.s32 %v1042, 16
        %v1177 = vadd.s32 %v1049, 16
        %v1178 = vsel %vm1114, %v1146, %v832
        %v1179 = vsel %vm1115, %v1147, %v839
        %v1180 = vsel %vm1116, %v1148, %v846
        %v1181 = vsel %vm1117, %v1149, %v853
        %v1182 = vsel %vm1118, %v1150, %v860
        %v1183 = vsel %vm1119, %v1151, %v867
        %v1184 = vsel %vm1120, %v1152, %v874
        %v1185 = vsel %vm1121, %v1153, %v881
        %v1186 = vsel %vm1122, %v1154, %v888
        %v1187 = vsel %vm1123, %v1155, %v895
        %v1188 = vsel %vm1124, %v1156, %v902
        %v1189 = vsel %vm1125, %v1157, %v909
        %v1190 = vsel %vm1126, %v1158, %v916
        %v1191 = vsel %vm1127, %v1159, %v923
        %v1192 = vsel %vm1128, %v1160, %v930
        %v1193 = vsel %vm1129, %v1161, %v937
        %v1194 = vsel %vm1130, %v1162, %v944
        %v1195 = vsel %vm1131, %v1163, %v951
        %v1196 = vsel %vm1132, %v1164, %v958
        %v1197 = vsel %vm1133, %v1165, %v965
        %v1198 = vsel %vm1134, %v1166, %v972
        %v1199 = vsel %vm1135, %v1167, %v979
        %v1200 = vsel %vm1136, %v1168, %v986
        %v1201 = vsel %vm1137, %v1169, %v993
        %v1202 = vsel %vm1138, %v1170, %v1000
        %v1203 = vsel %vm1139, %v1171, %v1007
        %v1204 = vsel %vm1140, %v1172, %v1014
        %v1205 = vsel %vm1141, %v1173, %v1021
        %v1206 = vsel %vm1142, %v1174, %v1028
        %v1207 = vsel %vm1143, %v1175, %v1035
        %v1208 = vsel %vm1144, %v1176, %v1042
        %v1209 = vsel %vm1145, %v1177, %v1049
        %vm1210 = vcmp.gt.s32.totalorder %v1178, 0
        %vm1211 = vcmp.gt.s32.totalorder %v1179, 0
        %vm1212 = vcmp.gt.s32.totalorder %v1180, 0
        %vm1213 = vcmp.gt.s32.totalorder %v1181, 0
        %vm1214 = vcmp.gt.s32.totalorder %v1182, 0
        %vm1215 = vcmp.gt.s32.totalorder %v1183, 0
        %vm1216 = vcmp.gt.s32.totalorder %v1184, 0
        %vm1217 = vcmp.gt.s32.totalorder %v1185, 0
        %vm1218 = vcmp.gt.s32.totalorder %v1186, 0
        %vm1219 = vcmp.gt.s32.totalorder %v1187, 0
        %vm1220 = vcmp.gt.s32.totalorder %v1188, 0
        %vm1221 = vcmp.gt.s32.totalorder %v1189, 0
        %vm1222 = vcmp.gt.s32.totalorder %v1190, 0
        %vm1223 = vcmp.gt.s32.totalorder %v1191, 0
        %vm1224 = vcmp.gt.s32.totalorder %v1192, 0
        %vm1225 = vcmp.gt.s32.totalorder %v1193, 0
        %vm1226 = vcmp.gt.s32.totalorder %v1194, 0
        %vm1227 = vcmp.gt.s32.totalorder %v1195, 0
        %vm1228 = vcmp.gt.s32.totalorder %v1196, 0
        %vm1229 = vcmp.gt.s32.totalorder %v1197, 0
        %vm1230 = vcmp.gt.s32.totalorder %v1198, 0
        %vm1231 = vcmp.gt.s32.totalorder %v1199, 0
        %vm1232 = vcmp.gt.s32.totalorder %v1200, 0
        %vm1233 = vcmp.gt.s32.totalorder %v1201, 0
        %vm1234 = vcmp.gt.s32.totalorder %v1202, 0
        %vm1235 = vcmp.gt.s32.totalorder %v1203, 0
        %vm1236 = vcmp.gt.s32.totalorder %v1204, 0
        %vm1237 = vcmp.gt.s32.totalorder %v1205, 0
        %vm1238 = vcmp.gt.s32.totalorder %v1206, 0
        %vm1239 = vcmp.gt.s32.totalorder %v1207, 0
        %vm1240 = vcmp.gt.s32.totalorder %v1208, 0
        %vm1241 = vcmp.gt.s32.totalorder %v1209, 0
        %v1242 = vrot.slane %v761, 7
        %v1243 = vrot.slane %v762, 7
        %v1244 = vrot.slane %v763, 7
        %v1245 = vrot.slane %v764, 7
        %v1246 = vrot.slane %v765, 7
        %v1247 = vrot.slane %v766, 7
        %v1248 = vrot.slane %v767, 7
        %v1249 = vrot.slane %v768, 7
        %v1250 = vrot.slane %v769, 7
        %v1251 = vrot.slane %v770, 7
        %v1252 = vrot.slane %v771, 7
        %v1253 = vrot.slane %v772, 7
        %v1254 = vrot.slane %v773, 7
        %v1255 = vrot.slane %v774, 7
        %v1256 = vrot.slane %v775, 7
        %v1257 = vrot.slane %v776, 7
        %v1258 = vrot.slane %v777, 7
        %v1259 = vrot.slane %v778, 7
        %v1260 = vrot.slane %v779, 7
        %v1261 = vrot.slane %v780, 7
        %v1262 = vrot.slane %v781, 7
        %v1263 = vrot.slane %v782, 7
        %v1264 = vrot.slane %v783, 7
        %v1265 = vrot.slane %v784, 7
        %v1266 = vrot.slane %v785, 7
        %v1267 = vrot.slane %v786, 7
        %v1268 = vrot.slane %v787, 7
        %v1269 = vrot.slane %v788, 7
        %v1270 = vrot.slane %v789, 7
        %v1271 = vrot.slane %v790, 7
        %v1272 = vrot.slane %v791, 7
        %v1273 = vrot.slane %v792, 7
        %vm1274 = vcmp.lt.s32.totalorder %v794, 1
        %v1275 = vsel %vm1274, %v1272, %v1273
        %v1276 = vsel %vm1274, %v1271, %v1272
        %v1277 = vsel %vm1274, %v1270, %v1271
        %v1278 = vsel %vm1274, %v1269, %v1270
        %v1279 = vsel %vm1274, %v1268, %v1269
        %v1280 = vsel %vm1274, %v1267, %v1268
        %v1281 = vsel %vm1274, %v1266, %v1267
        %v1282 = vsel %vm1274, %v1265, %v1266
        %v1283 = vsel %vm1274, %v1264, %v1265
        %v1284 = vsel %vm1274, %v1263, %v1264
        %v1285 = vsel %vm1274, %v1262, %v1263
        %v1286 = vsel %vm1274, %v1261, %v1262
        %v1287 = vsel %vm1274, %v1260, %v1261
        %v1288 = vsel %vm1274, %v1259, %v1260
        %v1289 = vsel %vm1274, %v1258, %v1259
        %v1290 = vsel %vm1274, %v1257, %v1258
        %v1291 = vsel %vm1274, %v1256, %v1257
        %v1292 = vsel %vm1274, %v1255, %v1256
        %v1293 = vsel %vm1274, %v1254, %v1255
        %v1294 = vsel %vm1274, %v1253, %v1254
        %v1295 = vsel %vm1274, %v1252, %v1253
        %v1296 = vsel %vm1274, %v1251, %v1252
        %v1297 = vsel %vm1274, %v1250, %v1251
        %v1298 = vsel %vm1274, %v1249, %v1250
        %v1299 = vsel %vm1274, %v1248, %v1249
        %v1300 = vsel %vm1274, %v1247, %v1248
        %v1301 = vsel %vm1274, %v1246, %v1247
        %v1302 = vsel %vm1274, %v1245, %v1246
        %v1303 = vsel %vm1274, %v1244, %v1245
        %v1304 = vsel %vm1274, %v1243, %v1244
        %v1305 = vsel %vm1274, %v1242, %v1243
        %v1306 = vsel %vm1274, %v1273, %v1242
        %v1307 = vsel %vm1210, 1, 0
        %v1308 = vsel %vm1211, 1, 0
        %v1309 = vsel %vm1212, 1, 0
        %v1310 = vsel %vm1213, 1, 0
        %v1311 = vsel %vm1214, 1, 0
        %v1312 = vsel %vm1215, 1, 0
        %v1313 = vsel %vm1216, 1, 0
        %v1314 = vsel %vm1217, 1, 0
        %v1315 = vsel %vm1218, 1, 0
        %v1316 = vsel %vm1219, 1, 0
        %v1317 = vsel %vm1220, 1, 0
        %v1318 = vsel %vm1221, 1, 0
        %v1319 = vsel %vm1222, 1, 0
        %v1320 = vsel %vm1223, 1, 0
        %v1321 = vsel %vm1224, 1, 0
        %v1322 = vsel %vm1225, 1, 0
        %v1323 = vsel %vm1226, 1, 0
        %v1324 = vsel %vm1227, 1, 0
        %v1325 = vsel %vm1228, 1, 0
        %v1326 = vsel %vm1229, 1, 0
        %v1327 = vsel %vm1230, 1, 0
        %v1328 = vsel %vm1231, 1, 0
        %v1329 = vsel %vm1232, 1, 0
        %v1330 = vsel %vm1233, 1, 0
        %v1331 = vsel %vm1234, 1, 0
        %v1332 = vsel %vm1235, 1, 0
        %v1333 = vsel %vm1236, 1, 0
        %v1334 = vsel %vm1237, 1, 0
        %v1335 = vsel %vm1238, 1, 0
        %v1336 = vsel %vm1239, 1, 0
        %v1337 = vsel %vm1240, 1, 0
        %v1338 = vsel %vm1241, 1, 0
        %vm1339 = vcmp.eq.s32.totalorder %v1307, 1
        %vm1340 = vcmp.eq.s32.totalorder %v1308, 1
        %vm1341 = vcmp.eq.s32.totalorder %v1309, 1
        %vm1342 = vcmp.eq.s32.totalorder %v1310, 1
        %vm1343 = vcmp.eq.s32.totalorder %v1311, 1
        %vm1344 = vcmp.eq.s32.totalorder %v1312, 1
        %vm1345 = vcmp.eq.s32.totalorder %v1313, 1
        %vm1346 = vcmp.eq.s32.totalorder %v1314, 1
        %vm1347 = vcmp.eq.s32.totalorder %v1315, 1
        %vm1348 = vcmp.eq.s32.totalorder %v1316, 1
        %vm1349 = vcmp.eq.s32.totalorder %v1317, 1
        %vm1350 = vcmp.eq.s32.totalorder %v1318, 1
        %vm1351 = vcmp.eq.s32.totalorder %v1319, 1
        %vm1352 = vcmp.eq.s32.totalorder %v1320, 1
        %vm1353 = vcmp.eq.s32.totalorder %v1321, 1
        %vm1354 = vcmp.eq.s32.totalorder %v1322, 1
        %vm1355 = vcmp.eq.s32.totalorder %v1323, 1
        %vm1356 = vcmp.eq.s32.totalorder %v1324, 1
        %vm1357 = vcmp.eq.s32.totalorder %v1325, 1
        %vm1358 = vcmp.eq.s32.totalorder %v1326, 1
        %vm1359 = vcmp.eq.s32.totalorder %v1327, 1
        %vm1360 = vcmp.eq.s32.totalorder %v1328, 1
        %vm1361 = vcmp.eq.s32.totalorder %v1329, 1
        %vm1362 = vcmp.eq.s32.totalorder %v1330, 1
        %vm1363 = vcmp.eq.s32.totalorder %v1331, 1
        %vm1364 = vcmp.eq.s32.totalorder %v1332, 1
        %vm1365 = vcmp.eq.s32.totalorder %v1333, 1
        %vm1366 = vcmp.eq.s32.totalorder %v1334, 1
        %vm1367 = vcmp.eq.s32.totalorder %v1335, 1
        %vm1368 = vcmp.eq.s32.totalorder %v1336, 1
        %vm1369 = vcmp.eq.s32.totalorder %v1337, 1
        %vm1370 = vcmp.eq.s32.totalorder %v1338, 1
        %v1371 = vsel %vm1339, %v1306, 0.0
        %v1372 = vsel %vm1340, %v1305, 0.0
        %v1373 = vsel %vm1341, %v1304, 0.0
        %v1374 = vsel %vm1342, %v1303, 0.0
        %v1375 = vsel %vm1343, %v1302, 0.0
        %v1376 = vsel %vm1344, %v1301, 0.0
        %v1377 = vsel %vm1345, %v1300, 0.0
        %v1378 = vsel %vm1346, %v1299, 0.0
        %v1379 = vsel %vm1347, %v1298, 0.0
        %v1380 = vsel %vm1348, %v1297, 0.0
        %v1381 = vsel %vm1349, %v1296, 0.0
        %v1382 = vsel %vm1350, %v1295, 0.0
        %v1383 = vsel %vm1351, %v1294, 0.0
        %v1384 = vsel %vm1352, %v1293, 0.0
        %v1385 = vsel %vm1353, %v1292, 0.0
        %v1386 = vsel %vm1354, %v1291, 0.0
        %v1387 = vsel %vm1355, %v1290, 0.0
        %v1388 = vsel %vm1356, %v1289, 0.0
        %v1389 = vsel %vm1357, %v1288, 0.0
        %v1390 = vsel %vm1358, %v1287, 0.0
        %v1391 = vsel %vm1359, %v1286, 0.0
        %v1392 = vsel %vm1360, %v1285, 0.0
        %v1393 = vsel %vm1361, %v1284, 0.0
        %v1394 = vsel %vm1362, %v1283, 0.0
        %v1395 = vsel %vm1363, %v1282, 0.0
        %v1396 = vsel %vm1364, %v1281, 0.0
        %v1397 = vsel %vm1365, %v1280, 0.0
        %v1398 = vsel %vm1366, %v1279, 0.0
        %v1399 = vsel %vm1367, %v1278, 0.0
        %v1400 = vsel %vm1368, %v1277, 0.0
        %v1401 = vsel %vm1369, %v1276, 0.0
        %v1402 = vsel %vm1370, %v1275, 0.0
        %vm1403 = vcmp.lt.s32.totalorder %v1178, 15
        %vm1404 = vcmp.lt.s32.totalorder %v1179, 15
        %vm1405 = vcmp.lt.s32.totalorder %v1180, 15
        %vm1406 = vcmp.lt.s32.totalorder %v1181, 15
        %vm1407 = vcmp.lt.s32.totalorder %v1182, 15
        %vm1408 = vcmp.lt.s32.totalorder %v1183, 15
        %vm1409 = vcmp.lt.s32.totalorder %v1184, 15
        %vm1410 = vcmp.lt.s32.totalorder %v1185, 15
        %vm1411 = vcmp.lt.s32.totalorder %v1186, 15
        %vm1412 = vcmp.lt.s32.totalorder %v1187, 15
        %vm1413 = vcmp.lt.s32.totalorder %v1188, 15
        %vm1414 = vcmp.lt.s32.totalorder %v1189, 15
        %vm1415 = vcmp.lt.s32.totalorder %v1190, 15
        %vm1416 = vcmp.lt.s32.totalorder %v1191, 15
        %vm1417 = vcmp.lt.s32.totalorder %v1192, 15
        %vm1418 = vcmp.lt.s32.totalorder %v1193, 15
        %vm1419 = vcmp.lt.s32.totalorder %v1194, 15
        %vm1420 = vcmp.lt.s32.totalorder %v1195, 15
        %vm1421 = vcmp.lt.s32.totalorder %v1196, 15
        %vm1422 = vcmp.lt.s32.totalorder %v1197, 15
        %vm1423 = vcmp.lt.s32.totalorder %v1198, 15
        %vm1424 = vcmp.lt.s32.totalorder %v1199, 15
        %vm1425 = vcmp.lt.s32.totalorder %v1200, 15
        %vm1426 = vcmp.lt.s32.totalorder %v1201, 15
        %vm1427 = vcmp.lt.s32.totalorder %v1202, 15
        %vm1428 = vcmp.lt.s32.totalorder %v1203, 15
        %vm1429 = vcmp.lt.s32.totalorder %v1204, 15
        %vm1430 = vcmp.lt.s32.totalorder %v1205, 15
        %vm1431 = vcmp.lt.s32.totalorder %v1206, 15
        %vm1432 = vcmp.lt.s32.totalorder %v1207, 15
        %vm1433 = vcmp.lt.s32.totalorder %v1208, 15
        %vm1434 = vcmp.lt.s32.totalorder %v1209, 15
        %v1435 = vrot.slane %v761, 1
        %v1436 = vrot.slane %v762, 1
        %v1437 = vrot.slane %v763, 1
        %v1438 = vrot.slane %v764, 1
        %v1439 = vrot.slane %v765, 1
        %v1440 = vrot.slane %v766, 1
        %v1441 = vrot.slane %v767, 1
        %v1442 = vrot.slane %v768, 1
        %v1443 = vrot.slane %v769, 1
        %v1444 = vrot.slane %v770, 1
        %v1445 = vrot.slane %v771, 1
        %v1446 = vrot.slane %v772, 1
        %v1447 = vrot.slane %v773, 1
        %v1448 = vrot.slane %v774, 1
        %v1449 = vrot.slane %v775, 1
        %v1450 = vrot.slane %v776, 1
        %v1451 = vrot.slane %v777, 1
        %v1452 = vrot.slane %v778, 1
        %v1453 = vrot.slane %v779, 1
        %v1454 = vrot.slane %v780, 1
        %v1455 = vrot.slane %v781, 1
        %v1456 = vrot.slane %v782, 1
        %v1457 = vrot.slane %v783, 1
        %v1458 = vrot.slane %v784, 1
        %v1459 = vrot.slane %v785, 1
        %v1460 = vrot.slane %v786, 1
        %v1461 = vrot.slane %v787, 1
        %v1462 = vrot.slane %v788, 1
        %v1463 = vrot.slane %v789, 1
        %v1464 = vrot.slane %v790, 1
        %v1465 = vrot.slane %v791, 1
        %v1466 = vrot.slane %v792, 1
        %vm1467 = vcmp.lt.s32.totalorder %v794, 7
        %v1468 = vsel %vm1467, %v1465, %v1466
        %v1469 = vsel %vm1467, %v1464, %v1465
        %v1470 = vsel %vm1467, %v1463, %v1464
        %v1471 = vsel %vm1467, %v1462, %v1463
        %v1472 = vsel %vm1467, %v1461, %v1462
        %v1473 = vsel %vm1467, %v1460, %v1461
        %v1474 = vsel %vm1467, %v1459, %v1460
        %v1475 = vsel %vm1467, %v1458, %v1459
        %v1476 = vsel %vm1467, %v1457, %v1458
        %v1477 = vsel %vm1467, %v1456, %v1457
        %v1478 = vsel %vm1467, %v1455, %v1456
        %v1479 = vsel %vm1467, %v1454, %v1455
        %v1480 = vsel %vm1467, %v1453, %v1454
        %v1481 = vsel %vm1467, %v1452, %v1453
        %v1482 = vsel %vm1467, %v1451, %v1452
        %v1483 = vsel %vm1467, %v1450, %v1451
        %v1484 = vsel %vm1467, %v1449, %v1450
        %v1485 = vsel %vm1467, %v1448, %v1449
        %v1486 = vsel %vm1467, %v1447, %v1448
        %v1487 = vsel %vm1467, %v1446, %v1447
        %v1488 = vsel %vm1467, %v1445, %v1446
        %v1489 = vsel %vm1467, %v1444, %v1445
        %v1490 = vsel %vm1467, %v1443, %v1444
        %v1491 = vsel %vm1467, %v1442, %v1443
        %v1492 = vsel %vm1467, %v1441, %v1442
        %v1493 = vsel %vm1467, %v1440, %v1441
        %v1494 = vsel %vm1467, %v1439, %v1440
        %v1495 = vsel %vm1467, %v1438, %v1439
        %v1496 = vsel %vm1467, %v1437, %v1438
        %v1497 = vsel %vm1467, %v1436, %v1437
        %v1498 = vsel %vm1467, %v1435, %v1436
        %v1499 = vsel %vm1467, %v1466, %v1435
        %v1500 = vsel %vm1403, 1, 0
        %v1501 = vsel %vm1404, 1, 0
        %v1502 = vsel %vm1405, 1, 0
        %v1503 = vsel %vm1406, 1, 0
        %v1504 = vsel %vm1407, 1, 0
        %v1505 = vsel %vm1408, 1, 0
        %v1506 = vsel %vm1409, 1, 0
        %v1507 = vsel %vm1410, 1, 0
        %v1508 = vsel %vm1411, 1, 0
        %v1509 = vsel %vm1412, 1, 0
        %v1510 = vsel %vm1413, 1, 0
        %v1511 = vsel %vm1414, 1, 0
        %v1512 = vsel %vm1415, 1, 0
        %v1513 = vsel %vm1416, 1, 0
        %v1514 = vsel %vm1417, 1, 0
        %v1515 = vsel %vm1418, 1, 0
        %v1516 = vsel %vm1419, 1, 0
        %v1517 = vsel %vm1420, 1, 0
        %v1518 = vsel %vm1421, 1, 0
        %v1519 = vsel %vm1422, 1, 0
        %v1520 = vsel %vm1423, 1, 0
        %v1521 = vsel %vm1424, 1, 0
        %v1522 = vsel %vm1425, 1, 0
        %v1523 = vsel %vm1426, 1, 0
        %v1524 = vsel %vm1427, 1, 0
        %v1525 = vsel %vm1428, 1, 0
        %v1526 = vsel %vm1429, 1, 0
        %v1527 = vsel %vm1430, 1, 0
        %v1528 = vsel %vm1431, 1, 0
        %v1529 = vsel %vm1432, 1, 0
        %v1530 = vsel %vm1433, 1, 0
        %v1531 = vsel %vm1434, 1, 0
        %vm1532 = vcmp.eq.s32.totalorder %v1500, 1
        %vm1533 = vcmp.eq.s32.totalorder %v1501, 1
        %vm1534 = vcmp.eq.s32.totalorder %v1502, 1
        %vm1535 = vcmp.eq.s32.totalorder %v1503, 1
        %vm1536 = vcmp.eq.s32.totalorder %v1504, 1
        %vm1537 = vcmp.eq.s32.totalorder %v1505, 1
        %vm1538 = vcmp.eq.s32.totalorder %v1506, 1
        %vm1539 = vcmp.eq.s32.totalorder %v1507, 1
        %vm1540 = vcmp.eq.s32.totalorder %v1508, 1
        %vm1541 = vcmp.eq.s32.totalorder %v1509, 1
        %vm1542 = vcmp.eq.s32.totalorder %v1510, 1
        %vm1543 = vcmp.eq.s32.totalorder %v1511, 1
        %vm1544 = vcmp.eq.s32.totalorder %v1512, 1
        %vm1545 = vcmp.eq.s32.totalorder %v1513, 1
        %vm1546 = vcmp.eq.s32.totalorder %v1514, 1
        %vm1547 = vcmp.eq.s32.totalorder %v1515, 1
        %vm1548 = vcmp.eq.s32.totalorder %v1516, 1
        %vm1549 = vcmp.eq.s32.totalorder %v1517, 1
        %vm1550 = vcmp.eq.s32.totalorder %v1518, 1
        %vm1551 = vcmp.eq.s32.totalorder %v1519, 1
        %vm1552 = vcmp.eq.s32.totalorder %v1520, 1
        %vm1553 = vcmp.eq.s32.totalorder %v1521, 1
        %vm1554 = vcmp.eq.s32.totalorder %v1522, 1
        %vm1555 = vcmp.eq.s32.totalorder %v1523, 1
        %vm1556 = vcmp.eq.s32.totalorder %v1524, 1
        %vm1557 = vcmp.eq.s32.totalorder %v1525, 1
        %vm1558 = vcmp.eq.s32.totalorder %v1526, 1
        %vm1559 = vcmp.eq.s32.totalorder %v1527, 1
        %vm1560 = vcmp.eq.s32.totalorder %v1528, 1
        %vm1561 = vcmp.eq.s32.totalorder %v1529, 1
        %vm1562 = vcmp.eq.s32.totalorder %v1530, 1
        %vm1563 = vcmp.eq.s32.totalorder %v1531, 1
        %v1564 = vsel %vm1532, %v1498, 0.0
        %v1565 = vsel %vm1533, %v1497, 0.0
        %v1566 = vsel %vm1534, %v1496, 0.0
        %v1567 = vsel %vm1535, %v1495, 0.0
        %v1568 = vsel %vm1536, %v1494, 0.0
        %v1569 = vsel %vm1537, %v1493, 0.0
        %v1570 = vsel %vm1538, %v1492, 0.0
        %v1571 = vsel %vm1539, %v1491, 0.0
        %v1572 = vsel %vm1540, %v1490, 0.0
        %v1573 = vsel %vm1541, %v1489, 0.0
        %v1574 = vsel %vm1542, %v1488, 0.0
        %v1575 = vsel %vm1543, %v1487, 0.0
        %v1576 = vsel %vm1544, %v1486, 0.0
        %v1577 = vsel %vm1545, %v1485, 0.0
        %v1578 = vsel %vm1546, %v1484, 0.0
        %v1579 = vsel %vm1547, %v1483, 0.0
        %v1580 = vsel %vm1548, %v1482, 0.0
        %v1581 = vsel %vm1549, %v1481, 0.0
        %v1582 = vsel %vm1550, %v1480, 0.0
        %v1583 = vsel %vm1551, %v1479, 0.0
        %v1584 = vsel %vm1552, %v1478, 0.0
        %v1585 = vsel %vm1553, %v1477, 0.0
        %v1586 = vsel %vm1554, %v1476, 0.0
        %v1587 = vsel %vm1555, %v1475, 0.0
        %v1588 = vsel %vm1556, %v1474, 0.0
        %v1589 = vsel %vm1557, %v1473, 0.0
        %v1590 = vsel %vm1558, %v1472, 0.0
        %v1591 = vsel %vm1559, %v1471, 0.0
        %v1592 = vsel %vm1560, %v1470, 0.0
        %v1593 = vsel %vm1561, %v1469, 0.0
        %v1594 = vsel %vm1562, %v1468, 0.0
        %v1595 = vsel %vm1563, %v1499, 0.0
        %1596 = vst [vmem:[#allocation2] sm:$0xff] 0
        %1597 = vst [vmem:[#allocation2 + $0x8] sm:$0xf] 0
        %1598 = vst [vmem:[#allocation2 + $0xc] sm:$0xff] 0
        %1599 = vst [vmem:[#allocation2 + $0x14] sm:$0xf] 0
        %1600 = vst [vmem:[#allocation2 + $0x198] sm:$0xff] 0
        %1601 = vst [vmem:[#allocation2 + $0x1a0] sm:$0xf] 0
        %1602 = vst [vmem:[#allocation2 + $0x1a4] sm:$0xff] 0
        %1603 = vst [vmem:[#allocation2 + $0x1ac] sm:$0xf] 0
        %v1604 = vpack.c.bf16 %v1372, %v1371
        %v1605 = vpack.c.bf16 %v762, %v761
        %v1606 = vpack.c.bf16 %v1565, %v1564
        %v1607 = vpack.c.bf16 %v1374, %v1373
        %v1608 = vpack.c.bf16 %v764, %v763
        %v1609 = vpack.c.bf16 %v1567, %v1566
        %v1610 = vpack.c.bf16 %v1376, %v1375
        %v1611 = vpack.c.bf16 %v766, %v765
        %v1612 = vpack.c.bf16 %v1569, %v1568
        %v1613 = vpack.c.bf16 %v1378, %v1377
        %v1614 = vpack.c.bf16 %v768, %v767
        %v1615 = vpack.c.bf16 %v1571, %v1570
        %v1616 = vpack.c.bf16 %v1380, %v1379
        %v1617 = vpack.c.bf16 %v770, %v769
        %v1618 = vpack.c.bf16 %v1573, %v1572
        %v1619 = vpack.c.bf16 %v1382, %v1381
        %v1620 = vpack.c.bf16 %v772, %v771
        %v1621 = vpack.c.bf16 %v1575, %v1574
        %v1622 = vpack.c.bf16 %v1384, %v1383
        %v1623 = vpack.c.bf16 %v774, %v773
        %v1624 = vpack.c.bf16 %v1577, %v1576
        %v1625 = vpack.c.bf16 %v1386, %v1385
        %v1626 = vpack.c.bf16 %v776, %v775
        %v1627 = vpack.c.bf16 %v1579, %v1578
        %v1628 = vpack.c.bf16 %v1388, %v1387
        %v1629 = vpack.c.bf16 %v778, %v777
        %v1630 = vpack.c.bf16 %v1581, %v1580
        %v1631 = vpack.c.bf16 %v1390, %v1389
        %v1632 = vpack.c.bf16 %v780, %v779
        %v1633 = vpack.c.bf16 %v1583, %v1582
        %v1634 = vpack.c.bf16 %v1392, %v1391
        %v1635 = vpack.c.bf16 %v782, %v781
        %v1636 = vpack.c.bf16 %v1585, %v1584
        %v1637 = vpack.c.bf16 %v1394, %v1393
        %v1638 = vpack.c.bf16 %v784, %v783
        %v1639 = vpack.c.bf16 %v1587, %v1586
        %v1640 = vpack.c.bf16 %v1396, %v1395
        %v1641 = vpack.c.bf16 %v786, %v785
        %v1642 = vpack.c.bf16 %v1589, %v1588
        %v1643 = vpack.c.bf16 %v1398, %v1397
        %v1644 = vpack.c.bf16 %v788, %v787
        %v1645 = vpack.c.bf16 %v1591, %v1590
        %v1646 = vpack.c.bf16 %v1400, %v1399
        %v1647 = vpack.c.bf16 %v790, %v789
        %v1648 = vpack.c.bf16 %v1593, %v1592
        %v1649 = vpack.c.bf16 %v1402, %v1401
        %v1650 = vpack.c.bf16 %v792, %v791
        %v1651 = vpack.c.bf16 %v1595, %v1594
        %v1700 = vunpack.c.l.b16 %v1604
        %v1701 = vunpack.c.l.b16 %v1605
        %v1702 = vunpack.c.l.b16 %v1606
        %v1703 = vunpack.c.h.b16 %v1604
        %v1704 = vunpack.c.h.b16 %v1605
        %v1705 = vunpack.c.h.b16 %v1606
        %v1706 = vunpack.c.l.b16 %v1607
        %v1707 = vunpack.c.l.b16 %v1608
        %v1708 = vunpack.c.l.b16 %v1609
        %v1709 = vunpack.c.h.b16 %v1607
        %v1710 = vunpack.c.h.b16 %v1608
        %v1711 = vunpack.c.h.b16 %v1609
        %v1712 = vunpack.c.l.b16 %v1610
        %v1713 = vunpack.c.l.b16 %v1611
        %v1714 = vunpack.c.l.b16 %v1612
        %v1715 = vunpack.c.h.b16 %v1610
        %v1716 = vunpack.c.h.b16 %v1611
        %v1717 = vunpack.c.h.b16 %v1612
        %v1718 = vunpack.c.l.b16 %v1613
        %v1719 = vunpack.c.l.b16 %v1614
        %v1720 = vunpack.c.l.b16 %v1615
        %v1721 = vunpack.c.h.b16 %v1613
        %v1722 = vunpack.c.h.b16 %v1614
        %v1723 = vunpack.c.h.b16 %v1615
        %v1724 = vunpack.c.l.b16 %v1616
        %v1725 = vunpack.c.l.b16 %v1617
        %v1726 = vunpack.c.l.b16 %v1618
        %v1727 = vunpack.c.h.b16 %v1616
        %v1728 = vunpack.c.h.b16 %v1617
        %v1729 = vunpack.c.h.b16 %v1618
        %v1730 = vunpack.c.l.b16 %v1619
        %v1731 = vunpack.c.l.b16 %v1620
        %v1732 = vunpack.c.l.b16 %v1621
        %v1733 = vunpack.c.h.b16 %v1619
        %v1734 = vunpack.c.h.b16 %v1620
        %v1735 = vunpack.c.h.b16 %v1621
        %v1736 = vunpack.c.l.b16 %v1622
        %v1737 = vunpack.c.l.b16 %v1623
        %v1738 = vunpack.c.l.b16 %v1624
        %v1739 = vunpack.c.h.b16 %v1622
        %v1740 = vunpack.c.h.b16 %v1623
        %v1741 = vunpack.c.h.b16 %v1624
        %v1742 = vunpack.c.l.b16 %v1625
        %v1743 = vunpack.c.l.b16 %v1626
        %v1744 = vunpack.c.l.b16 %v1627
        %v1745 = vunpack.c.h.b16 %v1625
        %v1746 = vunpack.c.h.b16 %v1626
        %v1747 = vunpack.c.h.b16 %v1627
        %v1748 = vunpack.c.l.b16 %v1628
        %v1749 = vunpack.c.l.b16 %v1629
        %v1750 = vunpack.c.l.b16 %v1630
        %v1751 = vunpack.c.h.b16 %v1628
        %v1752 = vunpack.c.h.b16 %v1629
        %v1753 = vunpack.c.h.b16 %v1630
        %v1754 = vunpack.c.l.b16 %v1631
        %v1755 = vunpack.c.l.b16 %v1632
        %v1756 = vunpack.c.l.b16 %v1633
        %v1757 = vunpack.c.h.b16 %v1631
        %v1758 = vunpack.c.h.b16 %v1632
        %v1759 = vunpack.c.h.b16 %v1633
        %v1760 = vunpack.c.l.b16 %v1634
        %v1761 = vunpack.c.l.b16 %v1635
        %v1762 = vunpack.c.l.b16 %v1636
        %v1763 = vunpack.c.h.b16 %v1634
        %v1764 = vunpack.c.h.b16 %v1635
        %v1765 = vunpack.c.h.b16 %v1636
        %v1766 = vunpack.c.l.b16 %v1637
        %v1767 = vunpack.c.l.b16 %v1638
        %v1768 = vunpack.c.l.b16 %v1639
        %v1769 = vunpack.c.h.b16 %v1637
        %v1770 = vunpack.c.h.b16 %v1638
        %v1771 = vunpack.c.h.b16 %v1639
        %v1772 = vunpack.c.l.b16 %v1640
        %v1773 = vunpack.c.l.b16 %v1641
        %v1774 = vunpack.c.l.b16 %v1642
        %v1775 = vunpack.c.h.b16 %v1640
        %v1776 = vunpack.c.h.b16 %v1641
        %v1777 = vunpack.c.h.b16 %v1642
        %v1778 = vunpack.c.l.b16 %v1643
        %v1779 = vunpack.c.l.b16 %v1644
        %v1780 = vunpack.c.l.b16 %v1645
        %v1781 = vunpack.c.h.b16 %v1643
        %v1782 = vunpack.c.h.b16 %v1644
        %v1783 = vunpack.c.h.b16 %v1645
        %v1784 = vunpack.c.l.b16 %v1646
        %v1785 = vunpack.c.l.b16 %v1647
        %v1786 = vunpack.c.l.b16 %v1648
        %v1787 = vunpack.c.h.b16 %v1646
        %v1788 = vunpack.c.h.b16 %v1647
        %v1789 = vunpack.c.h.b16 %v1648
        %v1790 = vunpack.c.l.b16 %v1649
        %v1791 = vunpack.c.l.b16 %v1650
        %v1792 = vunpack.c.l.b16 %v1651
        %v1793 = vunpack.c.h.b16 %v1649
        %v1794 = vunpack.c.h.b16 %v1650
        %v1795 = vunpack.c.h.b16 %v1651
        %v1796 = vpack.c.b16 %v1701, %v1700
        %v1797 = vpack.c.b16 %v1702, %v1702
        %v1798 = vpack.c.b16 %v1704, %v1703
        %v1799 = vpack.c.b16 %v1705, %v1705
        %v1800 = vpack.c.b16 %v1707, %v1706
        %v1801 = vpack.c.b16 %v1708, %v1708
        %v1802 = vpack.c.b16 %v1710, %v1709
        %v1803 = vpack.c.b16 %v1711, %v1711
        %v1804 = vpack.c.b16 %v1713, %v1712
        %v1805 = vpack.c.b16 %v1714, %v1714
        %v1806 = vpack.c.b16 %v1716, %v1715
        %v1807 = vpack.c.b16 %v1717, %v1717
        %v1808 = vpack.c.b16 %v1719, %v1718
        %v1809 = vpack.c.b16 %v1720, %v1720
        %v1810 = vpack.c.b16 %v1722, %v1721
        %v1811 = vpack.c.b16 %v1723, %v1723
        %v1812 = vpack.c.b16 %v1725, %v1724
        %v1813 = vpack.c.b16 %v1726, %v1726
        %v1814 = vpack.c.b16 %v1728, %v1727
        %v1815 = vpack.c.b16 %v1729, %v1729
        %v1816 = vpack.c.b16 %v1731, %v1730
        %v1817 = vpack.c.b16 %v1732, %v1732
        %v1818 = vpack.c.b16 %v1734, %v1733
        %v1819 = vpack.c.b16 %v1735, %v1735
        %v1820 = vpack.c.b16 %v1737, %v1736
        %v1821 = vpack.c.b16 %v1738, %v1738
        %v1822 = vpack.c.b16 %v1740, %v1739
        %v1823 = vpack.c.b16 %v1741, %v1741
        %v1824 = vpack.c.b16 %v1743, %v1742
        %v1825 = vpack.c.b16 %v1744, %v1744
        %v1826 = vpack.c.b16 %v1746, %v1745
        %v1827 = vpack.c.b16 %v1747, %v1747
        %v1828 = vpack.c.b16 %v1749, %v1748
        %v1829 = vpack.c.b16 %v1750, %v1750
        %v1830 = vpack.c.b16 %v1752, %v1751
        %v1831 = vpack.c.b16 %v1753, %v1753
        %v1832 = vpack.c.b16 %v1755, %v1754
        %v1833 = vpack.c.b16 %v1756, %v1756
        %v1834 = vpack.c.b16 %v1758, %v1757
        %v1835 = vpack.c.b16 %v1759, %v1759
        %v1836 = vpack.c.b16 %v1761, %v1760
        %v1837 = vpack.c.b16 %v1762, %v1762
        %v1838 = vpack.c.b16 %v1764, %v1763
        %v1839 = vpack.c.b16 %v1765, %v1765
        %v1840 = vpack.c.b16 %v1767, %v1766
        %v1841 = vpack.c.b16 %v1768, %v1768
        %v1842 = vpack.c.b16 %v1770, %v1769
        %v1843 = vpack.c.b16 %v1771, %v1771
        %v1844 = vpack.c.b16 %v1773, %v1772
        %v1845 = vpack.c.b16 %v1774, %v1774
        %v1846 = vpack.c.b16 %v1776, %v1775
        %v1847 = vpack.c.b16 %v1777, %v1777
        %v1848 = vpack.c.b16 %v1779, %v1778
        %v1849 = vpack.c.b16 %v1780, %v1780
        %v1850 = vpack.c.b16 %v1782, %v1781
        %v1851 = vpack.c.b16 %v1783, %v1783
        %v1852 = vpack.c.b16 %v1785, %v1784
        %v1853 = vpack.c.b16 %v1786, %v1786
        %v1854 = vpack.c.b16 %v1788, %v1787
        %v1855 = vpack.c.b16 %v1789, %v1789
        %v1856 = vpack.c.b16 %v1791, %v1790
        %v1857 = vpack.c.b16 %v1792, %v1792
        %v1858 = vpack.c.b16 %v1794, %v1793
        %v1859 = vpack.c.b16 %v1795, %v1795
        %1924 = vst [vmem:[#allocation2 + $0x18] sm:$0xff] %v1796
        %1925 = vst [vmem:[#allocation2 + $0x20] sm:$0xf] %v1797
        %1926 = vst [vmem:[#allocation2 + $0x24] sm:$0xff] %v1798
        %1927 = vst [vmem:[#allocation2 + $0x2c] sm:$0xf] %v1799
        %1928 = vst [vmem:[#allocation2 + $0x30] sm:$0xff] %v1800
        %1929 = vst [vmem:[#allocation2 + $0x38] sm:$0xf] %v1801
        %1930 = vst [vmem:[#allocation2 + $0x3c] sm:$0xff] %v1802
        %1931 = vst [vmem:[#allocation2 + $0x44] sm:$0xf] %v1803
        %1932 = vst [vmem:[#allocation2 + $0x48] sm:$0xff] %v1804
        %1933 = vst [vmem:[#allocation2 + $0x50] sm:$0xf] %v1805
        %1934 = vst [vmem:[#allocation2 + $0x54] sm:$0xff] %v1806
        %1935 = vst [vmem:[#allocation2 + $0x5c] sm:$0xf] %v1807
        %1936 = vst [vmem:[#allocation2 + $0x60] sm:$0xff] %v1808
        %1937 = vst [vmem:[#allocation2 + $0x68] sm:$0xf] %v1809
        %1938 = vst [vmem:[#allocation2 + $0x6c] sm:$0xff] %v1810
        %1939 = vst [vmem:[#allocation2 + $0x74] sm:$0xf] %v1811
        %1940 = vst [vmem:[#allocation2 + $0x78] sm:$0xff] %v1812
        %1941 = vst [vmem:[#allocation2 + $0x80] sm:$0xf] %v1813
        %1942 = vst [vmem:[#allocation2 + $0x84] sm:$0xff] %v1814
        %1943 = vst [vmem:[#allocation2 + $0x8c] sm:$0xf] %v1815
        %1944 = vst [vmem:[#allocation2 + $0x90] sm:$0xff] %v1816
        %1945 = vst [vmem:[#allocation2 + $0x98] sm:$0xf] %v1817
        %1946 = vst [vmem:[#allocation2 + $0x9c] sm:$0xff] %v1818
        %1947 = vst [vmem:[#allocation2 + $0xa4] sm:$0xf] %v1819
        %1948 = vst [vmem:[#allocation2 + $0xa8] sm:$0xff] %v1820
        %1949 = vst [vmem:[#allocation2 + $0xb0] sm:$0xf] %v1821
        %1950 = vst [vmem:[#allocation2 + $0xb4] sm:$0xff] %v1822
        %1951 = vst [vmem:[#allocation2 + $0xbc] sm:$0xf] %v1823
        %1952 = vst [vmem:[#allocation2 + $0xc0] sm:$0xff] %v1824
        %1953 = vst [vmem:[#allocation2 + $0xc8] sm:$0xf] %v1825
        %1954 = vst [vmem:[#allocation2 + $0xcc] sm:$0xff] %v1826
        %1955 = vst [vmem:[#allocation2 + $0xd4] sm:$0xf] %v1827
        %1956 = vst [vmem:[#allocation2 + $0xd8] sm:$0xff] %v1828
        %1957 = vst [vmem:[#allocation2 + $0xe0] sm:$0xf] %v1829
        %1958 = vst [vmem:[#allocation2 + $0xe4] sm:$0xff] %v1830
        %1959 = vst [vmem:[#allocation2 + $0xec] sm:$0xf] %v1831
        %1960 = vst [vmem:[#allocation2 + $0xf0] sm:$0xff] %v1832
        %1961 = vst [vmem:[#allocation2 + $0xf8] sm:$0xf] %v1833
        %1962 = vst [vmem:[#allocation2 + $0xfc] sm:$0xff] %v1834
        %1963 = vst [vmem:[#allocation2 + $0x104] sm:$0xf] %v1835
        %1964 = vst [vmem:[#allocation2 + $0x108] sm:$0xff] %v1836
        %1965 = vst [vmem:[#allocation2 + $0x110] sm:$0xf] %v1837
        %1966 = vst [vmem:[#allocation2 + $0x114] sm:$0xff] %v1838
        %1967 = vst [vmem:[#allocation2 + $0x11c] sm:$0xf] %v1839
        %1968 = vst [vmem:[#allocation2 + $0x120] sm:$0xff] %v1840
        %1969 = vst [vmem:[#allocation2 + $0x128] sm:$0xf] %v1841
        %1970 = vst [vmem:[#allocation2 + $0x12c] sm:$0xff] %v1842
        %1971 = vst [vmem:[#allocation2 + $0x134] sm:$0xf] %v1843
        %1972 = vst [vmem:[#allocation2 + $0x138] sm:$0xff] %v1844
        %1973 = vst [vmem:[#allocation2 + $0x140] sm:$0xf] %v1845
        %1974 = vst [vmem:[#allocation2 + $0x144] sm:$0xff] %v1846
        %1975 = vst [vmem:[#allocation2 + $0x14c] sm:$0xf] %v1847
        %1976 = vst [vmem:[#allocation2 + $0x150] sm:$0xff] %v1848
        %1977 = vst [vmem:[#allocation2 + $0x158] sm:$0xf] %v1849
        %1978 = vst [vmem:[#allocation2 + $0x15c] sm:$0xff] %v1850
        %1979 = vst [vmem:[#allocation2 + $0x164] sm:$0xf] %v1851
        %1980 = vst [vmem:[#allocation2 + $0x168] sm:$0xff] %v1852
        %1981 = vst [vmem:[#allocation2 + $0x170] sm:$0xf] %v1853
        %1982 = vst [vmem:[#allocation2 + $0x174] sm:$0xff] %v1854
        %1983 = vst [vmem:[#allocation2 + $0x17c] sm:$0xf] %v1855
        %1984 = vst [vmem:[#allocation2 + $0x180] sm:$0xff] %v1856
        %1985 = vst [vmem:[#allocation2 + $0x188] sm:$0xf] %v1857
        %1986 = vst [vmem:[#allocation2 + $0x18c] sm:$0xff] %v1858
        %1987 = vst [vmem:[#allocation2 + $0x194] sm:$0xf] %v1859
        %v1988 = vld [vmem:[#allocation2] sm:$0xff]
        %v1989 = vld [vmem:[#allocation2 + $0x8] sm:$0xf]
        %v1990 = vld [vmem:[#allocation2 + $0xc] sm:$0xff]
        %v1991 = vld [vmem:[#allocation2 + $0x14] sm:$0xf]
        %v1992 = vld [vmem:[#allocation2 + $0x18] sm:$0xff]
        %v1993 = vld [vmem:[#allocation2 + $0x20] sm:$0xf]
        %v1994 = vld [vmem:[#allocation2 + $0x24] sm:$0xff]
        %v1995 = vld [vmem:[#allocation2 + $0x2c] sm:$0xf]
        %v1996 = vld [vmem:[#allocation2 + $0x30] sm:$0xff]
        %v1997 = vld [vmem:[#allocation2 + $0x38] sm:$0xf]
        %v1998 = vld [vmem:[#allocation2 + $0x3c] sm:$0xff]
        %v1999 = vld [vmem:[#allocation2 + $0x44] sm:$0xf]
        %v2000 = vld [vmem:[#allocation2 + $0x48] sm:$0xff]
        %v2001 = vld [vmem:[#allocation2 + $0x50] sm:$0xf]
        %v2002 = vld [vmem:[#allocation2 + $0x54] sm:$0xff]
        %v2003 = vld [vmem:[#allocation2 + $0x5c] sm:$0xf]
        %v2004 = vld [vmem:[#allocation2 + $0x60] sm:$0xff]
        %v2005 = vld [vmem:[#allocation2 + $0x68] sm:$0xf]
        %v2006 = vld [vmem:[#allocation2 + $0x6c] sm:$0xff]
        %v2007 = vld [vmem:[#allocation2 + $0x74] sm:$0xf]
        %v2008 = vld [vmem:[#allocation2 + $0x78] sm:$0xff]
        %v2009 = vld [vmem:[#allocation2 + $0x80] sm:$0xf]
        %v2010 = vld [vmem:[#allocation2 + $0x84] sm:$0xff]
        %v2011 = vld [vmem:[#allocation2 + $0x8c] sm:$0xf]
        %v2012 = vld [vmem:[#allocation2 + $0x90] sm:$0xff]
        %v2013 = vld [vmem:[#allocation2 + $0x98] sm:$0xf]
        %v2014 = vld [vmem:[#allocation2 + $0x9c] sm:$0xff]
        %v2015 = vld [vmem:[#allocation2 + $0xa4] sm:$0xf]
        %v2016 = vld [vmem:[#allocation2 + $0xa8] sm:$0xff]
        %v2017 = vld [vmem:[#allocation2 + $0xb0] sm:$0xf]
        %v2018 = vld [vmem:[#allocation2 + $0xb4] sm:$0xff]
        %v2019 = vld [vmem:[#allocation2 + $0xbc] sm:$0xf]
        %v2020 = vld [vmem:[#allocation2 + $0xc0] sm:$0xff]
        %v2021 = vld [vmem:[#allocation2 + $0xc8] sm:$0xf]
        %v2022 = vld [vmem:[#allocation2 + $0xcc] sm:$0xff]
        %v2023 = vld [vmem:[#allocation2 + $0xd4] sm:$0xf]
        %v2024 = vld [vmem:[#allocation2 + $0xd8] sm:$0xff]
        %v2025 = vld [vmem:[#allocation2 + $0xe0] sm:$0xf]
        %v2026 = vld [vmem:[#allocation2 + $0xe4] sm:$0xff]
        %v2027 = vld [vmem:[#allocation2 + $0xec] sm:$0xf]
        %v2028 = vld [vmem:[#allocation2 + $0xf0] sm:$0xff]
        %v2029 = vld [vmem:[#allocation2 + $0xf8] sm:$0xf]
        %v2030 = vld [vmem:[#allocation2 + $0xfc] sm:$0xff]
        %v2031 = vld [vmem:[#allocation2 + $0x104] sm:$0xf]
        %v2032 = vld [vmem:[#allocation2 + $0x108] sm:$0xff]
        %v2033 = vld [vmem:[#allocation2 + $0x110] sm:$0xf]
        %v2034 = vld [vmem:[#allocation2 + $0x114] sm:$0xff]
        %v2035 = vld [vmem:[#allocation2 + $0x11c] sm:$0xf]
        %v2036 = vld [vmem:[#allocation2 + $0x120] sm:$0xff]
        %v2037 = vld [vmem:[#allocation2 + $0x128] sm:$0xf]
        %v2038 = vld [vmem:[#allocation2 + $0x12c] sm:$0xff]
        %v2039 = vld [vmem:[#allocation2 + $0x134] sm:$0xf]
        %v2040 = vld [vmem:[#allocation2 + $0x138] sm:$0xff]
        %v2041 = vld [vmem:[#allocation2 + $0x140] sm:$0xf]
        %v2042 = vld [vmem:[#allocation2 + $0x144] sm:$0xff]
        %v2043 = vld [vmem:[#allocation2 + $0x14c] sm:$0xf]
        %v2044 = vld [vmem:[#allocation2 + $0x150] sm:$0xff]
        %v2045 = vld [vmem:[#allocation2 + $0x158] sm:$0xf]
        %v2046 = vld [vmem:[#allocation2 + $0x15c] sm:$0xff]
        %v2047 = vld [vmem:[#allocation2 + $0x164] sm:$0xf]
        %v2048 = vld [vmem:[#allocation2 + $0x168] sm:$0xff]
        %v2049 = vld [vmem:[#allocation2 + $0x170] sm:$0xf]
        %v2050 = vld [vmem:[#allocation2 + $0x174] sm:$0xff]
        %v2051 = vld [vmem:[#allocation2 + $0x17c] sm:$0xf]
        %v2052 = vld [vmem:[#allocation8] sm:$0xf]
        %v2053 = vld [vmem:[#allocation8 + $0x4] sm:$0xf]
        %v2054 = vld [vmem:[#allocation8 + $0x8] sm:$0xf]
        %v2055 = vld [vmem:[#allocation8 + $0xc] sm:$0xf]
        %v2056 = vld [vmem:[#allocation8 + $0x10] sm:$0xf]
        %v2057 = vld [vmem:[#allocation8 + $0x14] sm:$0xf]
        %v2058 = vld [vmem:[#allocation8 + $0x18] sm:$0xf]
        %v2059 = vld [vmem:[#allocation8 + $0x1c] sm:$0xf]
        %v2060 = vld [vmem:[#allocation8 + $0x20] sm:$0xf]
        %v2061 = vld [vmem:[#allocation8 + $0x24] sm:$0xf]
        %v2062 = vld [vmem:[#allocation8 + $0x28] sm:$0xf]
        %v2063 = vld [vmem:[#allocation8 + $0x2c] sm:$0xf]
        %v2064 = vld [vmem:[#allocation8 + $0x30] sm:$0xf]
        %v2065 = vld [vmem:[#allocation8 + $0x34] sm:$0xf]
        %v2066 = vld [vmem:[#allocation8 + $0x38] sm:$0xf]
        %v2067 = vld [vmem:[#allocation8 + $0x3c] sm:$0xf]
        %v2068 = vld [vmem:[#allocation8 + $0x40] sm:$0xf]
        %v2069 = vld [vmem:[#allocation8 + $0x44] sm:$0xf]
        %v2070 = vld [vmem:[#allocation8 + $0x48] sm:$0xf]
        %v2071 = vld [vmem:[#allocation8 + $0x4c] sm:$0xf]
        %v2072 = vld [vmem:[#allocation8 + $0x50] sm:$0xf]
        %v2073 = vld [vmem:[#allocation8 + $0x54] sm:$0xf]
        %v2074 = vld [vmem:[#allocation8 + $0x58] sm:$0xf]
        %v2075 = vld [vmem:[#allocation8 + $0x5c] sm:$0xf]
        %v2076 = vld [vmem:[#allocation8 + $0x60] sm:$0xf]
        %v2077 = vld [vmem:[#allocation8 + $0x64] sm:$0xf]
        %v2078 = vld [vmem:[#allocation8 + $0x68] sm:$0xf]
        %v2079 = vld [vmem:[#allocation8 + $0x6c] sm:$0xf]
        %v2080 = vld [vmem:[#allocation8 + $0x70] sm:$0xf]
        %v2081 = vld [vmem:[#allocation8 + $0x74] sm:$0xf]
        %v2082 = vld [vmem:[#allocation8 + $0x78] sm:$0xf]
        %v2083 = vld [vmem:[#allocation8 + $0x7c] sm:$0xf]
        %v2084 = vld [vmem:[#allocation8 + $0x80] sm:$0xf]
        %v2085 = vld [vmem:[#allocation8 + $0x84] sm:$0xf]
        %v2086 = vld [vmem:[#allocation8 + $0x88] sm:$0xf]
        %v2087 = vld [vmem:[#allocation8 + $0x8c] sm:$0xf]
        %v2088 = vld [vmem:[#allocation8 + $0x90] sm:$0xf]
        %v2089 = vld [vmem:[#allocation8 + $0x94] sm:$0xf]
        %v2090 = vld [vmem:[#allocation8 + $0x98] sm:$0xf]
        %v2091 = vld [vmem:[#allocation8 + $0x9c] sm:$0xf]
        %v2092 = vld [vmem:[#allocation8 + $0xa0] sm:$0xf]
        %v2093 = vld [vmem:[#allocation8 + $0xa4] sm:$0xf]
        %v2094 = vld [vmem:[#allocation8 + $0xa8] sm:$0xf]
        %v2095 = vld [vmem:[#allocation8 + $0xac] sm:$0xf]
        %v2096 = vld [vmem:[#allocation8 + $0xb0] sm:$0xf]
        %v2097 = vld [vmem:[#allocation8 + $0xb4] sm:$0xf]
        %v2098 = vld [vmem:[#allocation8 + $0xb8] sm:$0xf]
        %v2099 = vld [vmem:[#allocation8 + $0xbc] sm:$0xf]
        %v2100 = vld [vmem:[#allocation2 + $0x180] sm:$0xff]
        %v2101 = vld [vmem:[#allocation2 + $0x188] sm:$0xf]
        %v2102 = vld [vmem:[#allocation2 + $0x18c] sm:$0xff]
        %v2103 = vld [vmem:[#allocation2 + $0x194] sm:$0xf]
        %s2104 = scalar_lea.vmem [#allocation8], 192
        %v2105 = vld [vmem:[%s2104] sm:$0xf]
        %v2106 = vld [vmem:[%s2104 + $0x4] sm:$0xf]
        %v2107 = vld [vmem:[%s2104 + $0x8] sm:$0xf]
        %v2108 = vld [vmem:[%s2104 + $0xc] sm:$0xf]
        %v2109 = vld [vmem:[%s2104 + $0x10] sm:$0xf]
        %v2110 = vld [vmem:[%s2104 + $0x14] sm:$0xf]
        %v2111 = vld [vmem:[%s2104 + $0x18] sm:$0xf]
        %v2112 = vld [vmem:[%s2104 + $0x1c] sm:$0xf]
        %v2113 = vld [vmem:[%s2104 + $0x20] sm:$0xf]
        %v2114 = vld [vmem:[%s2104 + $0x24] sm:$0xf]
        %v2115 = vld [vmem:[%s2104 + $0x28] sm:$0xf]
        %v2116 = vld [vmem:[%s2104 + $0x2c] sm:$0xf]
        %v2117 = vld [vmem:[%s2104 + $0x30] sm:$0xf]
        %v2118 = vld [vmem:[%s2104 + $0x34] sm:$0xf]
        %v2119 = vld [vmem:[%s2104 + $0x38] sm:$0xf]
        %v2120 = vld [vmem:[%s2104 + $0x3c] sm:$0xf]
        %v2121 = vld [vmem:[%s2104 + $0x40] sm:$0xf]
        %v2122 = vld [vmem:[%s2104 + $0x44] sm:$0xf]
        %v2123 = vld [vmem:[%s2104 + $0x48] sm:$0xf]
        %v2124 = vld [vmem:[%s2104 + $0x4c] sm:$0xf]
        %v2125 = vld [vmem:[%s2104 + $0x50] sm:$0xf]
        %v2126 = vld [vmem:[%s2104 + $0x54] sm:$0xf]
        %v2127 = vld [vmem:[%s2104 + $0x58] sm:$0xf]
        %v2128 = vld [vmem:[%s2104 + $0x5c] sm:$0xf]
        %v2129 = vld [vmem:[%s2104 + $0x60] sm:$0xf]
        %v2130 = vld [vmem:[%s2104 + $0x64] sm:$0xf]
        %v2131 = vld [vmem:[%s2104 + $0x68] sm:$0xf]
        %v2132 = vld [vmem:[%s2104 + $0x6c] sm:$0xf]
        %v2133 = vld [vmem:[%s2104 + $0x70] sm:$0xf]
        %v2134 = vld [vmem:[%s2104 + $0x74] sm:$0xf]
        %v2135 = vld [vmem:[%s2104 + $0x78] sm:$0xf]
        %v2136 = vld [vmem:[%s2104 + $0x7c] sm:$0xf]
        %v2137 = vld [vmem:[%s2104 + $0x80] sm:$0xf]
        %v2138 = vld [vmem:[%s2104 + $0x84] sm:$0xf]
        %v2139 = vld [vmem:[%s2104 + $0x88] sm:$0xf]
        %v2140 = vld [vmem:[%s2104 + $0x8c] sm:$0xf]
        %v2141 = vld [vmem:[%s2104 + $0x90] sm:$0xf]
        %v2142 = vld [vmem:[%s2104 + $0x94] sm:$0xf]
        %v2143 = vld [vmem:[%s2104 + $0x98] sm:$0xf]
        %v2144 = vld [vmem:[%s2104 + $0x9c] sm:$0xf]
        %v2145 = vld [vmem:[%s2104 + $0xa0] sm:$0xf]
        %v2146 = vld [vmem:[%s2104 + $0xa4] sm:$0xf]
        %v2147 = vld [vmem:[%s2104 + $0xa8] sm:$0xf]
        %v2148 = vld [vmem:[%s2104 + $0xac] sm:$0xf]
        %v2149 = vld [vmem:[%s2104 + $0xb0] sm:$0xf]
        %v2150 = vld [vmem:[%s2104 + $0xb4] sm:$0xf]
        %v2151 = vld [vmem:[%s2104 + $0xb8] sm:$0xf]
        %v2152 = vld [vmem:[%s2104 + $0xbc] sm:$0xf]
        %v2217 = vunpack.c.l.b16 %v1992
        %v2218 = vunpack.c.h.b16 %v1992
        %v2219 = vunpack.c.l.b16 %v1993
        %v2220 = vunpack.c.l.b16 %v1994
        %v2221 = vunpack.c.h.b16 %v1994
        %v2222 = vunpack.c.l.b16 %v1995
        %v2223 = vunpack.c.l.b16 %v1996
        %v2224 = vunpack.c.h.b16 %v1996
        %v2225 = vunpack.c.l.b16 %v1997
        %v2226 = vunpack.c.l.b16 %v1998
        %v2227 = vunpack.c.h.b16 %v1998
        %v2228 = vunpack.c.l.b16 %v1999
        %v2229 = vunpack.c.l.b16 %v2000
        %v2230 = vunpack.c.h.b16 %v2000
        %v2231 = vunpack.c.l.b16 %v2001
        %v2232 = vunpack.c.l.b16 %v2002
        %v2233 = vunpack.c.h.b16 %v2002
        %v2234 = vunpack.c.l.b16 %v2003
        %v2235 = vunpack.c.l.b16 %v2004
        %v2236 = vunpack.c.h.b16 %v2004
        %v2237 = vunpack.c.l.b16 %v2005
        %v2238 = vunpack.c.l.b16 %v2006
        %v2239 = vunpack.c.h.b16 %v2006
        %v2240 = vunpack.c.l.b16 %v2007
        %v2241 = vunpack.c.l.b16 %v2008
        %v2242 = vunpack.c.h.b16 %v2008
        %v2243 = vunpack.c.l.b16 %v2009
        %v2244 = vunpack.c.l.b16 %v2010
        %v2245 = vunpack.c.h.b16 %v2010
        %v2246 = vunpack.c.l.b16 %v2011
        %v2247 = vunpack.c.l.b16 %v2012
        %v2248 = vunpack.c.h.b16 %v2012
        %v2249 = vunpack.c.l.b16 %v2013
        %v2250 = vunpack.c.l.b16 %v2014
        %v2251 = vunpack.c.h.b16 %v2014
        %v2252 = vunpack.c.l.b16 %v2015
        %v2253 = vunpack.c.l.b16 %v2016
        %v2254 = vunpack.c.h.b16 %v2016
        %v2255 = vunpack.c.l.b16 %v2017
        %v2256 = vunpack.c.l.b16 %v2018
        %v2257 = vunpack.c.h.b16 %v2018
        %v2258 = vunpack.c.l.b16 %v2019
        %v2259 = vunpack.c.l.b16 %v2020
        %v2260 = vunpack.c.h.b16 %v2020
        %v2261 = vunpack.c.l.b16 %v2021
        %v2262 = vunpack.c.l.b16 %v2022
        %v2263 = vunpack.c.h.b16 %v2022
        %v2264 = vunpack.c.l.b16 %v2023
        %v2265 = vunpack.c.l.b16 %v2024
        %v2266 = vunpack.c.h.b16 %v2024
        %v2267 = vunpack.c.l.b16 %v2025
        %v2268 = vunpack.c.l.b16 %v2026
        %v2269 = vunpack.c.h.b16 %v2026
        %v2270 = vunpack.c.l.b16 %v2027
        %v2271 = vunpack.c.l.b16 %v2028
        %v2272 = vunpack.c.h.b16 %v2028
        %v2273 = vunpack.c.l.b16 %v2029
        %v2274 = vunpack.c.l.b16 %v2030
        %v2275 = vunpack.c.h.b16 %v2030
        %v2276 = vunpack.c.l.b16 %v2031
        %v2277 = vunpack.c.l.b16 %v2032
        %v2278 = vunpack.c.h.b16 %v2032
        %v2279 = vunpack.c.l.b16 %v2033
        %v2280 = vunpack.c.l.b16 %v2034
        %v2281 = vunpack.c.h.b16 %v2034
        %v2282 = vunpack.c.l.b16 %v2035
        %v2283 = vunpack.c.l.b16 %v2036
        %v2284 = vunpack.c.h.b16 %v2036
        %v2285 = vunpack.c.l.b16 %v2037
        %v2286 = vunpack.c.l.b16 %v2038
        %v2287 = vunpack.c.h.b16 %v2038
        %v2288 = vunpack.c.l.b16 %v2039
        %v2289 = vunpack.c.l.b16 %v2040
        %v2290 = vunpack.c.h.b16 %v2040
        %v2291 = vunpack.c.l.b16 %v2041
        %v2292 = vunpack.c.l.b16 %v2042
        %v2293 = vunpack.c.h.b16 %v2042
        %v2294 = vunpack.c.l.b16 %v2043
        %v2295 = vunpack.c.l.b16 %v2044
        %v2296 = vunpack.c.h.b16 %v2044
        %v2297 = vunpack.c.l.b16 %v2045
        %v2298 = vunpack.c.l.b16 %v2046
        %v2299 = vunpack.c.h.b16 %v2046
        %v2300 = vunpack.c.l.b16 %v2047
        %v2301 = vunpack.c.l.b16 %v2048
        %v2302 = vunpack.c.h.b16 %v2048
        %v2303 = vunpack.c.l.b16 %v2049
        %v2304 = vunpack.c.l.b16 %v2050
        %v2305 = vunpack.c.h.b16 %v2050
        %v2306 = vunpack.c.l.b16 %v2051
        %v2307 = vunpack.c.l.b16 %v2100
        %v2308 = vunpack.c.h.b16 %v2100
        %v2309 = vunpack.c.l.b16 %v2101
        %v2310 = vunpack.c.l.b16 %v2102
        %v2311 = vunpack.c.h.b16 %v2102
        %v2312 = vunpack.c.l.b16 %v2103
        %v2313 = vpack.c.b16 %v2220, %v2217
        %v2314 = vpack.c.b16 %v2221, %v2218
        %v2315 = vpack.c.b16 %v2222, %v2219
        %v2316 = vpack.c.b16 %v2226, %v2223
        %v2317 = vpack.c.b16 %v2227, %v2224
        %v2318 = vpack.c.b16 %v2228, %v2225
        %v2319 = vpack.c.b16 %v2232, %v2229
        %v2320 = vpack.c.b16 %v2233, %v2230
        %v2321 = vpack.c.b16 %v2234, %v2231
        %v2322 = vpack.c.b16 %v2238, %v2235
        %v2323 = vpack.c.b16 %v2239, %v2236
        %v2324 = vpack.c.b16 %v2240, %v2237
        %v2325 = vpack.c.b16 %v2244, %v2241
        %v2326 = vpack.c.b16 %v2245, %v2242
        %v2327 = vpack.c.b16 %v2246, %v2243
        %v2328 = vpack.c.b16 %v2250, %v2247
        %v2329 = vpack.c.b16 %v2251, %v2248
        %v2330 = vpack.c.b16 %v2252, %v2249
        %v2331 = vpack.c.b16 %v2256, %v2253
        %v2332 = vpack.c.b16 %v2257, %v2254
        %v2333 = vpack.c.b16 %v2258, %v2255
        %v2334 = vpack.c.b16 %v2262, %v2259
        %v2335 = vpack.c.b16 %v2263, %v2260
        %v2336 = vpack.c.b16 %v2264, %v2261
        %v2337 = vpack.c.b16 %v2268, %v2265
        %v2338 = vpack.c.b16 %v2269, %v2266
        %v2339 = vpack.c.b16 %v2270, %v2267
        %v2340 = vpack.c.b16 %v2274, %v2271
        %v2341 = vpack.c.b16 %v2275, %v2272
        %v2342 = vpack.c.b16 %v2276, %v2273
        %v2343 = vpack.c.b16 %v2280, %v2277
        %v2344 = vpack.c.b16 %v2281, %v2278
        %v2345 = vpack.c.b16 %v2282, %v2279
        %v2346 = vpack.c.b16 %v2286, %v2283
        %v2347 = vpack.c.b16 %v2287, %v2284
        %v2348 = vpack.c.b16 %v2288, %v2285
        %v2349 = vpack.c.b16 %v2292, %v2289
        %v2350 = vpack.c.b16 %v2293, %v2290
        %v2351 = vpack.c.b16 %v2294, %v2291
        %v2352 = vpack.c.b16 %v2298, %v2295
        %v2353 = vpack.c.b16 %v2299, %v2296
        %v2354 = vpack.c.b16 %v2300, %v2297
        %v2355 = vpack.c.b16 %v2304, %v2301
        %v2356 = vpack.c.b16 %v2305, %v2302
        %v2357 = vpack.c.b16 %v2306, %v2303
        %v2358 = vpack.c.b16 %v2310, %v2307
        %v2359 = vpack.c.b16 %v2311, %v2308
        %v2360 = vpack.c.b16 %v2312, %v2309
        %v2457 = vunpack.c.l.b16 %v2105
        %v2458 = vunpack.c.l.b16 %v2106
        %v2459 = vunpack.c.l.b16 %v2107
        %v2460 = vunpack.c.l.b16 %v2108
        %v2461 = vunpack.c.l.b16 %v2109
        %v2462 = vunpack.c.l.b16 %v2110
        %v2463 = vunpack.c.l.b16 %v2111
        %v2464 = vunpack.c.l.b16 %v2112
        %v2465 = vunpack.c.l.b16 %v2113
        %v2466 = vunpack.c.l.b16 %v2114
        %v2467 = vunpack.c.l.b16 %v2115
        %v2468 = vunpack.c.l.b16 %v2116
        %v2469 = vunpack.c.l.b16 %v2117
        %v2470 = vunpack.c.l.b16 %v2118
        %v2471 = vunpack.c.l.b16 %v2119
        %v2472 = vunpack.c.l.b16 %v2120
        %v2473 = vunpack.c.l.b16 %v2121
        %v2474 = vunpack.c.l.b16 %v2122
        %v2475 = vunpack.c.l.b16 %v2123
        %v2476 = vunpack.c.l.b16 %v2124
        %v2477 = vunpack.c.l.b16 %v2125
        %v2478 = vunpack.c.l.b16 %v2126
        %v2479 = vunpack.c.l.b16 %v2127
        %v2480 = vunpack.c.l.b16 %v2128
        %v2481 = vunpack.c.l.b16 %v2129
        %v2482 = vunpack.c.l.b16 %v2130
        %v2483 = vunpack.c.l.b16 %v2131
        %v2484 = vunpack.c.l.b16 %v2132
        %v2485 = vunpack.c.l.b16 %v2133
        %v2486 = vunpack.c.l.b16 %v2134
        %v2487 = vunpack.c.l.b16 %v2135
        %v2488 = vunpack.c.l.b16 %v2136
        %v2489 = vunpack.c.l.b16 %v2137
        %v2490 = vunpack.c.l.b16 %v2138
        %v2491 = vunpack.c.l.b16 %v2139
        %v2492 = vunpack.c.l.b16 %v2140
        %v2493 = vunpack.c.l.b16 %v2141
        %v2494 = vunpack.c.l.b16 %v2142
        %v2495 = vunpack.c.l.b16 %v2143
        %v2496 = vunpack.c.l.b16 %v2144
        %v2497 = vunpack.c.l.b16 %v2145
        %v2498 = vunpack.c.l.b16 %v2146
        %v2499 = vunpack.c.l.b16 %v2147
        %v2500 = vunpack.c.l.b16 %v2148
        %v2501 = vunpack.c.l.b16 %v2149
        %v2502 = vunpack.c.l.b16 %v2150
        %v2503 = vunpack.c.l.b16 %v2151
        %v2504 = vunpack.c.l.b16 %v2152
        %v2505 = vpack.c.b16 %v2458, %v2457
        %v2506 = vpack.c.b16 %v2460, %v2459
        %v2507 = vpack.c.b16 %v2462, %v2461
        %v2508 = vpack.c.b16 %v2464, %v2463
        %v2509 = vpack.c.b16 %v2466, %v2465
        %v2510 = vpack.c.b16 %v2468, %v2467
        %v2511 = vpack.c.b16 %v2470, %v2469
        %v2512 = vpack.c.b16 %v2472, %v2471
        %v2513 = vpack.c.b16 %v2474, %v2473
        %v2514 = vpack.c.b16 %v2476, %v2475
        %v2515 = vpack.c.b16 %v2478, %v2477
        %v2516 = vpack.c.b16 %v2480, %v2479
        %v2517 = vpack.c.b16 %v2482, %v2481
        %v2518 = vpack.c.b16 %v2484, %v2483
        %v2519 = vpack.c.b16 %v2486, %v2485
        %v2520 = vpack.c.b16 %v2488, %v2487
        %v2521 = vpack.c.b16 %v2490, %v2489
        %v2522 = vpack.c.b16 %v2492, %v2491
        %v2523 = vpack.c.b16 %v2494, %v2493
        %v2524 = vpack.c.b16 %v2496, %v2495
        %v2525 = vpack.c.b16 %v2498, %v2497
        %v2526 = vpack.c.b16 %v2500, %v2499
        %v2527 = vpack.c.b16 %v2502, %v2501
        %v2528 = vpack.c.b16 %v2504, %v2503
        %2553 = vmatprep.subr.bf16.mxu0 0
        %2554 = vmatpush1.bf16.msra.mxu0 %v2512
        %2555 = vmatprep.subr.bf16.mxu0 0
        %2556 = vmatpush1.bf16.msra.mxu0 %v2511
        %2557 = vmatprep.subr.bf16.mxu0 0
        %2558 = vmatpush1.bf16.msra.mxu0 %v2510
        %2559 = vmatprep.subr.bf16.mxu0 0
        %2560 = vmatpush1.bf16.msra.mxu0 %v2509
        %2561 = vmatprep.subr.bf16.mxu0 0
        %2562 = vmatpush1.bf16.msra.mxu0 %v2508
        %2563 = vmatprep.subr.bf16.mxu0 0
        %2564 = vmatpush1.bf16.msra.mxu0 %v2507
        %2565 = vmatprep.subr.bf16.mxu0 0
        %2566 = vmatpush1.bf16.msra.mxu0 %v2506
        %2567 = vmatprep.subr.bf16.mxu0 0
        %2568 = vmatpush1.bf16.msra.mxu0 %v2505
        %2569 = vmatprep.subr.bf16.mxu0 0
        %2570 = vmatpush2.bf16.msra.mxu0 %v2520
        %2571 = vmatprep.subr.bf16.mxu0 0
        %2572 = vmatpush2.bf16.msra.mxu0 %v2519
        %2573 = vmatprep.subr.bf16.mxu0 0
        %2574 = vmatpush2.bf16.msra.mxu0 %v2518
        %2575 = vmatprep.subr.bf16.mxu0 0
        %2576 = vmatpush2.bf16.msra.mxu0 %v2517
        %2577 = vmatprep.subr.bf16.mxu0 0
        %2578 = vmatpush2.bf16.msra.mxu0 %v2516
        %2579 = vmatprep.subr.bf16.mxu0 0
        %2580 = vmatpush2.bf16.msra.mxu0 %v2515
        %2581 = vmatprep.subr.bf16.mxu0 0
        %2582 = vmatpush2.bf16.msra.mxu0 %v2514
        %2583 = vmatprep.subr.bf16.mxu0 0
        %2584 = vmatpush2.bf16.msra.mxu0 %v2513
        %2585 = vmatprep.mubr.bf16.mxu0 %v2314
        %2586 = vmatmul.mubr.bf16.gmra.mxu0 %v2313
        %v2587 = vpop.f32.mrf.mxu0
        %v2588 = vadd.f32 0.0, %v2587
        %v2589 = vpop.f32.mrf.mxu0
        %v2590 = vpop.f32.mrf.mxu0
        %v2591 = vadd.f32 0.0, %v2590
        %v2592 = vpop.f32.mrf.mxu0
        %2593 = vmatprep.mubr.bf16.mxu0 %v2317
        %2594 = vmatmul.mubr.bf16.gmra.mxu0 %v2316
        %v2595 = vpop.f32.mrf.mxu0
        %v2596 = vadd.f32 0.0, %v2595
        %v2597 = vpop.f32.mrf.mxu0
        %v2598 = vpop.f32.mrf.mxu0
        %v2599 = vadd.f32 0.0, %v2598
        %v2600 = vpop.f32.mrf.mxu0
        %2601 = vmatprep.mubr.bf16.mxu0 %v2320
        %2602 = vmatmul.mubr.bf16.gmra.mxu0 %v2319
        %v2603 = vpop.f32.mrf.mxu0
        %v2604 = vadd.f32 0.0, %v2603
        %v2605 = vpop.f32.mrf.mxu0
        %v2606 = vpop.f32.mrf.mxu0
        %v2607 = vadd.f32 0.0, %v2606
        %v2608 = vpop.f32.mrf.mxu0
        %2609 = vmatprep.mubr.bf16.mxu0 %v2323
        %2610 = vmatmul.mubr.bf16.gmra.mxu0 %v2322
        %v2611 = vpop.f32.mrf.mxu0
        %v2612 = vadd.f32 0.0, %v2611
        %v2613 = vpop.f32.mrf.mxu0
        %v2614 = vpop.f32.mrf.mxu0
        %v2615 = vadd.f32 0.0, %v2614
        %v2616 = vpop.f32.mrf.mxu0
        %2617 = vmatprep.mubr.bf16.mxu0 %v2326
        %2618 = vmatmul.mubr.bf16.gmra.mxu0 %v2325
        %v2619 = vpop.f32.mrf.mxu0
        %v2620 = vadd.f32 0.0, %v2619
        %v2621 = vpop.f32.mrf.mxu0
        %v2622 = vpop.f32.mrf.mxu0
        %v2623 = vadd.f32 0.0, %v2622
        %v2624 = vpop.f32.mrf.mxu0
        %2625 = vmatprep.mubr.bf16.mxu0 %v2329
        %2626 = vmatmul.mubr.bf16.gmra.mxu0 %v2328
        %v2627 = vpop.f32.mrf.mxu0
        %v2628 = vadd.f32 0.0, %v2627
        %v2629 = vpop.f32.mrf.mxu0
        %v2630 = vpop.f32.mrf.mxu0
        %v2631 = vadd.f32 0.0, %v2630
        %v2632 = vpop.f32.mrf.mxu0
        %2633 = vmatprep.mubr.bf16.mxu0 %v2332
        %2634 = vmatmul.mubr.bf16.gmra.mxu0 %v2331
        %v2635 = vpop.f32.mrf.mxu0
        %v2636 = vadd.f32 0.0, %v2635
        %v2637 = vpop.f32.mrf.mxu0
        %v2638 = vpop.f32.mrf.mxu0
        %v2639 = vadd.f32 0.0, %v2638
        %v2640 = vpop.f32.mrf.mxu0
        %2641 = vmatprep.mubr.bf16.mxu0 %v2335
        %2642 = vmatmul.mubr.bf16.gmra.mxu0 %v2334
        %v2643 = vpop.f32.mrf.mxu0
        %v2644 = vadd.f32 0.0, %v2643
        %v2645 = vpop.f32.mrf.mxu0
        %v2646 = vpop.f32.mrf.mxu0
        %v2647 = vadd.f32 0.0, %v2646
        %v2648 = vpop.f32.mrf.mxu0
        %2649 = vmatprep.mubr.bf16.mxu0 %v2338
        %2650 = vmatmul.mubr.bf16.gmra.mxu0 %v2337
        %v2651 = vpop.f32.mrf.mxu0
        %v2652 = vadd.f32 0.0, %v2651
        %v2653 = vpop.f32.mrf.mxu0
        %v2654 = vpop.f32.mrf.mxu0
        %v2655 = vadd.f32 0.0, %v2654
        %v2656 = vpop.f32.mrf.mxu0
        %2657 = vmatprep.mubr.bf16.mxu0 %v2341
        %2658 = vmatmul.mubr.bf16.gmra.mxu0 %v2340
        %v2659 = vpop.f32.mrf.mxu0
        %v2660 = vadd.f32 0.0, %v2659
        %v2661 = vpop.f32.mrf.mxu0
        %v2662 = vpop.f32.mrf.mxu0
        %v2663 = vadd.f32 0.0, %v2662
        %v2664 = vpop.f32.mrf.mxu0
        %2665 = vmatprep.mubr.bf16.mxu0 %v2344
        %2666 = vmatmul.mubr.bf16.gmra.mxu0 %v2343
        %v2667 = vpop.f32.mrf.mxu0
        %v2668 = vadd.f32 0.0, %v2667
        %v2669 = vpop.f32.mrf.mxu0
        %v2670 = vpop.f32.mrf.mxu0
        %v2671 = vadd.f32 0.0, %v2670
        %v2672 = vpop.f32.mrf.mxu0
        %2673 = vmatprep.mubr.bf16.mxu0 %v2347
        %2674 = vmatmul.mubr.bf16.gmra.mxu0 %v2346
        %v2675 = vpop.f32.mrf.mxu0
        %v2676 = vadd.f32 0.0, %v2675
        %v2677 = vpop.f32.mrf.mxu0
        %v2678 = vpop.f32.mrf.mxu0
        %v2679 = vadd.f32 0.0, %v2678
        %v2680 = vpop.f32.mrf.mxu0
        %2681 = vmatprep.mubr.bf16.mxu0 %v2350
        %2682 = vmatmul.mubr.bf16.gmra.mxu0 %v2349
        %v2683 = vpop.f32.mrf.mxu0
        %v2684 = vadd.f32 0.0, %v2683
        %v2685 = vpop.f32.mrf.mxu0
        %v2686 = vpop.f32.mrf.mxu0
        %v2687 = vadd.f32 0.0, %v2686
        %v2688 = vpop.f32.mrf.mxu0
        %2689 = vmatprep.mubr.bf16.mxu0 %v2353
        %2690 = vmatmul.mubr.bf16.gmra.mxu0 %v2352
        %v2691 = vpop.f32.mrf.mxu0
        %v2692 = vadd.f32 0.0, %v2691
        %v2693 = vpop.f32.mrf.mxu0
        %v2694 = vpop.f32.mrf.mxu0
        %v2695 = vadd.f32 0.0, %v2694
        %v2696 = vpop.f32.mrf.mxu0
        %2697 = vmatprep.mubr.bf16.mxu0 %v2356
        %2698 = vmatmul.mubr.bf16.gmra.mxu0 %v2355
        %v2699 = vpop.f32.mrf.mxu0
        %v2700 = vadd.f32 0.0, %v2699
        %v2701 = vpop.f32.mrf.mxu0
        %v2702 = vpop.f32.mrf.mxu0
        %v2703 = vadd.f32 0.0, %v2702
        %v2704 = vpop.f32.mrf.mxu0
        %2705 = vmatprep.mubr.bf16.mxu0 %v2359
        %2706 = vmatmul.mubr.bf16.gmra.mxu0 %v2358
        %v2707 = vpop.f32.mrf.mxu0
        %v2708 = vadd.f32 0.0, %v2707
        %v2709 = vpop.f32.mrf.mxu0
        %v2710 = vpop.f32.mrf.mxu0
        %v2711 = vadd.f32 0.0, %v2710
        %v2712 = vpop.f32.mrf.mxu0
        %2713 = vdwg.mxu0
        %2714 = vmatprep.subr.bf16.mxu0 0
        %2715 = vmatpush1.bf16.msra.mxu0 %v2528
        %2716 = vmatprep.subr.bf16.mxu0 0
        %2717 = vmatpush1.bf16.msra.mxu0 %v2527
        %2718 = vmatprep.subr.bf16.mxu0 0
        %2719 = vmatpush1.bf16.msra.mxu0 %v2526
        %2720 = vmatprep.subr.bf16.mxu0 0
        %2721 = vmatpush1.bf16.msra.mxu0 %v2525
        %2722 = vmatprep.subr.bf16.mxu0 0
        %2723 = vmatpush1.bf16.msra.mxu0 %v2524
        %2724 = vmatprep.subr.bf16.mxu0 0
        %2725 = vmatpush1.bf16.msra.mxu0 %v2523
        %2726 = vmatprep.subr.bf16.mxu0 0
        %2727 = vmatpush1.bf16.msra.mxu0 %v2522
        %2728 = vmatprep.subr.bf16.mxu0 0
        %2729 = vmatpush1.bf16.msra.mxu0 %v2521
        %2730 = vmatprep.subr.bf16.mxu0 0
        %2731 = vmatpush2.bf16.msra.mxu0 0
        %2732 = vmatprep.subr.bf16.mxu0 0
        %2733 = vmatpush2.bf16.msra.mxu0 0
        %2734 = vmatprep.subr.bf16.mxu0 0
        %2735 = vmatpush2.bf16.msra.mxu0 0
        %2736 = vmatprep.subr.bf16.mxu0 0
        %2737 = vmatpush2.bf16.msra.mxu0 0
        %2738 = vmatprep.subr.bf16.mxu0 0
        %2739 = vmatpush2.bf16.msra.mxu0 0
        %2740 = vmatprep.subr.bf16.mxu0 0
        %2741 = vmatpush2.bf16.msra.mxu0 0
        %2742 = vmatprep.subr.bf16.mxu0 0
        %2743 = vmatpush2.bf16.msra.mxu0 0
        %2744 = vmatprep.subr.bf16.mxu0 0
        %2745 = vmatpush2.bf16.msra.mxu0 0
        %2746 = vmatprep.mubr.bf16.mxu0 0
        %2747 = vmatmul.mubr.bf16.gmra.mxu0 %v2315
        %v2748 = vpop.f32.mrf.mxu0
        %v2749 = vadd.f32 %v2588, %v2748
        %v2750 = vpop.f32.mrf.mxu0
        %v2751 = vpop.f32.mrf.mxu0
        %v2752 = vadd.f32 %v2591, %v2751
        %v2753 = vpop.f32.mrf.mxu0
        %2754 = vmatprep.mubr.bf16.mxu0 0
        %2755 = vmatmul.mubr.bf16.gmra.mxu0 %v2318
        %v2756 = vpop.f32.mrf.mxu0
        %v2757 = vadd.f32 %v2596, %v2756
        %v2758 = vpop.f32.mrf.mxu0
        %v2759 = vpop.f32.mrf.mxu0
        %v2760 = vadd.f32 %v2599, %v2759
        %v2761 = vpop.f32.mrf.mxu0
        %2762 = vmatprep.mubr.bf16.mxu0 0
        %2763 = vmatmul.mubr.bf16.gmra.mxu0 %v2321
        %v2764 = vpop.f32.mrf.mxu0
        %v2765 = vadd.f32 %v2604, %v2764
        %v2766 = vpop.f32.mrf.mxu0
        %v2767 = vpop.f32.mrf.mxu0
        %v2768 = vadd.f32 %v2607, %v2767
        %v2769 = vpop.f32.mrf.mxu0
        %2770 = vmatprep.mubr.bf16.mxu0 0
        %2771 = vmatmul.mubr.bf16.gmra.mxu0 %v2324
        %v2772 = vpop.f32.mrf.mxu0
        %v2773 = vadd.f32 %v2612, %v2772
        %v2774 = vpop.f32.mrf.mxu0
        %v2775 = vpop.f32.mrf.mxu0
        %v2776 = vadd.f32 %v2615, %v2775
        %v2777 = vpop.f32.mrf.mxu0
        %2778 = vmatprep.mubr.bf16.mxu0 0
        %2779 = vmatmul.mubr.bf16.gmra.mxu0 %v2327
        %v2780 = vpop.f32.mrf.mxu0
        %v2781 = vadd.f32 %v2620, %v2780
        %v2782 = vpop.f32.mrf.mxu0
        %v2783 = vpop.f32.mrf.mxu0
        %v2784 = vadd.f32 %v2623, %v2783
        %v2785 = vpop.f32.mrf.mxu0
        %2786 = vmatprep.mubr.bf16.mxu0 0
        %2787 = vmatmul.mubr.bf16.gmra.mxu0 %v2330
        %v2788 = vpop.f32.mrf.mxu0
        %v2789 = vadd.f32 %v2628, %v2788
        %v2790 = vpop.f32.mrf.mxu0
        %v2791 = vpop.f32.mrf.mxu0
        %v2792 = vadd.f32 %v2631, %v2791
        %v2793 = vpop.f32.mrf.mxu0
        %2794 = vmatprep.mubr.bf16.mxu0 0
        %2795 = vmatmul.mubr.bf16.gmra.mxu0 %v2333
        %v2796 = vpop.f32.mrf.mxu0
        %v2797 = vadd.f32 %v2636, %v2796
        %v2798 = vpop.f32.mrf.mxu0
        %v2799 = vpop.f32.mrf.mxu0
        %v2800 = vadd.f32 %v2639, %v2799
        %v2801 = vpop.f32.mrf.mxu0
        %2802 = vmatprep.mubr.bf16.mxu0 0
        %2803 = vmatmul.mubr.bf16.gmra.mxu0 %v2336
        %v2804 = vpop.f32.mrf.mxu0
        %v2805 = vadd.f32 %v2644, %v2804
        %v2806 = vpop.f32.mrf.mxu0
        %v2807 = vpop.f32.mrf.mxu0
        %v2808 = vadd.f32 %v2647, %v2807
        %v2809 = vpop.f32.mrf.mxu0
        %2810 = vmatprep.mubr.bf16.mxu0 0
        %2811 = vmatmul.mubr.bf16.gmra.mxu0 %v2339
        %v2812 = vpop.f32.mrf.mxu0
        %v2813 = vadd.f32 %v2652, %v2812
        %v2814 = vpop.f32.mrf.mxu0
        %v2815 = vpop.f32.mrf.mxu0
        %v2816 = vadd.f32 %v2655, %v2815
        %v2817 = vpop.f32.mrf.mxu0
        %2818 = vmatprep.mubr.bf16.mxu0 0
        %2819 = vmatmul.mubr.bf16.gmra.mxu0 %v2342
        %v2820 = vpop.f32.mrf.mxu0
        %v2821 = vadd.f32 %v2660, %v2820
        %v2822 = vpop.f32.mrf.mxu0
        %v2823 = vpop.f32.mrf.mxu0
        %v2824 = vadd.f32 %v2663, %v2823
        %v2825 = vpop.f32.mrf.mxu0
        %2826 = vmatprep.mubr.bf16.mxu0 0
        %2827 = vmatmul.mubr.bf16.gmra.mxu0 %v2345
        %v2828 = vpop.f32.mrf.mxu0
        %v2829 = vadd.f32 %v2668, %v2828
        %v2830 = vpop.f32.mrf.mxu0
        %v2831 = vpop.f32.mrf.mxu0
        %v2832 = vadd.f32 %v2671, %v2831
        %v2833 = vpop.f32.mrf.mxu0
        %2834 = vmatprep.mubr.bf16.mxu0 0
        %2835 = vmatmul.mubr.bf16.gmra.mxu0 %v2348
        %v2836 = vpop.f32.mrf.mxu0
        %v2837 = vadd.f32 %v2676, %v2836
        %v2838 = vpop.f32.mrf.mxu0
        %v2839 = vpop.f32.mrf.mxu0
        %v2840 = vadd.f32 %v2679, %v2839
        %v2841 = vpop.f32.mrf.mxu0
        %2842 = vmatprep.mubr.bf16.mxu0 0
        %2843 = vmatmul.mubr.bf16.gmra.mxu0 %v2351
        %v2844 = vpop.f32.mrf.mxu0
        %v2845 = vadd.f32 %v2684, %v2844
        %v2846 = vpop.f32.mrf.mxu0
        %v2847 = vpop.f32.mrf.mxu0
        %v2848 = vadd.f32 %v2687, %v2847
        %v2849 = vpop.f32.mrf.mxu0
        %2850 = vmatprep.mubr.bf16.mxu0 0
        %2851 = vmatmul.mubr.bf16.gmra.mxu0 %v2354
        %v2852 = vpop.f32.mrf.mxu0
        %v2853 = vadd.f32 %v2692, %v2852
        %v2854 = vpop.f32.mrf.mxu0
        %v2855 = vpop.f32.mrf.mxu0
        %v2856 = vadd.f32 %v2695, %v2855
        %v2857 = vpop.f32.mrf.mxu0
        %2858 = vmatprep.mubr.bf16.mxu0 0
        %2859 = vmatmul.mubr.bf16.gmra.mxu0 %v2357
        %v2860 = vpop.f32.mrf.mxu0
        %v2861 = vadd.f32 %v2700, %v2860
        %v2862 = vpop.f32.mrf.mxu0
        %v2863 = vpop.f32.mrf.mxu0
        %v2864 = vadd.f32 %v2703, %v2863
        %v2865 = vpop.f32.mrf.mxu0
        %2866 = vmatprep.mubr.bf16.mxu0 0
        %2867 = vmatmul.mubr.bf16.gmra.mxu0 %v2360
        %v2868 = vpop.f32.mrf.mxu0
        %v2869 = vadd.f32 %v2708, %v2868
        %v2870 = vpop.f32.mrf.mxu0
        %v2871 = vpop.f32.mrf.mxu0
        %v2872 = vadd.f32 %v2711, %v2871
        %v2873 = vpop.f32.mrf.mxu0
        %2874 = vdwg.mxu0
        %v2879 = vunpack.c.l.b16 %v1988
        %v2880 = vunpack.c.h.b16 %v1988
        %v2881 = vunpack.c.l.b16 %v1989
        %v2882 = vunpack.c.l.b16 %v1990
        %v2883 = vunpack.c.h.b16 %v1990
        %v2884 = vunpack.c.l.b16 %v1991
        %v2885 = vpack.c.b16 %v2882, %v2879
        %v2886 = vpack.c.b16 %v2883, %v2880
        %v2887 = vpack.c.b16 %v2884, %v2881
        %v2939 = vunpack.c.l.b16 %v2052
        %v2940 = vunpack.c.l.b16 %v2053
        %v2941 = vunpack.c.l.b16 %v2054
        %v2942 = vunpack.c.l.b16 %v2055
        %v2943 = vunpack.c.l.b16 %v2056
        %v2944 = vunpack.c.l.b16 %v2057
        %v2945 = vunpack.c.l.b16 %v2058
        %v2946 = vunpack.c.l.b16 %v2059
        %v2947 = vunpack.c.l.b16 %v2060
        %v2948 = vunpack.c.l.b16 %v2061
        %v2949 = vunpack.c.l.b16 %v2062
        %v2950 = vunpack.c.l.b16 %v2063
        %v2951 = vunpack.c.l.b16 %v2064
        %v2952 = vunpack.c.l.b16 %v2065
        %v2953 = vunpack.c.l.b16 %v2066
        %v2954 = vunpack.c.l.b16 %v2067
        %v2955 = vunpack.c.l.b16 %v2068
        %v2956 = vunpack.c.l.b16 %v2069
        %v2957 = vunpack.c.l.b16 %v2070
        %v2958 = vunpack.c.l.b16 %v2071
        %v2959 = vunpack.c.l.b16 %v2072
        %v2960 = vunpack.c.l.b16 %v2073
        %v2961 = vunpack.c.l.b16 %v2074
        %v2962 = vunpack.c.l.b16 %v2075
        %v2963 = vunpack.c.l.b16 %v2076
        %v2964 = vunpack.c.l.b16 %v2077
        %v2965 = vunpack.c.l.b16 %v2078
        %v2966 = vunpack.c.l.b16 %v2079
        %v2967 = vunpack.c.l.b16 %v2080
        %v2968 = vunpack.c.l.b16 %v2081
        %v2969 = vunpack.c.l.b16 %v2082
        %v2970 = vunpack.c.l.b16 %v2083
        %v2971 = vunpack.c.l.b16 %v2084
        %v2972 = vunpack.c.l.b16 %v2085
        %v2973 = vunpack.c.l.b16 %v2086
        %v2974 = vunpack.c.l.b16 %v2087
        %v2975 = vunpack.c.l.b16 %v2088
        %v2976 = vunpack.c.l.b16 %v2089
        %v2977 = vunpack.c.l.b16 %v2090
        %v2978 = vunpack.c.l.b16 %v2091
        %v2979 = vunpack.c.l.b16 %v2092
        %v2980 = vunpack.c.l.b16 %v2093
        %v2981 = vunpack.c.l.b16 %v2094
        %v2982 = vunpack.c.l.b16 %v2095
        %v2983 = vunpack.c.l.b16 %v2096
        %v2984 = vunpack.c.l.b16 %v2097
        %v2985 = vunpack.c.l.b16 %v2098
        %v2986 = vunpack.c.l.b16 %v2099
        %v2987 = vpack.c.b16 %v2940, %v2939
        %v2988 = vpack.c.b16 %v2942, %v2941
        %v2989 = vpack.c.b16 %v2944, %v2943
        %v2990 = vpack.c.b16 %v2946, %v2945
        %v2991 = vpack.c.b16 %v2948, %v2947
        %v2992 = vpack.c.b16 %v2950, %v2949
        %v2993 = vpack.c.b16 %v2952, %v2951
        %v2994 = vpack.c.b16 %v2954, %v2953
        %v2995 = vpack.c.b16 %v2956, %v2955
        %v2996 = vpack.c.b16 %v2958, %v2957
        %v2997 = vpack.c.b16 %v2960, %v2959
        %v2998 = vpack.c.b16 %v2962, %v2961
        %v2999 = vpack.c.b16 %v2964, %v2963
        %v3000 = vpack.c.b16 %v2966, %v2965
        %v3001 = vpack.c.b16 %v2968, %v2967
        %v3002 = vpack.c.b16 %v2970, %v2969
        %v3003 = vpack.c.b16 %v2972, %v2971
        %v3004 = vpack.c.b16 %v2974, %v2973
        %v3005 = vpack.c.b16 %v2976, %v2975
        %v3006 = vpack.c.b16 %v2978, %v2977
        %v3007 = vpack.c.b16 %v2980, %v2979
        %v3008 = vpack.c.b16 %v2982, %v2981
        %v3009 = vpack.c.b16 %v2984, %v2983
        %v3010 = vpack.c.b16 %v2986, %v2985
        %3035 = vmatprep.subr.bf16.mxu0 0
        %3036 = vmatpush1.bf16.msra.mxu0 %v2994
        %3037 = vmatprep.subr.bf16.mxu0 0
        %3038 = vmatpush1.bf16.msra.mxu0 %v2993
        %3039 = vmatprep.subr.bf16.mxu0 0
        %3040 = vmatpush1.bf16.msra.mxu0 %v2992
        %3041 = vmatprep.subr.bf16.mxu0 0
        %3042 = vmatpush1.bf16.msra.mxu0 %v2991
        %3043 = vmatprep.subr.bf16.mxu0 0
        %3044 = vmatpush1.bf16.msra.mxu0 %v2990
        %3045 = vmatprep.subr.bf16.mxu0 0
        %3046 = vmatpush1.bf16.msra.mxu0 %v2989
        %3047 = vmatprep.subr.bf16.mxu0 0
        %3048 = vmatpush1.bf16.msra.mxu0 %v2988
        %3049 = vmatprep.subr.bf16.mxu0 0
        %3050 = vmatpush1.bf16.msra.mxu0 %v2987
        %3051 = vmatprep.subr.bf16.mxu0 0
        %3052 = vmatpush2.bf16.msra.mxu0 %v3002
        %3053 = vmatprep.subr.bf16.mxu0 0
        %3054 = vmatpush2.bf16.msra.mxu0 %v3001
        %3055 = vmatprep.subr.bf16.mxu0 0
        %3056 = vmatpush2.bf16.msra.mxu0 %v3000
        %3057 = vmatprep.subr.bf16.mxu0 0
        %3058 = vmatpush2.bf16.msra.mxu0 %v2999
        %3059 = vmatprep.subr.bf16.mxu0 0
        %3060 = vmatpush2.bf16.msra.mxu0 %v2998
        %3061 = vmatprep.subr.bf16.mxu0 0
        %3062 = vmatpush2.bf16.msra.mxu0 %v2997
        %3063 = vmatprep.subr.bf16.mxu0 0
        %3064 = vmatpush2.bf16.msra.mxu0 %v2996
        %3065 = vmatprep.subr.bf16.mxu0 0
        %3066 = vmatpush2.bf16.msra.mxu0 %v2995
        %3067 = vmatprep.mubr.bf16.mxu0 %v2886
        %3068 = vmatmul.mubr.bf16.gmra.mxu0 %v2885
        %v3069 = vpop.f32.mrf.mxu0
        %v3070 = vadd.f32 %v2749, %v3069
        %v3071 = vpop.f32.mrf.mxu0
        %v3072 = vpop.f32.mrf.mxu0
        %v3073 = vadd.f32 %v2752, %v3072
        %v3074 = vpop.f32.mrf.mxu0
        %3075 = vmatprep.mubr.bf16.mxu0 %v2314
        %3076 = vmatmul.mubr.bf16.gmra.mxu0 %v2313
        %v3077 = vpop.f32.mrf.mxu0
        %v3078 = vadd.f32 %v2757, %v3077
        %v3079 = vpop.f32.mrf.mxu0
        %v3080 = vpop.f32.mrf.mxu0
        %v3081 = vadd.f32 %v2760, %v3080
        %v3082 = vpop.f32.mrf.mxu0
        %3083 = vmatprep.mubr.bf16.mxu0 %v2317
        %3084 = vmatmul.mubr.bf16.gmra.mxu0 %v2316
        %v3085 = vpop.f32.mrf.mxu0
        %v3086 = vadd.f32 %v2765, %v3085
        %v3087 = vpop.f32.mrf.mxu0
        %v3088 = vpop.f32.mrf.mxu0
        %v3089 = vadd.f32 %v2768, %v3088
        %v3090 = vpop.f32.mrf.mxu0
        %3091 = vmatprep.mubr.bf16.mxu0 %v2320
        %3092 = vmatmul.mubr.bf16.gmra.mxu0 %v2319
        %v3093 = vpop.f32.mrf.mxu0
        %v3094 = vadd.f32 %v2773, %v3093
        %v3095 = vpop.f32.mrf.mxu0
        %v3096 = vpop.f32.mrf.mxu0
        %v3097 = vadd.f32 %v2776, %v3096
        %v3098 = vpop.f32.mrf.mxu0
        %3099 = vmatprep.mubr.bf16.mxu0 %v2323
        %3100 = vmatmul.mubr.bf16.gmra.mxu0 %v2322
        %v3101 = vpop.f32.mrf.mxu0
        %v3102 = vadd.f32 %v2781, %v3101
        %v3103 = vpop.f32.mrf.mxu0
        %v3104 = vpop.f32.mrf.mxu0
        %v3105 = vadd.f32 %v2784, %v3104
        %v3106 = vpop.f32.mrf.mxu0
        %3107 = vmatprep.mubr.bf16.mxu0 %v2326
        %3108 = vmatmul.mubr.bf16.gmra.mxu0 %v2325
        %v3109 = vpop.f32.mrf.mxu0
        %v3110 = vadd.f32 %v2789, %v3109
        %v3111 = vpop.f32.mrf.mxu0
        %v3112 = vpop.f32.mrf.mxu0
        %v3113 = vadd.f32 %v2792, %v3112
        %v3114 = vpop.f32.mrf.mxu0
        %3115 = vmatprep.mubr.bf16.mxu0 %v2329
        %3116 = vmatmul.mubr.bf16.gmra.mxu0 %v2328
        %v3117 = vpop.f32.mrf.mxu0
        %v3118 = vadd.f32 %v2797, %v3117
        %v3119 = vpop.f32.mrf.mxu0
        %v3120 = vpop.f32.mrf.mxu0
        %v3121 = vadd.f32 %v2800, %v3120
        %v3122 = vpop.f32.mrf.mxu0
        %3123 = vmatprep.mubr.bf16.mxu0 %v2332
        %3124 = vmatmul.mubr.bf16.gmra.mxu0 %v2331
        %v3125 = vpop.f32.mrf.mxu0
        %v3126 = vadd.f32 %v2805, %v3125
        %v3127 = vpop.f32.mrf.mxu0
        %v3128 = vpop.f32.mrf.mxu0
        %v3129 = vadd.f32 %v2808, %v3128
        %v3130 = vpop.f32.mrf.mxu0
        %3131 = vmatprep.mubr.bf16.mxu0 %v2335
        %3132 = vmatmul.mubr.bf16.gmra.mxu0 %v2334
        %v3133 = vpop.f32.mrf.mxu0
        %v3134 = vadd.f32 %v2813, %v3133
        %v3135 = vpop.f32.mrf.mxu0
        %v3136 = vpop.f32.mrf.mxu0
        %v3137 = vadd.f32 %v2816, %v3136
        %v3138 = vpop.f32.mrf.mxu0
        %3139 = vmatprep.mubr.bf16.mxu0 %v2338
        %3140 = vmatmul.mubr.bf16.gmra.mxu0 %v2337
        %v3141 = vpop.f32.mrf.mxu0
        %v3142 = vadd.f32 %v2821, %v3141
        %v3143 = vpop.f32.mrf.mxu0
        %v3144 = vpop.f32.mrf.mxu0
        %v3145 = vadd.f32 %v2824, %v3144
        %v3146 = vpop.f32.mrf.mxu0
        %3147 = vmatprep.mubr.bf16.mxu0 %v2341
        %3148 = vmatmul.mubr.bf16.gmra.mxu0 %v2340
        %v3149 = vpop.f32.mrf.mxu0
        %v3150 = vadd.f32 %v2829, %v3149
        %v3151 = vpop.f32.mrf.mxu0
        %v3152 = vpop.f32.mrf.mxu0
        %v3153 = vadd.f32 %v2832, %v3152
        %v3154 = vpop.f32.mrf.mxu0
        %3155 = vmatprep.mubr.bf16.mxu0 %v2344
        %3156 = vmatmul.mubr.bf16.gmra.mxu0 %v2343
        %v3157 = vpop.f32.mrf.mxu0
        %v3158 = vadd.f32 %v2837, %v3157
        %v3159 = vpop.f32.mrf.mxu0
        %v3160 = vpop.f32.mrf.mxu0
        %v3161 = vadd.f32 %v2840, %v3160
        %v3162 = vpop.f32.mrf.mxu0
        %3163 = vmatprep.mubr.bf16.mxu0 %v2347
        %3164 = vmatmul.mubr.bf16.gmra.mxu0 %v2346
        %v3165 = vpop.f32.mrf.mxu0
        %v3166 = vadd.f32 %v2845, %v3165
        %v3167 = vpop.f32.mrf.mxu0
        %v3168 = vpop.f32.mrf.mxu0
        %v3169 = vadd.f32 %v2848, %v3168
        %v3170 = vpop.f32.mrf.mxu0
        %3171 = vmatprep.mubr.bf16.mxu0 %v2350
        %3172 = vmatmul.mubr.bf16.gmra.mxu0 %v2349
        %v3173 = vpop.f32.mrf.mxu0
        %v3174 = vadd.f32 %v2853, %v3173
        %v3175 = vpop.f32.mrf.mxu0
        %v3176 = vpop.f32.mrf.mxu0
        %v3177 = vadd.f32 %v2856, %v3176
        %v3178 = vpop.f32.mrf.mxu0
        %3179 = vmatprep.mubr.bf16.mxu0 %v2353
        %3180 = vmatmul.mubr.bf16.gmra.mxu0 %v2352
        %v3181 = vpop.f32.mrf.mxu0
        %v3182 = vadd.f32 %v2861, %v3181
        %v3183 = vpop.f32.mrf.mxu0
        %v3184 = vpop.f32.mrf.mxu0
        %v3185 = vadd.f32 %v2864, %v3184
        %v3186 = vpop.f32.mrf.mxu0
        %3187 = vmatprep.mubr.bf16.mxu0 %v2356
        %3188 = vmatmul.mubr.bf16.gmra.mxu0 %v2355
        %v3189 = vpop.f32.mrf.mxu0
        %v3190 = vadd.f32 %v2869, %v3189
        %v3191 = vpop.f32.mrf.mxu0
        %v3192 = vpop.f32.mrf.mxu0
        %v3193 = vadd.f32 %v2872, %v3192
        %v3194 = vpop.f32.mrf.mxu0
        %3195 = vdwg.mxu0
        %3196 = vmatprep.subr.bf16.mxu0 0
        %3197 = vmatpush1.bf16.msra.mxu0 %v3010
        %3198 = vmatprep.subr.bf16.mxu0 0
        %3199 = vmatpush1.bf16.msra.mxu0 %v3009
        %3200 = vmatprep.subr.bf16.mxu0 0
        %3201 = vmatpush1.bf16.msra.mxu0 %v3008
        %3202 = vmatprep.subr.bf16.mxu0 0
        %3203 = vmatpush1.bf16.msra.mxu0 %v3007
        %3204 = vmatprep.subr.bf16.mxu0 0
        %3205 = vmatpush1.bf16.msra.mxu0 %v3006
        %3206 = vmatprep.subr.bf16.mxu0 0
        %3207 = vmatpush1.bf16.msra.mxu0 %v3005
        %3208 = vmatprep.subr.bf16.mxu0 0
        %3209 = vmatpush1.bf16.msra.mxu0 %v3004
        %3210 = vmatprep.subr.bf16.mxu0 0
        %3211 = vmatpush1.bf16.msra.mxu0 %v3003
        %3212 = vmatprep.subr.bf16.mxu0 0
        %3213 = vmatpush2.bf16.msra.mxu0 0
        %3214 = vmatprep.subr.bf16.mxu0 0
        %3215 = vmatpush2.bf16.msra.mxu0 0
        %3216 = vmatprep.subr.bf16.mxu0 0
        %3217 = vmatpush2.bf16.msra.mxu0 0
        %3218 = vmatprep.subr.bf16.mxu0 0
        %3219 = vmatpush2.bf16.msra.mxu0 0
        %3220 = vmatprep.subr.bf16.mxu0 0
        %3221 = vmatpush2.bf16.msra.mxu0 0
        %3222 = vmatprep.subr.bf16.mxu0 0
        %3223 = vmatpush2.bf16.msra.mxu0 0
        %3224 = vmatprep.subr.bf16.mxu0 0
        %3225 = vmatpush2.bf16.msra.mxu0 0
        %3226 = vmatprep.subr.bf16.mxu0 0
        %3227 = vmatpush2.bf16.msra.mxu0 0
        %3228 = vmatprep.mubr.bf16.mxu0 0
        %3229 = vmatmul.mubr.bf16.gmra.mxu0 %v2887
        %v3230 = vpop.f32.mrf.mxu0
        %v3231 = vadd.f32 %v3070, %v3230
        %v3232 = vpop.f32.mrf.mxu0
        %v3233 = vpop.f32.mrf.mxu0
        %v3234 = vadd.f32 %v3073, %v3233
        %v3235 = vpop.f32.mrf.mxu0
        %3236 = vmatprep.mubr.bf16.mxu0 0
        %3237 = vmatmul.mubr.bf16.gmra.mxu0 %v2315
        %v3238 = vpop.f32.mrf.mxu0
        %v3239 = vadd.f32 %v3078, %v3238
        %v3240 = vpop.f32.mrf.mxu0
        %v3241 = vpop.f32.mrf.mxu0
        %v3242 = vadd.f32 %v3081, %v3241
        %v3243 = vpop.f32.mrf.mxu0
        %3244 = vmatprep.mubr.bf16.mxu0 0
        %3245 = vmatmul.mubr.bf16.gmra.mxu0 %v2318
        %v3246 = vpop.f32.mrf.mxu0
        %v3247 = vadd.f32 %v3086, %v3246
        %v3248 = vpop.f32.mrf.mxu0
        %v3249 = vpop.f32.mrf.mxu0
        %v3250 = vadd.f32 %v3089, %v3249
        %v3251 = vpop.f32.mrf.mxu0
        %3252 = vmatprep.mubr.bf16.mxu0 0
        %3253 = vmatmul.mubr.bf16.gmra.mxu0 %v2321
        %v3254 = vpop.f32.mrf.mxu0
        %v3255 = vadd.f32 %v3094, %v3254
        %v3256 = vpop.f32.mrf.mxu0
        %v3257 = vpop.f32.mrf.mxu0
        %v3258 = vadd.f32 %v3097, %v3257
        %v3259 = vpop.f32.mrf.mxu0
        %3260 = vmatprep.mubr.bf16.mxu0 0
        %3261 = vmatmul.mubr.bf16.gmra.mxu0 %v2324
        %v3262 = vpop.f32.mrf.mxu0
        %v3263 = vadd.f32 %v3102, %v3262
        %v3264 = vpop.f32.mrf.mxu0
        %v3265 = vpop.f32.mrf.mxu0
        %v3266 = vadd.f32 %v3105, %v3265
        %v3267 = vpop.f32.mrf.mxu0
        %3268 = vmatprep.mubr.bf16.mxu0 0
        %3269 = vmatmul.mubr.bf16.gmra.mxu0 %v2327
        %v3270 = vpop.f32.mrf.mxu0
        %v3271 = vadd.f32 %v3110, %v3270
        %v3272 = vpop.f32.mrf.mxu0
        %v3273 = vpop.f32.mrf.mxu0
        %v3274 = vadd.f32 %v3113, %v3273
        %v3275 = vpop.f32.mrf.mxu0
        %3276 = vmatprep.mubr.bf16.mxu0 0
        %3277 = vmatmul.mubr.bf16.gmra.mxu0 %v2330
        %v3278 = vpop.f32.mrf.mxu0
        %v3279 = vadd.f32 %v3118, %v3278
        %v3280 = vpop.f32.mrf.mxu0
        %v3281 = vpop.f32.mrf.mxu0
        %v3282 = vadd.f32 %v3121, %v3281
        %v3283 = vpop.f32.mrf.mxu0
        %3284 = vmatprep.mubr.bf16.mxu0 0
        %3285 = vmatmul.mubr.bf16.gmra.mxu0 %v2333
        %v3286 = vpop.f32.mrf.mxu0
        %v3287 = vadd.f32 %v3126, %v3286
        %v3288 = vpop.f32.mrf.mxu0
        %v3289 = vpop.f32.mrf.mxu0
        %v3290 = vadd.f32 %v3129, %v3289
        %v3291 = vpop.f32.mrf.mxu0
        %3292 = vmatprep.mubr.bf16.mxu0 0
        %3293 = vmatmul.mubr.bf16.gmra.mxu0 %v2336
        %v3294 = vpop.f32.mrf.mxu0
        %v3295 = vadd.f32 %v3134, %v3294
        %v3296 = vpop.f32.mrf.mxu0
        %v3297 = vpop.f32.mrf.mxu0
        %v3298 = vadd.f32 %v3137, %v3297
        %v3299 = vpop.f32.mrf.mxu0
        %3300 = vmatprep.mubr.bf16.mxu0 0
        %3301 = vmatmul.mubr.bf16.gmra.mxu0 %v2339
        %v3302 = vpop.f32.mrf.mxu0
        %v3303 = vadd.f32 %v3142, %v3302
        %v3304 = vpop.f32.mrf.mxu0
        %v3305 = vpop.f32.mrf.mxu0
        %v3306 = vadd.f32 %v3145, %v3305
        %v3307 = vpop.f32.mrf.mxu0
        %3308 = vmatprep.mubr.bf16.mxu0 0
        %3309 = vmatmul.mubr.bf16.gmra.mxu0 %v2342
        %v3310 = vpop.f32.mrf.mxu0
        %v3311 = vadd.f32 %v3150, %v3310
        %v3312 = vpop.f32.mrf.mxu0
        %v3313 = vpop.f32.mrf.mxu0
        %v3314 = vadd.f32 %v3153, %v3313
        %v3315 = vpop.f32.mrf.mxu0
        %3316 = vmatprep.mubr.bf16.mxu0 0
        %3317 = vmatmul.mubr.bf16.gmra.mxu0 %v2345
        %v3318 = vpop.f32.mrf.mxu0
        %v3319 = vadd.f32 %v3158, %v3318
        %v3320 = vpop.f32.mrf.mxu0
        %v3321 = vpop.f32.mrf.mxu0
        %v3322 = vadd.f32 %v3161, %v3321
        %v3323 = vpop.f32.mrf.mxu0
        %3324 = vmatprep.mubr.bf16.mxu0 0
        %3325 = vmatmul.mubr.bf16.gmra.mxu0 %v2348
        %v3326 = vpop.f32.mrf.mxu0
        %v3327 = vadd.f32 %v3166, %v3326
        %v3328 = vpop.f32.mrf.mxu0
        %v3329 = vpop.f32.mrf.mxu0
        %v3330 = vadd.f32 %v3169, %v3329
        %v3331 = vpop.f32.mrf.mxu0
        %3332 = vmatprep.mubr.bf16.mxu0 0
        %3333 = vmatmul.mubr.bf16.gmra.mxu0 %v2351
        %v3334 = vpop.f32.mrf.mxu0
        %v3335 = vadd.f32 %v3174, %v3334
        %v3336 = vpop.f32.mrf.mxu0
        %v3337 = vpop.f32.mrf.mxu0
        %v3338 = vadd.f32 %v3177, %v3337
        %v3339 = vpop.f32.mrf.mxu0
        %3340 = vmatprep.mubr.bf16.mxu0 0
        %3341 = vmatmul.mubr.bf16.gmra.mxu0 %v2354
        %v3342 = vpop.f32.mrf.mxu0
        %v3343 = vadd.f32 %v3182, %v3342
        %v3344 = vpop.f32.mrf.mxu0
        %v3345 = vpop.f32.mrf.mxu0
        %v3346 = vadd.f32 %v3185, %v3345
        %v3347 = vpop.f32.mrf.mxu0
        %3348 = vmatprep.mubr.bf16.mxu0 0
        %3349 = vmatmul.mubr.bf16.gmra.mxu0 %v2357
        %v3350 = vpop.f32.mrf.mxu0
        %v3351 = vadd.f32 %v3190, %v3350
        %v3352 = vpop.f32.mrf.mxu0
        %v3353 = vpop.f32.mrf.mxu0
        %v3354 = vadd.f32 %v3193, %v3353
        %v3355 = vpop.f32.mrf.mxu0
        %3356 = vdwg.mxu0
        %v3357 = vld [vmem:[#allocation2 + $0x30] sm:$0xff]
        %v3358 = vld [vmem:[#allocation2 + $0x38] sm:$0xf]
        %v3359 = vld [vmem:[#allocation2 + $0x3c] sm:$0xff]
        %v3360 = vld [vmem:[#allocation2 + $0x44] sm:$0xf]
        %v3361 = vld [vmem:[#allocation2 + $0x48] sm:$0xff]
        %v3362 = vld [vmem:[#allocation2 + $0x50] sm:$0xf]
        %v3363 = vld [vmem:[#allocation2 + $0x54] sm:$0xff]
        %v3364 = vld [vmem:[#allocation2 + $0x5c] sm:$0xf]
        %v3365 = vld [vmem:[#allocation2 + $0x60] sm:$0xff]
        %v3366 = vld [vmem:[#allocation2 + $0x68] sm:$0xf]
        %v3367 = vld [vmem:[#allocation2 + $0x6c] sm:$0xff]
        %v3368 = vld [vmem:[#allocation2 + $0x74] sm:$0xf]
        %v3369 = vld [vmem:[#allocation2 + $0x78] sm:$0xff]
        %v3370 = vld [vmem:[#allocation2 + $0x80] sm:$0xf]
        %v3371 = vld [vmem:[#allocation2 + $0x84] sm:$0xff]
        %v3372 = vld [vmem:[#allocation2 + $0x8c] sm:$0xf]
        %v3373 = vld [vmem:[#allocation2 + $0x90] sm:$0xff]
        %v3374 = vld [vmem:[#allocation2 + $0x98] sm:$0xf]
        %v3375 = vld [vmem:[#allocation2 + $0x9c] sm:$0xff]
        %v3376 = vld [vmem:[#allocation2 + $0xa4] sm:$0xf]
        %v3377 = vld [vmem:[#allocation2 + $0xa8] sm:$0xff]
        %v3378 = vld [vmem:[#allocation2 + $0xb0] sm:$0xf]
        %v3379 = vld [vmem:[#allocation2 + $0xb4] sm:$0xff]
        %v3380 = vld [vmem:[#allocation2 + $0xbc] sm:$0xf]
        %v3381 = vld [vmem:[#allocation2 + $0xc0] sm:$0xff]
        %v3382 = vld [vmem:[#allocation2 + $0xc8] sm:$0xf]
        %v3383 = vld [vmem:[#allocation2 + $0xcc] sm:$0xff]
        %v3384 = vld [vmem:[#allocation2 + $0xd4] sm:$0xf]
        %v3385 = vld [vmem:[#allocation2 + $0xd8] sm:$0xff]
        %v3386 = vld [vmem:[#allocation2 + $0xe0] sm:$0xf]
        %v3387 = vld [vmem:[#allocation2 + $0xe4] sm:$0xff]
        %v3388 = vld [vmem:[#allocation2 + $0xec] sm:$0xf]
        %v3389 = vld [vmem:[#allocation2 + $0xf0] sm:$0xff]
        %v3390 = vld [vmem:[#allocation2 + $0xf8] sm:$0xf]
        %v3391 = vld [vmem:[#allocation2 + $0xfc] sm:$0xff]
        %v3392 = vld [vmem:[#allocation2 + $0x104] sm:$0xf]
        %v3393 = vld [vmem:[#allocation2 + $0x108] sm:$0xff]
        %v3394 = vld [vmem:[#allocation2 + $0x110] sm:$0xf]
        %v3395 = vld [vmem:[#allocation2 + $0x114] sm:$0xff]
        %v3396 = vld [vmem:[#allocation2 + $0x11c] sm:$0xf]
        %v3397 = vld [vmem:[#allocation2 + $0x120] sm:$0xff]
        %v3398 = vld [vmem:[#allocation2 + $0x128] sm:$0xf]
        %v3399 = vld [vmem:[#allocation2 + $0x12c] sm:$0xff]
        %v3400 = vld [vmem:[#allocation2 + $0x134] sm:$0xf]
        %v3401 = vld [vmem:[#allocation2 + $0x138] sm:$0xff]
        %v3402 = vld [vmem:[#allocation2 + $0x140] sm:$0xf]
        %v3403 = vld [vmem:[#allocation2 + $0x144] sm:$0xff]
        %v3404 = vld [vmem:[#allocation2 + $0x14c] sm:$0xf]
        %v3405 = vld [vmem:[#allocation2 + $0x150] sm:$0xff]
        %v3406 = vld [vmem:[#allocation2 + $0x158] sm:$0xf]
        %v3407 = vld [vmem:[#allocation2 + $0x15c] sm:$0xff]
        %v3408 = vld [vmem:[#allocation2 + $0x164] sm:$0xf]
        %v3409 = vld [vmem:[#allocation2 + $0x168] sm:$0xff]
        %v3410 = vld [vmem:[#allocation2 + $0x170] sm:$0xf]
        %v3411 = vld [vmem:[#allocation2 + $0x174] sm:$0xff]
        %v3412 = vld [vmem:[#allocation2 + $0x17c] sm:$0xf]
        %v3413 = vld [vmem:[#allocation2 + $0x180] sm:$0xff]
        %v3414 = vld [vmem:[#allocation2 + $0x188] sm:$0xf]
        %v3415 = vld [vmem:[#allocation2 + $0x18c] sm:$0xff]
        %v3416 = vld [vmem:[#allocation2 + $0x194] sm:$0xf]
        %v3417 = vld [vmem:[#allocation2 + $0x198] sm:$0xff]
        %v3418 = vld [vmem:[#allocation2 + $0x1a0] sm:$0xf]
        %v3419 = vld [vmem:[#allocation2 + $0x1a4] sm:$0xff]
        %v3420 = vld [vmem:[#allocation2 + $0x1ac] sm:$0xf]
        %s3421 = scalar_lea.vmem [#allocation8], 384
        %v3422 = vld [vmem:[%s3421] sm:$0xf]
        %v3423 = vld [vmem:[%s3421 + $0x4] sm:$0xf]
        %v3424 = vld [vmem:[%s3421 + $0x8] sm:$0xf]
        %v3425 = vld [vmem:[%s3421 + $0xc] sm:$0xf]
        %v3426 = vld [vmem:[%s3421 + $0x10] sm:$0xf]
        %v3427 = vld [vmem:[%s3421 + $0x14] sm:$0xf]
        %v3428 = vld [vmem:[%s3421 + $0x18] sm:$0xf]
        %v3429 = vld [vmem:[%s3421 + $0x1c] sm:$0xf]
        %v3430 = vld [vmem:[%s3421 + $0x20] sm:$0xf]
        %v3431 = vld [vmem:[%s3421 + $0x24] sm:$0xf]
        %v3432 = vld [vmem:[%s3421 + $0x28] sm:$0xf]
        %v3433 = vld [vmem:[%s3421 + $0x2c] sm:$0xf]
        %v3434 = vld [vmem:[%s3421 + $0x30] sm:$0xf]
        %v3435 = vld [vmem:[%s3421 + $0x34] sm:$0xf]
        %v3436 = vld [vmem:[%s3421 + $0x38] sm:$0xf]
        %v3437 = vld [vmem:[%s3421 + $0x3c] sm:$0xf]
        %v3438 = vld [vmem:[%s3421 + $0x40] sm:$0xf]
        %v3439 = vld [vmem:[%s3421 + $0x44] sm:$0xf]
        %v3440 = vld [vmem:[%s3421 + $0x48] sm:$0xf]
        %v3441 = vld [vmem:[%s3421 + $0x4c] sm:$0xf]
        %v3442 = vld [vmem:[%s3421 + $0x50] sm:$0xf]
        %v3443 = vld [vmem:[%s3421 + $0x54] sm:$0xf]
        %v3444 = vld [vmem:[%s3421 + $0x58] sm:$0xf]
        %v3445 = vld [vmem:[%s3421 + $0x5c] sm:$0xf]
        %v3446 = vld [vmem:[%s3421 + $0x60] sm:$0xf]
        %v3447 = vld [vmem:[%s3421 + $0x64] sm:$0xf]
        %v3448 = vld [vmem:[%s3421 + $0x68] sm:$0xf]
        %v3449 = vld [vmem:[%s3421 + $0x6c] sm:$0xf]
        %v3450 = vld [vmem:[%s3421 + $0x70] sm:$0xf]
        %v3451 = vld [vmem:[%s3421 + $0x74] sm:$0xf]
        %v3452 = vld [vmem:[%s3421 + $0x78] sm:$0xf]
        %v3453 = vld [vmem:[%s3421 + $0x7c] sm:$0xf]
        %v3454 = vld [vmem:[%s3421 + $0x80] sm:$0xf]
        %v3455 = vld [vmem:[%s3421 + $0x84] sm:$0xf]
        %v3456 = vld [vmem:[%s3421 + $0x88] sm:$0xf]
        %v3457 = vld [vmem:[%s3421 + $0x8c] sm:$0xf]
        %v3458 = vld [vmem:[%s3421 + $0x90] sm:$0xf]
        %v3459 = vld [vmem:[%s3421 + $0x94] sm:$0xf]
        %v3460 = vld [vmem:[%s3421 + $0x98] sm:$0xf]
        %v3461 = vld [vmem:[%s3421 + $0x9c] sm:$0xf]
        %v3462 = vld [vmem:[%s3421 + $0xa0] sm:$0xf]
        %v3463 = vld [vmem:[%s3421 + $0xa4] sm:$0xf]
        %v3464 = vld [vmem:[%s3421 + $0xa8] sm:$0xf]
        %v3465 = vld [vmem:[%s3421 + $0xac] sm:$0xf]
        %v3466 = vld [vmem:[%s3421 + $0xb0] sm:$0xf]
        %v3467 = vld [vmem:[%s3421 + $0xb4] sm:$0xf]
        %v3468 = vld [vmem:[%s3421 + $0xb8] sm:$0xf]
        %v3469 = vld [vmem:[%s3421 + $0xbc] sm:$0xf]
        %v3534 = vunpack.c.l.b16 %v3357
        %v3535 = vunpack.c.h.b16 %v3357
        %v3536 = vunpack.c.l.b16 %v3358
        %v3537 = vunpack.c.l.b16 %v3359
        %v3538 = vunpack.c.h.b16 %v3359
        %v3539 = vunpack.c.l.b16 %v3360
        %v3540 = vunpack.c.l.b16 %v3361
        %v3541 = vunpack.c.h.b16 %v3361
        %v3542 = vunpack.c.l.b16 %v3362
        %v3543 = vunpack.c.l.b16 %v3363
        %v3544 = vunpack.c.h.b16 %v3363
        %v3545 = vunpack.c.l.b16 %v3364
        %v3546 = vunpack.c.l.b16 %v3365
        %v3547 = vunpack.c.h.b16 %v3365
        %v3548 = vunpack.c.l.b16 %v3366
        %v3549 = vunpack.c.l.b16 %v3367
        %v3550 = vunpack.c.h.b16 %v3367
        %v3551 = vunpack.c.l.b16 %v3368
        %v3552 = vunpack.c.l.b16 %v3369
        %v3553 = vunpack.c.h.b16 %v3369
        %v3554 = vunpack.c.l.b16 %v3370
        %v3555 = vunpack.c.l.b16 %v3371
        %v3556 = vunpack.c.h.b16 %v3371
        %v3557 = vunpack.c.l.b16 %v3372
        %v3558 = vunpack.c.l.b16 %v3373
        %v3559 = vunpack.c.h.b16 %v3373
        %v3560 = vunpack.c.l.b16 %v3374
        %v3561 = vunpack.c.l.b16 %v3375
        %v3562 = vunpack.c.h.b16 %v3375
        %v3563 = vunpack.c.l.b16 %v3376
        %v3564 = vunpack.c.l.b16 %v3377
        %v3565 = vunpack.c.h.b16 %v3377
        %v3566 = vunpack.c.l.b16 %v3378
        %v3567 = vunpack.c.l.b16 %v3379
        %v3568 = vunpack.c.h.b16 %v3379
        %v3569 = vunpack.c.l.b16 %v3380
        %v3570 = vunpack.c.l.b16 %v3381
        %v3571 = vunpack.c.h.b16 %v3381
        %v3572 = vunpack.c.l.b16 %v3382
        %v3573 = vunpack.c.l.b16 %v3383
        %v3574 = vunpack.c.h.b16 %v3383
        %v3575 = vunpack.c.l.b16 %v3384
        %v3576 = vunpack.c.l.b16 %v3385
        %v3577 = vunpack.c.h.b16 %v3385
        %v3578 = vunpack.c.l.b16 %v3386
        %v3579 = vunpack.c.l.b16 %v3387
        %v3580 = vunpack.c.h.b16 %v3387
        %v3581 = vunpack.c.l.b16 %v3388
        %v3582 = vunpack.c.l.b16 %v3389
        %v3583 = vunpack.c.h.b16 %v3389
        %v3584 = vunpack.c.l.b16 %v3390
        %v3585 = vunpack.c.l.b16 %v3391
        %v3586 = vunpack.c.h.b16 %v3391
        %v3587 = vunpack.c.l.b16 %v3392
        %v3588 = vunpack.c.l.b16 %v3393
        %v3589 = vunpack.c.h.b16 %v3393
        %v3590 = vunpack.c.l.b16 %v3394
        %v3591 = vunpack.c.l.b16 %v3395
        %v3592 = vunpack.c.h.b16 %v3395
        %v3593 = vunpack.c.l.b16 %v3396
        %v3594 = vunpack.c.l.b16 %v3397
        %v3595 = vunpack.c.h.b16 %v3397
        %v3596 = vunpack.c.l.b16 %v3398
        %v3597 = vunpack.c.l.b16 %v3399
        %v3598 = vunpack.c.h.b16 %v3399
        %v3599 = vunpack.c.l.b16 %v3400
        %v3600 = vunpack.c.l.b16 %v3401
        %v3601 = vunpack.c.h.b16 %v3401
        %v3602 = vunpack.c.l.b16 %v3402
        %v3603 = vunpack.c.l.b16 %v3403
        %v3604 = vunpack.c.h.b16 %v3403
        %v3605 = vunpack.c.l.b16 %v3404
        %v3606 = vunpack.c.l.b16 %v3405
        %v3607 = vunpack.c.h.b16 %v3405
        %v3608 = vunpack.c.l.b16 %v3406
        %v3609 = vunpack.c.l.b16 %v3407
        %v3610 = vunpack.c.h.b16 %v3407
        %v3611 = vunpack.c.l.b16 %v3408
        %v3612 = vunpack.c.l.b16 %v3409
        %v3613 = vunpack.c.h.b16 %v3409
        %v3614 = vunpack.c.l.b16 %v3410
        %v3615 = vunpack.c.l.b16 %v3411
        %v3616 = vunpack.c.h.b16 %v3411
        %v3617 = vunpack.c.l.b16 %v3412
        %v3618 = vunpack.c.l.b16 %v3413
        %v3619 = vunpack.c.h.b16 %v3413
        %v3620 = vunpack.c.l.b16 %v3414
        %v3621 = vunpack.c.l.b16 %v3415
        %v3622 = vunpack.c.h.b16 %v3415
        %v3623 = vunpack.c.l.b16 %v3416
        %v3624 = vunpack.c.l.b16 %v3417
        %v3625 = vunpack.c.h.b16 %v3417
        %v3626 = vunpack.c.l.b16 %v3418
        %v3627 = vunpack.c.l.b16 %v3419
        %v3628 = vunpack.c.h.b16 %v3419
        %v3629 = vunpack.c.l.b16 %v3420
        %v3630 = vpack.c.b16 %v3537, %v3534
        %v3631 = vpack.c.b16 %v3538, %v3535
        %v3632 = vpack.c.b16 %v3539, %v3536
        %v3633 = vpack.c.b16 %v3543, %v3540
        %v3634 = vpack.c.b16 %v3544, %v3541
        %v3635 = vpack.c.b16 %v3545, %v3542
        %v3636 = vpack.c.b16 %v3549, %v3546
        %v3637 = vpack.c.b16 %v3550, %v3547
        %v3638 = vpack.c.b16 %v3551, %v3548
        %v3639 = vpack.c.b16 %v3555, %v3552
        %v3640 = vpack.c.b16 %v3556, %v3553
        %v3641 = vpack.c.b16 %v3557, %v3554
        %v3642 = vpack.c.b16 %v3561, %v3558
        %v3643 = vpack.c.b16 %v3562, %v3559
        %v3644 = vpack.c.b16 %v3563, %v3560
        %v3645 = vpack.c.b16 %v3567, %v3564
        %v3646 = vpack.c.b16 %v3568, %v3565
        %v3647 = vpack.c.b16 %v3569, %v3566
        %v3648 = vpack.c.b16 %v3573, %v3570
        %v3649 = vpack.c.b16 %v3574, %v3571
        %v3650 = vpack.c.b16 %v3575, %v3572
        %v3651 = vpack.c.b16 %v3579, %v3576
        %v3652 = vpack.c.b16 %v3580, %v3577
        %v3653 = vpack.c.b16 %v3581, %v3578
        %v3654 = vpack.c.b16 %v3585, %v3582
        %v3655 = vpack.c.b16 %v3586, %v3583
        %v3656 = vpack.c.b16 %v3587, %v3584
        %v3657 = vpack.c.b16 %v3591, %v3588
        %v3658 = vpack.c.b16 %v3592, %v3589
        %v3659 = vpack.c.b16 %v3593, %v3590
        %v3660 = vpack.c.b16 %v3597, %v3594
        %v3661 = vpack.c.b16 %v3598, %v3595
        %v3662 = vpack.c.b16 %v3599, %v3596
        %v3663 = vpack.c.b16 %v3603, %v3600
        %v3664 = vpack.c.b16 %v3604, %v3601
        %v3665 = vpack.c.b16 %v3605, %v3602
        %v3666 = vpack.c.b16 %v3609, %v3606
        %v3667 = vpack.c.b16 %v3610, %v3607
        %v3668 = vpack.c.b16 %v3611, %v3608
        %v3669 = vpack.c.b16 %v3615, %v3612
        %v3670 = vpack.c.b16 %v3616, %v3613
        %v3671 = vpack.c.b16 %v3617, %v3614
        %v3672 = vpack.c.b16 %v3621, %v3618
        %v3673 = vpack.c.b16 %v3622, %v3619
        %v3674 = vpack.c.b16 %v3623, %v3620
        %v3675 = vpack.c.b16 %v3627, %v3624
        %v3676 = vpack.c.b16 %v3628, %v3625
        %v3677 = vpack.c.b16 %v3629, %v3626
        %v3774 = vunpack.c.l.b16 %v3422
        %v3775 = vunpack.c.l.b16 %v3423
        %v3776 = vunpack.c.l.b16 %v3424
        %v3777 = vunpack.c.l.b16 %v3425
        %v3778 = vunpack.c.l.b16 %v3426
        %v3779 = vunpack.c.l.b16 %v3427
        %v3780 = vunpack.c.l.b16 %v3428
        %v3781 = vunpack.c.l.b16 %v3429
        %v3782 = vunpack.c.l.b16 %v3430
        %v3783 = vunpack.c.l.b16 %v3431
        %v3784 = vunpack.c.l.b16 %v3432
        %v3785 = vunpack.c.l.b16 %v3433
        %v3786 = vunpack.c.l.b16 %v3434
        %v3787 = vunpack.c.l.b16 %v3435
        %v3788 = vunpack.c.l.b16 %v3436
        %v3789 = vunpack.c.l.b16 %v3437
        %v3790 = vunpack.c.l.b16 %v3438
        %v3791 = vunpack.c.l.b16 %v3439
        %v3792 = vunpack.c.l.b16 %v3440
        %v3793 = vunpack.c.l.b16 %v3441
        %v3794 = vunpack.c.l.b16 %v3442
        %v3795 = vunpack.c.l.b16 %v3443
        %v3796 = vunpack.c.l.b16 %v3444
        %v3797 = vunpack.c.l.b16 %v3445
        %v3798 = vunpack.c.l.b16 %v3446
        %v3799 = vunpack.c.l.b16 %v3447
        %v3800 = vunpack.c.l.b16 %v3448
        %v3801 = vunpack.c.l.b16 %v3449
        %v3802 = vunpack.c.l.b16 %v3450
        %v3803 = vunpack.c.l.b16 %v3451
        %v3804 = vunpack.c.l.b16 %v3452
        %v3805 = vunpack.c.l.b16 %v3453
        %v3806 = vunpack.c.l.b16 %v3454
        %v3807 = vunpack.c.l.b16 %v3455
        %v3808 = vunpack.c.l.b16 %v3456
        %v3809 = vunpack.c.l.b16 %v3457
        %v3810 = vunpack.c.l.b16 %v3458
        %v3811 = vunpack.c.l.b16 %v3459
        %v3812 = vunpack.c.l.b16 %v3460
        %v3813 = vunpack.c.l.b16 %v3461
        %v3814 = vunpack.c.l.b16 %v3462
        %v3815 = vunpack.c.l.b16 %v3463
        %v3816 = vunpack.c.l.b16 %v3464
        %v3817 = vunpack.c.l.b16 %v3465
        %v3818 = vunpack.c.l.b16 %v3466
        %v3819 = vunpack.c.l.b16 %v3467
        %v3820 = vunpack.c.l.b16 %v3468
        %v3821 = vunpack.c.l.b16 %v3469
        %v3822 = vpack.c.b16 %v3775, %v3774
        %v3823 = vpack.c.b16 %v3777, %v3776
        %v3824 = vpack.c.b16 %v3779, %v3778
        %v3825 = vpack.c.b16 %v3781, %v3780
        %v3826 = vpack.c.b16 %v3783, %v3782
        %v3827 = vpack.c.b16 %v3785, %v3784
        %v3828 = vpack.c.b16 %v3787, %v3786
        %v3829 = vpack.c.b16 %v3789, %v3788
        %v3830 = vpack.c.b16 %v3791, %v3790
        %v3831 = vpack.c.b16 %v3793, %v3792
        %v3832 = vpack.c.b16 %v3795, %v3794
        %v3833 = vpack.c.b16 %v3797, %v3796
        %v3834 = vpack.c.b16 %v3799, %v3798
        %v3835 = vpack.c.b16 %v3801, %v3800
        %v3836 = vpack.c.b16 %v3803, %v3802
        %v3837 = vpack.c.b16 %v3805, %v3804
        %v3838 = vpack.c.b16 %v3807, %v3806
        %v3839 = vpack.c.b16 %v3809, %v3808
        %v3840 = vpack.c.b16 %v3811, %v3810
        %v3841 = vpack.c.b16 %v3813, %v3812
        %v3842 = vpack.c.b16 %v3815, %v3814
        %v3843 = vpack.c.b16 %v3817, %v3816
        %v3844 = vpack.c.b16 %v3819, %v3818
        %v3845 = vpack.c.b16 %v3821, %v3820
        %3870 = vmatprep.subr.bf16.mxu0 0
        %3871 = vmatpush1.bf16.msra.mxu0 %v3829
        %3872 = vmatprep.subr.bf16.mxu0 0
        %3873 = vmatpush1.bf16.msra.mxu0 %v3828
        %3874 = vmatprep.subr.bf16.mxu0 0
        %3875 = vmatpush1.bf16.msra.mxu0 %v3827
        %3876 = vmatprep.subr.bf16.mxu0 0
        %3877 = vmatpush1.bf16.msra.mxu0 %v3826
        %3878 = vmatprep.subr.bf16.mxu0 0
        %3879 = vmatpush1.bf16.msra.mxu0 %v3825
        %3880 = vmatprep.subr.bf16.mxu0 0
        %3881 = vmatpush1.bf16.msra.mxu0 %v3824
        %3882 = vmatprep.subr.bf16.mxu0 0
        %3883 = vmatpush1.bf16.msra.mxu0 %v3823
        %3884 = vmatprep.subr.bf16.mxu0 0
        %3885 = vmatpush1.bf16.msra.mxu0 %v3822
        %3886 = vmatprep.subr.bf16.mxu0 0
        %3887 = vmatpush2.bf16.msra.mxu0 %v3837
        %3888 = vmatprep.subr.bf16.mxu0 0
        %3889 = vmatpush2.bf16.msra.mxu0 %v3836
        %3890 = vmatprep.subr.bf16.mxu0 0
        %3891 = vmatpush2.bf16.msra.mxu0 %v3835
        %3892 = vmatprep.subr.bf16.mxu0 0
        %3893 = vmatpush2.bf16.msra.mxu0 %v3834
        %3894 = vmatprep.subr.bf16.mxu0 0
        %3895 = vmatpush2.bf16.msra.mxu0 %v3833
        %3896 = vmatprep.subr.bf16.mxu0 0
        %3897 = vmatpush2.bf16.msra.mxu0 %v3832
        %3898 = vmatprep.subr.bf16.mxu0 0
        %3899 = vmatpush2.bf16.msra.mxu0 %v3831
        %3900 = vmatprep.subr.bf16.mxu0 0
        %3901 = vmatpush2.bf16.msra.mxu0 %v3830
        %3902 = vmatprep.mubr.bf16.mxu0 %v3631
        %3903 = vmatmul.mubr.bf16.gmra.mxu0 %v3630
        %v3904 = vpop.f32.mrf.mxu0
        %v3905 = vadd.f32 0.0, %v3904
        %v3906 = vpop.f32.mrf.mxu0
        %v3907 = vpop.f32.mrf.mxu0
        %v3908 = vadd.f32 0.0, %v3907
        %v3909 = vpop.f32.mrf.mxu0
        %3910 = vmatprep.mubr.bf16.mxu0 %v3634
        %3911 = vmatmul.mubr.bf16.gmra.mxu0 %v3633
        %v3912 = vpop.f32.mrf.mxu0
        %v3913 = vadd.f32 0.0, %v3912
        %v3914 = vpop.f32.mrf.mxu0
        %v3915 = vpop.f32.mrf.mxu0
        %v3916 = vadd.f32 0.0, %v3915
        %v3917 = vpop.f32.mrf.mxu0
        %3918 = vmatprep.mubr.bf16.mxu0 %v3637
        %3919 = vmatmul.mubr.bf16.gmra.mxu0 %v3636
        %v3920 = vpop.f32.mrf.mxu0
        %v3921 = vadd.f32 0.0, %v3920
        %v3922 = vpop.f32.mrf.mxu0
        %v3923 = vpop.f32.mrf.mxu0
        %v3924 = vadd.f32 0.0, %v3923
        %v3925 = vpop.f32.mrf.mxu0
        %3926 = vmatprep.mubr.bf16.mxu0 %v3640
        %3927 = vmatmul.mubr.bf16.gmra.mxu0 %v3639
        %v3928 = vpop.f32.mrf.mxu0
        %v3929 = vadd.f32 0.0, %v3928
        %v3930 = vpop.f32.mrf.mxu0
        %v3931 = vpop.f32.mrf.mxu0
        %v3932 = vadd.f32 0.0, %v3931
        %v3933 = vpop.f32.mrf.mxu0
        %3934 = vmatprep.mubr.bf16.mxu0 %v3643
        %3935 = vmatmul.mubr.bf16.gmra.mxu0 %v3642
        %v3936 = vpop.f32.mrf.mxu0
        %v3937 = vadd.f32 0.0, %v3936
        %v3938 = vpop.f32.mrf.mxu0
        %v3939 = vpop.f32.mrf.mxu0
        %v3940 = vadd.f32 0.0, %v3939
        %v3941 = vpop.f32.mrf.mxu0
        %3942 = vmatprep.mubr.bf16.mxu0 %v3646
        %3943 = vmatmul.mubr.bf16.gmra.mxu0 %v3645
        %v3944 = vpop.f32.mrf.mxu0
        %v3945 = vadd.f32 0.0, %v3944
        %v3946 = vpop.f32.mrf.mxu0
        %v3947 = vpop.f32.mrf.mxu0
        %v3948 = vadd.f32 0.0, %v3947
        %v3949 = vpop.f32.mrf.mxu0
        %3950 = vmatprep.mubr.bf16.mxu0 %v3649
        %3951 = vmatmul.mubr.bf16.gmra.mxu0 %v3648
        %v3952 = vpop.f32.mrf.mxu0
        %v3953 = vadd.f32 0.0, %v3952
        %v3954 = vpop.f32.mrf.mxu0
        %v3955 = vpop.f32.mrf.mxu0
        %v3956 = vadd.f32 0.0, %v3955
        %v3957 = vpop.f32.mrf.mxu0
        %3958 = vmatprep.mubr.bf16.mxu0 %v3652
        %3959 = vmatmul.mubr.bf16.gmra.mxu0 %v3651
        %v3960 = vpop.f32.mrf.mxu0
        %v3961 = vadd.f32 0.0, %v3960
        %v3962 = vpop.f32.mrf.mxu0
        %v3963 = vpop.f32.mrf.mxu0
        %v3964 = vadd.f32 0.0, %v3963
        %v3965 = vpop.f32.mrf.mxu0
        %3966 = vmatprep.mubr.bf16.mxu0 %v3655
        %3967 = vmatmul.mubr.bf16.gmra.mxu0 %v3654
        %v3968 = vpop.f32.mrf.mxu0
        %v3969 = vadd.f32 0.0, %v3968
        %v3970 = vpop.f32.mrf.mxu0
        %v3971 = vpop.f32.mrf.mxu0
        %v3972 = vadd.f32 0.0, %v3971
        %v3973 = vpop.f32.mrf.mxu0
        %3974 = vmatprep.mubr.bf16.mxu0 %v3658
        %3975 = vmatmul.mubr.bf16.gmra.mxu0 %v3657
        %v3976 = vpop.f32.mrf.mxu0
        %v3977 = vadd.f32 0.0, %v3976
        %v3978 = vpop.f32.mrf.mxu0
        %v3979 = vpop.f32.mrf.mxu0
        %v3980 = vadd.f32 0.0, %v3979
        %v3981 = vpop.f32.mrf.mxu0
        %3982 = vmatprep.mubr.bf16.mxu0 %v3661
        %3983 = vmatmul.mubr.bf16.gmra.mxu0 %v3660
        %v3984 = vpop.f32.mrf.mxu0
        %v3985 = vadd.f32 0.0, %v3984
        %v3986 = vpop.f32.mrf.mxu0
        %v3987 = vpop.f32.mrf.mxu0
        %v3988 = vadd.f32 0.0, %v3987
        %v3989 = vpop.f32.mrf.mxu0
        %3990 = vmatprep.mubr.bf16.mxu0 %v3664
        %3991 = vmatmul.mubr.bf16.gmra.mxu0 %v3663
        %v3992 = vpop.f32.mrf.mxu0
        %v3993 = vadd.f32 0.0, %v3992
        %v3994 = vpop.f32.mrf.mxu0
        %v3995 = vpop.f32.mrf.mxu0
        %v3996 = vadd.f32 0.0, %v3995
        %v3997 = vpop.f32.mrf.mxu0
        %3998 = vmatprep.mubr.bf16.mxu0 %v3667
        %3999 = vmatmul.mubr.bf16.gmra.mxu0 %v3666
        %v4000 = vpop.f32.mrf.mxu0
        %v4001 = vadd.f32 0.0, %v4000
        %v4002 = vpop.f32.mrf.mxu0
        %v4003 = vpop.f32.mrf.mxu0
        %v4004 = vadd.f32 0.0, %v4003
        %v4005 = vpop.f32.mrf.mxu0
        %4006 = vmatprep.mubr.bf16.mxu0 %v3670
        %4007 = vmatmul.mubr.bf16.gmra.mxu0 %v3669
        %v4008 = vpop.f32.mrf.mxu0
        %v4009 = vadd.f32 0.0, %v4008
        %v4010 = vpop.f32.mrf.mxu0
        %v4011 = vpop.f32.mrf.mxu0
        %v4012 = vadd.f32 0.0, %v4011
        %v4013 = vpop.f32.mrf.mxu0
        %4014 = vmatprep.mubr.bf16.mxu0 %v3673
        %4015 = vmatmul.mubr.bf16.gmra.mxu0 %v3672
        %v4016 = vpop.f32.mrf.mxu0
        %v4017 = vadd.f32 0.0, %v4016
        %v4018 = vpop.f32.mrf.mxu0
        %v4019 = vpop.f32.mrf.mxu0
        %v4020 = vadd.f32 0.0, %v4019
        %v4021 = vpop.f32.mrf.mxu0
        %4022 = vmatprep.mubr.bf16.mxu0 %v3676
        %4023 = vmatmul.mubr.bf16.gmra.mxu0 %v3675
        %v4024 = vpop.f32.mrf.mxu0
        %v4025 = vadd.f32 0.0, %v4024
        %v4026 = vpop.f32.mrf.mxu0
        %v4027 = vpop.f32.mrf.mxu0
        %v4028 = vadd.f32 0.0, %v4027
        %v4029 = vpop.f32.mrf.mxu0
        %4030 = vdwg.mxu0
        %4031 = vmatprep.subr.bf16.mxu0 0
        %4032 = vmatpush1.bf16.msra.mxu0 %v3845
        %4033 = vmatprep.subr.bf16.mxu0 0
        %4034 = vmatpush1.bf16.msra.mxu0 %v3844
        %4035 = vmatprep.subr.bf16.mxu0 0
        %4036 = vmatpush1.bf16.msra.mxu0 %v3843
        %4037 = vmatprep.subr.bf16.mxu0 0
        %4038 = vmatpush1.bf16.msra.mxu0 %v3842
        %4039 = vmatprep.subr.bf16.mxu0 0
        %4040 = vmatpush1.bf16.msra.mxu0 %v3841
        %4041 = vmatprep.subr.bf16.mxu0 0
        %4042 = vmatpush1.bf16.msra.mxu0 %v3840
        %4043 = vmatprep.subr.bf16.mxu0 0
        %4044 = vmatpush1.bf16.msra.mxu0 %v3839
        %4045 = vmatprep.subr.bf16.mxu0 0
        %4046 = vmatpush1.bf16.msra.mxu0 %v3838
        %4047 = vmatprep.subr.bf16.mxu0 0
        %4048 = vmatpush2.bf16.msra.mxu0 0
        %4049 = vmatprep.subr.bf16.mxu0 0
        %4050 = vmatpush2.bf16.msra.mxu0 0
        %4051 = vmatprep.subr.bf16.mxu0 0
        %4052 = vmatpush2.bf16.msra.mxu0 0
        %4053 = vmatprep.subr.bf16.mxu0 0
        %4054 = vmatpush2.bf16.msra.mxu0 0
        %4055 = vmatprep.subr.bf16.mxu0 0
        %4056 = vmatpush2.bf16.msra.mxu0 0
        %4057 = vmatprep.subr.bf16.mxu0 0
        %4058 = vmatpush2.bf16.msra.mxu0 0
        %4059 = vmatprep.subr.bf16.mxu0 0
        %4060 = vmatpush2.bf16.msra.mxu0 0
        %4061 = vmatprep.subr.bf16.mxu0 0
        %4062 = vmatpush2.bf16.msra.mxu0 0
        %4063 = vmatprep.mubr.bf16.mxu0 0
        %4064 = vmatmul.mubr.bf16.gmra.mxu0 %v3632
        %v4065 = vpop.f32.mrf.mxu0
        %v4066 = vadd.f32 %v3905, %v4065
        %v4067 = vpop.f32.mrf.mxu0
        %v4068 = vpop.f32.mrf.mxu0
        %v4069 = vadd.f32 %v3908, %v4068
        %v4070 = vpop.f32.mrf.mxu0
        %4071 = vmatprep.mubr.bf16.mxu0 0
        %4072 = vmatmul.mubr.bf16.gmra.mxu0 %v3635
        %v4073 = vpop.f32.mrf.mxu0
        %v4074 = vadd.f32 %v3913, %v4073
        %v4075 = vpop.f32.mrf.mxu0
        %v4076 = vpop.f32.mrf.mxu0
        %v4077 = vadd.f32 %v3916, %v4076
        %v4078 = vpop.f32.mrf.mxu0
        %4079 = vmatprep.mubr.bf16.mxu0 0
        %4080 = vmatmul.mubr.bf16.gmra.mxu0 %v3638
        %v4081 = vpop.f32.mrf.mxu0
        %v4082 = vadd.f32 %v3921, %v4081
        %v4083 = vpop.f32.mrf.mxu0
        %v4084 = vpop.f32.mrf.mxu0
        %v4085 = vadd.f32 %v3924, %v4084
        %v4086 = vpop.f32.mrf.mxu0
        %4087 = vmatprep.mubr.bf16.mxu0 0
        %4088 = vmatmul.mubr.bf16.gmra.mxu0 %v3641
        %v4089 = vpop.f32.mrf.mxu0
        %v4090 = vadd.f32 %v3929, %v4089
        %v4091 = vpop.f32.mrf.mxu0
        %v4092 = vpop.f32.mrf.mxu0
        %v4093 = vadd.f32 %v3932, %v4092
        %v4094 = vpop.f32.mrf.mxu0
        %4095 = vmatprep.mubr.bf16.mxu0 0
        %4096 = vmatmul.mubr.bf16.gmra.mxu0 %v3644
        %v4097 = vpop.f32.mrf.mxu0
        %v4098 = vadd.f32 %v3937, %v4097
        %v4099 = vpop.f32.mrf.mxu0
        %v4100 = vpop.f32.mrf.mxu0
        %v4101 = vadd.f32 %v3940, %v4100
        %v4102 = vpop.f32.mrf.mxu0
        %4103 = vmatprep.mubr.bf16.mxu0 0
        %4104 = vmatmul.mubr.bf16.gmra.mxu0 %v3647
        %v4105 = vpop.f32.mrf.mxu0
        %v4106 = vadd.f32 %v3945, %v4105
        %v4107 = vpop.f32.mrf.mxu0
        %v4108 = vpop.f32.mrf.mxu0
        %v4109 = vadd.f32 %v3948, %v4108
        %v4110 = vpop.f32.mrf.mxu0
        %4111 = vmatprep.mubr.bf16.mxu0 0
        %4112 = vmatmul.mubr.bf16.gmra.mxu0 %v3650
        %v4113 = vpop.f32.mrf.mxu0
        %v4114 = vadd.f32 %v3953, %v4113
        %v4115 = vpop.f32.mrf.mxu0
        %v4116 = vpop.f32.mrf.mxu0
        %v4117 = vadd.f32 %v3956, %v4116
        %v4118 = vpop.f32.mrf.mxu0
        %4119 = vmatprep.mubr.bf16.mxu0 0
        %4120 = vmatmul.mubr.bf16.gmra.mxu0 %v3653
        %v4121 = vpop.f32.mrf.mxu0
        %v4122 = vadd.f32 %v3961, %v4121
        %v4123 = vpop.f32.mrf.mxu0
        %v4124 = vpop.f32.mrf.mxu0
        %v4125 = vadd.f32 %v3964, %v4124
        %v4126 = vpop.f32.mrf.mxu0
        %4127 = vmatprep.mubr.bf16.mxu0 0
        %4128 = vmatmul.mubr.bf16.gmra.mxu0 %v3656
        %v4129 = vpop.f32.mrf.mxu0
        %v4130 = vadd.f32 %v3969, %v4129
        %v4131 = vpop.f32.mrf.mxu0
        %v4132 = vpop.f32.mrf.mxu0
        %v4133 = vadd.f32 %v3972, %v4132
        %v4134 = vpop.f32.mrf.mxu0
        %4135 = vmatprep.mubr.bf16.mxu0 0
        %4136 = vmatmul.mubr.bf16.gmra.mxu0 %v3659
        %v4137 = vpop.f32.mrf.mxu0
        %v4138 = vadd.f32 %v3977, %v4137
        %v4139 = vpop.f32.mrf.mxu0
        %v4140 = vpop.f32.mrf.mxu0
        %v4141 = vadd.f32 %v3980, %v4140
        %v4142 = vpop.f32.mrf.mxu0
        %4143 = vmatprep.mubr.bf16.mxu0 0
        %4144 = vmatmul.mubr.bf16.gmra.mxu0 %v3662
        %v4145 = vpop.f32.mrf.mxu0
        %v4146 = vadd.f32 %v3985, %v4145
        %v4147 = vpop.f32.mrf.mxu0
        %v4148 = vpop.f32.mrf.mxu0
        %v4149 = vadd.f32 %v3988, %v4148
        %v4150 = vpop.f32.mrf.mxu0
        %4151 = vmatprep.mubr.bf16.mxu0 0
        %4152 = vmatmul.mubr.bf16.gmra.mxu0 %v3665
        %v4153 = vpop.f32.mrf.mxu0
        %v4154 = vadd.f32 %v3993, %v4153
        %v4155 = vpop.f32.mrf.mxu0
        %v4156 = vpop.f32.mrf.mxu0
        %v4157 = vadd.f32 %v3996, %v4156
        %v4158 = vpop.f32.mrf.mxu0
        %4159 = vmatprep.mubr.bf16.mxu0 0
        %4160 = vmatmul.mubr.bf16.gmra.mxu0 %v3668
        %v4161 = vpop.f32.mrf.mxu0
        %v4162 = vadd.f32 %v4001, %v4161
        %v4163 = vpop.f32.mrf.mxu0
        %v4164 = vpop.f32.mrf.mxu0
        %v4165 = vadd.f32 %v4004, %v4164
        %v4166 = vpop.f32.mrf.mxu0
        %4167 = vmatprep.mubr.bf16.mxu0 0
        %4168 = vmatmul.mubr.bf16.gmra.mxu0 %v3671
        %v4169 = vpop.f32.mrf.mxu0
        %v4170 = vadd.f32 %v4009, %v4169
        %v4171 = vpop.f32.mrf.mxu0
        %v4172 = vpop.f32.mrf.mxu0
        %v4173 = vadd.f32 %v4012, %v4172
        %v4174 = vpop.f32.mrf.mxu0
        %4175 = vmatprep.mubr.bf16.mxu0 0
        %4176 = vmatmul.mubr.bf16.gmra.mxu0 %v3674
        %v4177 = vpop.f32.mrf.mxu0
        %v4178 = vadd.f32 %v4017, %v4177
        %v4179 = vpop.f32.mrf.mxu0
        %v4180 = vpop.f32.mrf.mxu0
        %v4181 = vadd.f32 %v4020, %v4180
        %v4182 = vpop.f32.mrf.mxu0
        %4183 = vmatprep.mubr.bf16.mxu0 0
        %4184 = vmatmul.mubr.bf16.gmra.mxu0 %v3677
        %v4185 = vpop.f32.mrf.mxu0
        %v4186 = vadd.f32 %v4025, %v4185
        %v4187 = vpop.f32.mrf.mxu0
        %v4188 = vpop.f32.mrf.mxu0
        %v4189 = vadd.f32 %v4028, %v4188
        %v4190 = vpop.f32.mrf.mxu0
        %4191 = vdwg.mxu0
        %v4192 = vadd.f32 %v3231, %v4066
        %v4193 = vadd.f32 %v3234, %v4069
        %v4194 = vadd.f32 %v3239, %v4074
        %v4195 = vadd.f32 %v3242, %v4077
        %v4196 = vadd.f32 %v3247, %v4082
        %v4197 = vadd.f32 %v3250, %v4085
        %v4198 = vadd.f32 %v3255, %v4090
        %v4199 = vadd.f32 %v3258, %v4093
        %v4200 = vadd.f32 %v3263, %v4098
        %v4201 = vadd.f32 %v3266, %v4101
        %v4202 = vadd.f32 %v3271, %v4106
        %v4203 = vadd.f32 %v3274, %v4109
        %v4204 = vadd.f32 %v3279, %v4114
        %v4205 = vadd.f32 %v3282, %v4117
        %v4206 = vadd.f32 %v3287, %v4122
        %v4207 = vadd.f32 %v3290, %v4125
        %v4208 = vadd.f32 %v3295, %v4130
        %v4209 = vadd.f32 %v3298, %v4133
        %v4210 = vadd.f32 %v3303, %v4138
        %v4211 = vadd.f32 %v3306, %v4141
        %v4212 = vadd.f32 %v3311, %v4146
        %v4213 = vadd.f32 %v3314, %v4149
        %v4214 = vadd.f32 %v3319, %v4154
        %v4215 = vadd.f32 %v3322, %v4157
        %v4216 = vadd.f32 %v3327, %v4162
        %v4217 = vadd.f32 %v3330, %v4165
        %v4218 = vadd.f32 %v3335, %v4170
        %v4219 = vadd.f32 %v3338, %v4173
        %v4220 = vadd.f32 %v3343, %v4178
        %v4221 = vadd.f32 %v3346, %v4181
        %v4222 = vadd.f32 %v3351, %v4186
        %v4223 = vadd.f32 %v3354, %v4189
        %v4224 = vld [vmem:[%s6] sm:$0x1]
        %v4226 = vlaneseq
        %v4227 = vshrl.u32 %v4226, 7
        %v4228 = vsub.s32 0, %v4227
        %v4229 = vrot.slane %v4224, %v4228
        %v4231 = vadd.f32 %v4192, %v4229
        %v4232 = vadd.f32 %v4193, %v4229
        %v4233 = vadd.f32 %v4194, %v4229
        %v4234 = vadd.f32 %v4195, %v4229
        %v4235 = vadd.f32 %v4196, %v4229
        %v4236 = vadd.f32 %v4197, %v4229
        %v4237 = vadd.f32 %v4198, %v4229
        %v4238 = vadd.f32 %v4199, %v4229
        %v4239 = vadd.f32 %v4200, %v4229
        %v4240 = vadd.f32 %v4201, %v4229
        %v4241 = vadd.f32 %v4202, %v4229
        %v4242 = vadd.f32 %v4203, %v4229
        %v4243 = vadd.f32 %v4204, %v4229
        %v4244 = vadd.f32 %v4205, %v4229
        %v4245 = vadd.f32 %v4206, %v4229
        %v4246 = vadd.f32 %v4207, %v4229
        %v4247 = vadd.f32 %v4208, %v4229
        %v4248 = vadd.f32 %v4209, %v4229
        %v4249 = vadd.f32 %v4210, %v4229
        %v4250 = vadd.f32 %v4211, %v4229
        %v4251 = vadd.f32 %v4212, %v4229
        %v4252 = vadd.f32 %v4213, %v4229
        %v4253 = vadd.f32 %v4214, %v4229
        %v4254 = vadd.f32 %v4215, %v4229
        %v4255 = vadd.f32 %v4216, %v4229
        %v4256 = vadd.f32 %v4217, %v4229
        %v4257 = vadd.f32 %v4218, %v4229
        %v4258 = vadd.f32 %v4219, %v4229
        %v4259 = vadd.f32 %v4220, %v4229
        %v4260 = vadd.f32 %v4221, %v4229
        %v4261 = vadd.f32 %v4222, %v4229
        %v4262 = vadd.f32 %v4223, %v4229
        %v4263 = vmax.f32 %v4231, 0.0
        %v4264 = vmax.f32 %v4232, 0.0
        %v4265 = vmax.f32 %v4233, 0.0
        %v4266 = vmax.f32 %v4234, 0.0
        %v4267 = vmax.f32 %v4235, 0.0
        %v4268 = vmax.f32 %v4236, 0.0
        %v4269 = vmax.f32 %v4237, 0.0
        %v4270 = vmax.f32 %v4238, 0.0
        %v4271 = vmax.f32 %v4239, 0.0
        %v4272 = vmax.f32 %v4240, 0.0
        %v4273 = vmax.f32 %v4241, 0.0
        %v4274 = vmax.f32 %v4242, 0.0
        %v4275 = vmax.f32 %v4243, 0.0
        %v4276 = vmax.f32 %v4244, 0.0
        %v4277 = vmax.f32 %v4245, 0.0
        %v4278 = vmax.f32 %v4246, 0.0
        %v4279 = vmax.f32 %v4247, 0.0
        %v4280 = vmax.f32 %v4248, 0.0
        %v4281 = vmax.f32 %v4249, 0.0
        %v4282 = vmax.f32 %v4250, 0.0
        %v4283 = vmax.f32 %v4251, 0.0
        %v4284 = vmax.f32 %v4252, 0.0
        %v4285 = vmax.f32 %v4253, 0.0
        %v4286 = vmax.f32 %v4254, 0.0
        %v4287 = vmax.f32 %v4255, 0.0
        %v4288 = vmax.f32 %v4256, 0.0
        %v4289 = vmax.f32 %v4257, 0.0
        %v4290 = vmax.f32 %v4258, 0.0
        %v4291 = vmax.f32 %v4259, 0.0
        %v4292 = vmax.f32 %v4260, 0.0
        %v4293 = vmax.f32 %v4261, 0.0
        %v4294 = vmax.f32 %v4262, 0.0
        %v4295 = vpack.c.bf16 %v4264, %v4263
        %v4296 = vpack.c.bf16 %v4266, %v4265
        %v4297 = vpack.c.bf16 %v4268, %v4267
        %v4298 = vpack.c.bf16 %v4270, %v4269
        %v4299 = vpack.c.bf16 %v4272, %v4271
        %v4300 = vpack.c.bf16 %v4274, %v4273
        %v4301 = vpack.c.bf16 %v4276, %v4275
        %v4302 = vpack.c.bf16 %v4278, %v4277
        %v4303 = vpack.c.bf16 %v4280, %v4279
        %v4304 = vpack.c.bf16 %v4282, %v4281
        %v4305 = vpack.c.bf16 %v4284, %v4283
        %v4306 = vpack.c.bf16 %v4286, %v4285
        %v4307 = vpack.c.bf16 %v4288, %v4287
        %v4308 = vpack.c.bf16 %v4290, %v4289
        %v4309 = vpack.c.bf16 %v4292, %v4291
        %v4310 = vpack.c.bf16 %v4294, %v4293
        %v4311 = vld [vmem:[#allocation9] sm:$0xf]
        %v4312 = vld [vmem:[#allocation9 + $0x4] sm:$0xf]
        %v4313 = vld [vmem:[#allocation9 + $0x8] sm:$0xf]
        %v4314 = vld [vmem:[#allocation9 + $0xc] sm:$0xf]
        %v4315 = vld [vmem:[#allocation9 + $0x10] sm:$0xf]
        %v4316 = vld [vmem:[#allocation9 + $0x14] sm:$0xf]
        %v4317 = vld [vmem:[#allocation9 + $0x18] sm:$0xf]
        %v4318 = vld [vmem:[#allocation9 + $0x1c] sm:$0xf]
        %v4319 = vld [vmem:[#allocation9 + $0x20] sm:$0xf]
        %v4320 = vld [vmem:[#allocation9 + $0x24] sm:$0xf]
        %v4321 = vld [vmem:[#allocation9 + $0x28] sm:$0xf]
        %v4322 = vld [vmem:[#allocation9 + $0x2c] sm:$0xf]
        %v4323 = vld [vmem:[#allocation9 + $0x30] sm:$0xf]
        %v4324 = vld [vmem:[#allocation9 + $0x34] sm:$0xf]
        %v4325 = vld [vmem:[#allocation9 + $0x38] sm:$0xf]
        %v4326 = vld [vmem:[#allocation9 + $0x3c] sm:$0xf]
        %v4327 = vld [vmem:[%s323] sm:$0xff]
        %v4328 = vld [vmem:[%s323 + $0x8] sm:$0xff]
        %v4329 = vld [vmem:[%s323 + $0x10] sm:$0xff]
        %v4330 = vld [vmem:[%s323 + $0x18] sm:$0xff]
        %v4331 = vld [vmem:[%s323 + $0x20] sm:$0xff]
        %v4332 = vld [vmem:[%s323 + $0x28] sm:$0xff]
        %v4333 = vld [vmem:[%s323 + $0x30] sm:$0xff]
        %v4334 = vld [vmem:[%s323 + $0x38] sm:$0xff]
        %v4335 = vld [vmem:[%s323 + $0x40] sm:$0xff]
        %v4336 = vld [vmem:[%s323 + $0x48] sm:$0xff]
        %v4337 = vld [vmem:[%s323 + $0x50] sm:$0xff]
        %v4338 = vld [vmem:[%s323 + $0x58] sm:$0xff]
        %v4339 = vld [vmem:[%s323 + $0x60] sm:$0xff]
        %v4340 = vld [vmem:[%s323 + $0x68] sm:$0xff]
        %v4341 = vld [vmem:[%s323 + $0x70] sm:$0xff]
        %v4342 = vld [vmem:[%s323 + $0x78] sm:$0xff]
        %v4343 = vld [vmem:[%s323 + $0x80] sm:$0xff]
        %v4344 = vld [vmem:[%s323 + $0x88] sm:$0xff]
        %v4345 = vld [vmem:[%s323 + $0x90] sm:$0xff]
        %v4346 = vld [vmem:[%s323 + $0x98] sm:$0xff]
        %v4347 = vld [vmem:[%s323 + $0xa0] sm:$0xff]
        %v4348 = vld [vmem:[%s323 + $0xa8] sm:$0xff]
        %v4349 = vld [vmem:[%s323 + $0xb0] sm:$0xff]
        %v4350 = vld [vmem:[%s323 + $0xb8] sm:$0xff]
        %v4351 = vld [vmem:[%s323 + $0xc0] sm:$0xff]
        %v4352 = vld [vmem:[%s323 + $0xc8] sm:$0xff]
        %v4353 = vld [vmem:[%s323 + $0xd0] sm:$0xff]
        %v4354 = vld [vmem:[%s323 + $0xd8] sm:$0xff]
        %v4355 = vld [vmem:[%s323 + $0xe0] sm:$0xff]
        %v4356 = vld [vmem:[%s323 + $0xe8] sm:$0xff]
        %v4357 = vld [vmem:[%s323 + $0xf0] sm:$0xff]
        %v4358 = vld [vmem:[%s323 + $0xf8] sm:$0xff]
        %v4375 = vunpack.c.l.b16 %v4311
        %v4376 = vunpack.c.l.b16 %v4312
        %v4377 = vunpack.c.l.b16 %v4313
        %v4378 = vunpack.c.l.b16 %v4314
        %v4379 = vunpack.c.l.b16 %v4315
        %v4380 = vunpack.c.l.b16 %v4316
        %v4381 = vunpack.c.l.b16 %v4317
        %v4382 = vunpack.c.l.b16 %v4318
        %v4383 = vunpack.c.l.b16 %v4319
        %v4384 = vunpack.c.l.b16 %v4320
        %v4385 = vunpack.c.l.b16 %v4321
        %v4386 = vunpack.c.l.b16 %v4322
        %v4387 = vunpack.c.l.b16 %v4323
        %v4388 = vunpack.c.l.b16 %v4324
        %v4389 = vunpack.c.l.b16 %v4325
        %v4390 = vunpack.c.l.b16 %v4326
        %v4391 = vpack.c.b16 %v4376, %v4375
        %v4392 = vpack.c.b16 %v4378, %v4377
        %v4393 = vpack.c.b16 %v4380, %v4379
        %v4394 = vpack.c.b16 %v4382, %v4381
        %v4395 = vpack.c.b16 %v4384, %v4383
        %v4396 = vpack.c.b16 %v4386, %v4385
        %v4397 = vpack.c.b16 %v4388, %v4387
        %v4398 = vpack.c.b16 %v4390, %v4389
        %4407 = vmatprep.subr.bf16.mxu0 0
        %4408 = vmatpush1.bf16.msra.mxu0 %v4398
        %4409 = vmatprep.subr.bf16.mxu0 0
        %4410 = vmatpush1.bf16.msra.mxu0 %v4397
        %4411 = vmatprep.subr.bf16.mxu0 0
        %4412 = vmatpush1.bf16.msra.mxu0 %v4396
        %4413 = vmatprep.subr.bf16.mxu0 0
        %4414 = vmatpush1.bf16.msra.mxu0 %v4395
        %4415 = vmatprep.subr.bf16.mxu0 0
        %4416 = vmatpush1.bf16.msra.mxu0 %v4394
        %4417 = vmatprep.subr.bf16.mxu0 0
        %4418 = vmatpush1.bf16.msra.mxu0 %v4393
        %4419 = vmatprep.subr.bf16.mxu0 0
        %4420 = vmatpush1.bf16.msra.mxu0 %v4392
        %4421 = vmatprep.subr.bf16.mxu0 0
        %4422 = vmatpush1.bf16.msra.mxu0 %v4391
        %4423 = vmatprep.subr.bf16.mxu0 0
        %4424 = vmatpush2.bf16.msra.mxu0 0
        %4425 = vmatprep.subr.bf16.mxu0 0
        %4426 = vmatpush2.bf16.msra.mxu0 0
        %4427 = vmatprep.subr.bf16.mxu0 0
        %4428 = vmatpush2.bf16.msra.mxu0 0
        %4429 = vmatprep.subr.bf16.mxu0 0
        %4430 = vmatpush2.bf16.msra.mxu0 0
        %4431 = vmatprep.subr.bf16.mxu0 0
        %4432 = vmatpush2.bf16.msra.mxu0 0
        %4433 = vmatprep.subr.bf16.mxu0 0
        %4434 = vmatpush2.bf16.msra.mxu0 0
        %4435 = vmatprep.subr.bf16.mxu0 0
        %4436 = vmatpush2.bf16.msra.mxu0 0
        %4437 = vmatprep.subr.bf16.mxu0 0
        %4438 = vmatpush2.bf16.msra.mxu0 0
        %4439 = vmatprep.mubr.bf16.mxu0 0
        %4440 = vmatmul.mubr.bf16.gmra.mxu0 %v4295
        %v4441 = vpop.f32.mrf.mxu0
        %v4442 = vadd.f32 %v4327, %v4441
        %v4443 = vpop.f32.mrf.mxu0
        %v4444 = vpop.f32.mrf.mxu0
        %v4445 = vadd.f32 %v4328, %v4444
        %v4446 = vpop.f32.mrf.mxu0
        %4447 = vmatprep.mubr.bf16.mxu0 0
        %4448 = vmatmul.mubr.bf16.gmra.mxu0 %v4296
        %v4449 = vpop.f32.mrf.mxu0
        %v4450 = vadd.f32 %v4329, %v4449
        %v4451 = vpop.f32.mrf.mxu0
        %v4452 = vpop.f32.mrf.mxu0
        %v4453 = vadd.f32 %v4330, %v4452
        %v4454 = vpop.f32.mrf.mxu0
        %4455 = vmatprep.mubr.bf16.mxu0 0
        %4456 = vmatmul.mubr.bf16.gmra.mxu0 %v4297
        %v4457 = vpop.f32.mrf.mxu0
        %v4458 = vadd.f32 %v4331, %v4457
        %v4459 = vpop.f32.mrf.mxu0
        %v4460 = vpop.f32.mrf.mxu0
        %v4461 = vadd.f32 %v4332, %v4460
        %v4462 = vpop.f32.mrf.mxu0
        %4463 = vmatprep.mubr.bf16.mxu0 0
        %4464 = vmatmul.mubr.bf16.gmra.mxu0 %v4298
        %v4465 = vpop.f32.mrf.mxu0
        %v4466 = vadd.f32 %v4333, %v4465
        %v4467 = vpop.f32.mrf.mxu0
        %v4468 = vpop.f32.mrf.mxu0
        %v4469 = vadd.f32 %v4334, %v4468
        %v4470 = vpop.f32.mrf.mxu0
        %4471 = vmatprep.mubr.bf16.mxu0 0
        %4472 = vmatmul.mubr.bf16.gmra.mxu0 %v4299
        %v4473 = vpop.f32.mrf.mxu0
        %v4474 = vadd.f32 %v4335, %v4473
        %v4475 = vpop.f32.mrf.mxu0
        %v4476 = vpop.f32.mrf.mxu0
        %v4477 = vadd.f32 %v4336, %v4476
        %v4478 = vpop.f32.mrf.mxu0
        %4479 = vmatprep.mubr.bf16.mxu0 0
        %4480 = vmatmul.mubr.bf16.gmra.mxu0 %v4300
        %v4481 = vpop.f32.mrf.mxu0
        %v4482 = vadd.f32 %v4337, %v4481
        %v4483 = vpop.f32.mrf.mxu0
        %v4484 = vpop.f32.mrf.mxu0
        %v4485 = vadd.f32 %v4338, %v4484
        %v4486 = vpop.f32.mrf.mxu0
        %4487 = vmatprep.mubr.bf16.mxu0 0
        %4488 = vmatmul.mubr.bf16.gmra.mxu0 %v4301
        %v4489 = vpop.f32.mrf.mxu0
        %v4490 = vadd.f32 %v4339, %v4489
        %v4491 = vpop.f32.mrf.mxu0
        %v4492 = vpop.f32.mrf.mxu0
        %v4493 = vadd.f32 %v4340, %v4492
        %v4494 = vpop.f32.mrf.mxu0
        %4495 = vmatprep.mubr.bf16.mxu0 0
        %4496 = vmatmul.mubr.bf16.gmra.mxu0 %v4302
        %v4497 = vpop.f32.mrf.mxu0
        %v4498 = vadd.f32 %v4341, %v4497
        %v4499 = vpop.f32.mrf.mxu0
        %v4500 = vpop.f32.mrf.mxu0
        %v4501 = vadd.f32 %v4342, %v4500
        %v4502 = vpop.f32.mrf.mxu0
        %4503 = vmatprep.mubr.bf16.mxu0 0
        %4504 = vmatmul.mubr.bf16.gmra.mxu0 %v4303
        %v4505 = vpop.f32.mrf.mxu0
        %v4506 = vadd.f32 %v4343, %v4505
        %v4507 = vpop.f32.mrf.mxu0
        %v4508 = vpop.f32.mrf.mxu0
        %v4509 = vadd.f32 %v4344, %v4508
        %v4510 = vpop.f32.mrf.mxu0
        %4511 = vmatprep.mubr.bf16.mxu0 0
        %4512 = vmatmul.mubr.bf16.gmra.mxu0 %v4304
        %v4513 = vpop.f32.mrf.mxu0
        %v4514 = vadd.f32 %v4345, %v4513
        %v4515 = vpop.f32.mrf.mxu0
        %v4516 = vpop.f32.mrf.mxu0
        %v4517 = vadd.f32 %v4346, %v4516
        %v4518 = vpop.f32.mrf.mxu0
        %4519 = vmatprep.mubr.bf16.mxu0 0
        %4520 = vmatmul.mubr.bf16.gmra.mxu0 %v4305
        %v4521 = vpop.f32.mrf.mxu0
        %v4522 = vadd.f32 %v4347, %v4521
        %v4523 = vpop.f32.mrf.mxu0
        %v4524 = vpop.f32.mrf.mxu0
        %v4525 = vadd.f32 %v4348, %v4524
        %v4526 = vpop.f32.mrf.mxu0
        %4527 = vmatprep.mubr.bf16.mxu0 0
        %4528 = vmatmul.mubr.bf16.gmra.mxu0 %v4306
        %v4529 = vpop.f32.mrf.mxu0
        %v4530 = vadd.f32 %v4349, %v4529
        %v4531 = vpop.f32.mrf.mxu0
        %v4532 = vpop.f32.mrf.mxu0
        %v4533 = vadd.f32 %v4350, %v4532
        %v4534 = vpop.f32.mrf.mxu0
        %4535 = vmatprep.mubr.bf16.mxu0 0
        %4536 = vmatmul.mubr.bf16.gmra.mxu0 %v4307
        %v4537 = vpop.f32.mrf.mxu0
        %v4538 = vadd.f32 %v4351, %v4537
        %v4539 = vpop.f32.mrf.mxu0
        %v4540 = vpop.f32.mrf.mxu0
        %v4541 = vadd.f32 %v4352, %v4540
        %v4542 = vpop.f32.mrf.mxu0
        %4543 = vmatprep.mubr.bf16.mxu0 0
        %4544 = vmatmul.mubr.bf16.gmra.mxu0 %v4308
        %v4545 = vpop.f32.mrf.mxu0
        %v4546 = vadd.f32 %v4353, %v4545
        %v4547 = vpop.f32.mrf.mxu0
        %v4548 = vpop.f32.mrf.mxu0
        %v4549 = vadd.f32 %v4354, %v4548
        %v4550 = vpop.f32.mrf.mxu0
        %4551 = vmatprep.mubr.bf16.mxu0 0
        %4552 = vmatmul.mubr.bf16.gmra.mxu0 %v4309
        %v4553 = vpop.f32.mrf.mxu0
        %v4554 = vadd.f32 %v4355, %v4553
        %v4555 = vpop.f32.mrf.mxu0
        %v4556 = vpop.f32.mrf.mxu0
        %v4557 = vadd.f32 %v4356, %v4556
        %v4558 = vpop.f32.mrf.mxu0
        %4559 = vmatprep.mubr.bf16.mxu0 0
        %4560 = vmatmul.mubr.bf16.gmra.mxu0 %v4310
        %v4561 = vpop.f32.mrf.mxu0
        %v4562 = vadd.f32 %v4357, %v4561
        %v4563 = vpop.f32.mrf.mxu0
        %v4564 = vpop.f32.mrf.mxu0
        %v4565 = vadd.f32 %v4358, %v4564
        %v4566 = vpop.f32.mrf.mxu0
        %4567 = vdwg.mxu0
        %4568 = vst [vmem:[%s367] sm:$0xff] %v4442
        %4569 = vst [vmem:[%s367 + $0x8] sm:$0xff] %v4445
        %4570 = vst [vmem:[%s367 + $0x10] sm:$0xff] %v4450
        %4571 = vst [vmem:[%s367 + $0x18] sm:$0xff] %v4453
        %4572 = vst [vmem:[%s367 + $0x20] sm:$0xff] %v4458
        %4573 = vst [vmem:[%s367 + $0x28] sm:$0xff] %v4461
        %4574 = vst [vmem:[%s367 + $0x30] sm:$0xff] %v4466
        %4575 = vst [vmem:[%s367 + $0x38] sm:$0xff] %v4469
        %4576 = vst [vmem:[%s367 + $0x40] sm:$0xff] %v4474
        %4577 = vst [vmem:[%s367 + $0x48] sm:$0xff] %v4477
        %4578 = vst [vmem:[%s367 + $0x50] sm:$0xff] %v4482
        %4579 = vst [vmem:[%s367 + $0x58] sm:$0xff] %v4485
        %4580 = vst [vmem:[%s367 + $0x60] sm:$0xff] %v4490
        %4581 = vst [vmem:[%s367 + $0x68] sm:$0xff] %v4493
        %4582 = vst [vmem:[%s367 + $0x70] sm:$0xff] %v4498
        %4583 = vst [vmem:[%s367 + $0x78] sm:$0xff] %v4501
        %4584 = vst [vmem:[%s367 + $0x80] sm:$0xff] %v4506
        %4585 = vst [vmem:[%s367 + $0x88] sm:$0xff] %v4509
        %4586 = vst [vmem:[%s367 + $0x90] sm:$0xff] %v4514
        %4587 = vst [vmem:[%s367 + $0x98] sm:$0xff] %v4517
        %4588 = vst [vmem:[%s367 + $0xa0] sm:$0xff] %v4522
        %4589 = vst [vmem:[%s367 + $0xa8] sm:$0xff] %v4525
        %4590 = vst [vmem:[%s367 + $0xb0] sm:$0xff] %v4530
        %4591 = vst [vmem:[%s367 + $0xb8] sm:$0xff] %v4533
        %4592 = vst [vmem:[%s367 + $0xc0] sm:$0xff] %v4538
        %4593 = vst [vmem:[%s367 + $0xc8] sm:$0xff] %v4541
        %4594 = vst [vmem:[%s367 + $0xd0] sm:$0xff] %v4546
        %4595 = vst [vmem:[%s367 + $0xd8] sm:$0xff] %v4549
        %4596 = vst [vmem:[%s367 + $0xe0] sm:$0xff] %v4554
        %4597 = vst [vmem:[%s367 + $0xe8] sm:$0xff] %v4557
        %4598 = vst [vmem:[%s367 + $0xf0] sm:$0xff] %v4562
        %4599 = vst [vmem:[%s367 + $0xf8] sm:$0xff] %v4565
        %s4600 = sand.u32 %s208, 1
        %s4601 = scalar_lea.sflag [#allocation5], %s4600
        %s4602 = sand.u32 %s208, 1
        %s4603 = smul.addr %s4602, 256
        %s4604 = scalar_lea.vmem [#allocation11], %s4603
        // Predicated region
        $region69: #{tpu_custom_call.1} parent=51 // pred_check
          %p4605 = pneg %p218
        $region70: #{tpu_custom_call.1} parent=51 // pred_check_branch
          %4607 = sbr.rel (%p4605) target = $region72
        $region71: #{tpu_custom_call.1} parent=51 // pred_region
          %s4608 = smul.u32 32, %s27
          %s4610 = ssub.s32 4096, 4096
          %4611 = vsyncadd %s4601, %s4610
          %s4612 = smul.addr %s4608, 128
          %s4613 = scalar_lea.hbm %s8, %s4612
          %s4614 = sshll.u32 %s4604, 4
          %s4615 = int_to_ptr.vmem [resolvable:$true] %s4614
          %4620 = dma.vmem_to_hbm [thread:$0]  %s4615, 4096, %s4613, %s4601, 128, 128, 8
        $region72: #{tpu_custom_call.1} parent=51 // pred_fallthru
          _
      $region52: #{tpu_custom_call.1} parent=5 // pred_fallthru
        _
      %p4621 = scmp.le.s32.totalorder 2, %s22
      // Predicated region
      $region73: #{tpu_custom_call.1} parent=5 // pred_check
        %p4622 = pneg %p4621
      $region74: #{tpu_custom_call.1} parent=5 // pred_check_branch
        %4624 = sbr.rel (%p4622) target = $region76
      $region75: #{tpu_custom_call.1} parent=5 // pred_region
        %s4625 = ssub.s32 %s22, 2
        // Predicated region
        $region77: #{tpu_custom_call.1} parent=75 // pred_check
          %p4626 = pneg %p224
        $region78: #{tpu_custom_call.1} parent=75 // pred_check_branch
          %4628 = sbr.rel (%p4626) target = $region80
        $region79: #{tpu_custom_call.1} parent=75 // pred_region
          %s4629 = sand.u32 %s209, 1
          %s4630 = scalar_lea.sflag [#allocation5], %s4629
          %s4631 = sand.u32 %s209, 1
          %s4632 = smul.addr %s4631, 256
          %s4633 = scalar_lea.vmem [#allocation11], %s4632
          %4634 = dma.done %s4630, 4096
        $region80: #{tpu_custom_call.1} parent=75 // pred_fallthru
          _
      $region76: #{tpu_custom_call.1} parent=5 // pred_fallthru
        _
    $region6: #{tpu_custom_call.1} parent=1 // loop_footer
      %s26 = sadd.s32 1, %s22
    $region7: #{tpu_custom_call.1} parent=1 // loop_footer_branch
      %21 = sbr.rel target = $region3
    $region8: #{tpu_custom_call.1} parent=1 // loop_exit
      _
    %4635 = vsyncpa [#allocation4], 1
    %s4636 = scalar_lea.sflag [#allocation4], 1
    %4637 = vsyncpa %s4636, 1
    %4638 = vsyncpa [#allocation7], 1
    %4639 = vsyncpa [#allocation10], 1
    %4640 = vsyncpa [#allocation5], 1
    %s4641 = scalar_lea.sflag [#allocation5], 1
    %4642 = vsyncpa %s4641, 1

</llo_original>
